<compile_context>
chip_gen: v7x
topology: tpu7x:2x2x1
jax: 0.10.0
libtpu: 0.0.40
codegen_flags: <defaults>
</compile_context>

<pallas_src>
import functools
import math

import jax
import jax.numpy as jnp
from jax.experimental import pallas as pl
from jax.experimental.pallas import tpu as pltpu


# Scoped VMEM limit: above the 16/32 MiB defaults, below every generation's
# physical VMEM (128 MiB v5e/v6e, 64 MiB v7x).  Tile targets below are sized so
# double-buffered inputs stay well inside this budget at real Gemma shapes.
_VMEM_LIMIT_BYTES = 48 * 1024 * 1024


def _compiler_params(dimension_semantics):
    return pltpu.CompilerParams(
        dimension_semantics=dimension_semantics,
        vmem_limit_bytes=_VMEM_LIMIT_BYTES,
    )


def _pick_tile(n, target, quantum):
    """Largest multiple of `quantum` that divides n and is <= target; else n (full dim)."""
    if n <= quantum or n % quantum != 0:
        return n
    best = quantum
    t = quantum
    limit = min(n, max(target, quantum))
    while t <= limit:
        if n % t == 0:
            best = t
        t += quantum
    return best


# --------------------------------------------------------------------------
# Kernel 1: fused RMSNorm + QKV projection + RoPE (scale folded into q)
# --------------------------------------------------------------------------

def _rope_rotate(x, cos, sin, n_heads, head_dim):
    """Rotary embedding applied head-by-head on a flat [M, n_heads*head_dim] tensor.

    Uses static 2-D lane slices + concat (no in-kernel 3-D reshapes/transposes).
    """
    half = head_dim // 2
    out = []
    for h in range(n_heads):
        lo = h * head_dim
        xh = x[:, lo:lo + head_dim]                                   # [M, D]
        rot = jnp.concatenate([-xh[:, half:], xh[:, :half]], axis=-1)  # rotate_half
        out.append(xh * cos + rot * sin)
    return jnp.concatenate(out, axis=-1)                              # [M, n_heads*D]


def _norm_qkv_rope_kernel(x_ref, nw_ref, wq_ref, wk_ref, wv_ref, cos_ref, sin_ref,
                          q_ref, k_ref, v_ref, *, eps, n_heads, n_kv_heads,
                          head_dim, scale):
    x = x_ref[...].astype(jnp.float32)
    var = jnp.mean(x * x, axis=-1, keepdims=True)
    xn = x * jax.lax.rsqrt(var + eps)
    xn = xn * (1.0 + nw_ref[...].astype(jnp.float32))          # Gemma: (1 + weight)

    cos = cos_ref[...].astype(jnp.float32)
    sin = sin_ref[...].astype(jnp.float32)

    q = jnp.dot(xn, wq_ref[...].astype(jnp.float32), preferred_element_type=jnp.float32)
    k = jnp.dot(xn, wk_ref[...].astype(jnp.float32), preferred_element_type=jnp.float32)
    v = jnp.dot(xn, wv_ref[...].astype(jnp.float32), preferred_element_type=jnp.float32)

    # Fold 1/sqrt(head_dim) into q here so the attention kernel skips an SxS multiply.
    q = _rope_rotate(q, cos, sin, n_heads, head_dim) * scale
    k = _rope_rotate(k, cos, sin, n_kv_heads, head_dim)

    q_ref[...] = q.astype(q_ref.dtype)
    k_ref[...] = k.astype(k_ref.dtype)
    v_ref[...] = v.astype(v_ref.dtype)


def fused_norm_qkv_rope(x2d, norm_w, wq, wk, wv, cos2d, sin2d, *, eps, n_heads,
                        n_kv_heads, head_dim, scale):
    M, H = x2d.shape
    Dq, Dkv = wq.shape[1], wk.shape[1]
    tm = _pick_tile(M, 256, 8)
    kernel = functools.partial(
        _norm_qkv_rope_kernel, eps=eps, n_heads=n_heads, n_kv_heads=n_kv_heads,
        head_dim=head_dim, scale=scale)
    return pl.pallas_call(
        kernel,
        out_shape=(jax.ShapeDtypeStruct((M, Dq), x2d.dtype),
                   jax.ShapeDtypeStruct((M, Dkv), x2d.dtype),
                   jax.ShapeDtypeStruct((M, Dkv), x2d.dtype)),
        grid=(M // tm,),
        in_specs=[
            pl.BlockSpec((tm, H), lambda i: (i, 0)),
            pl.BlockSpec((1, H), lambda i: (0, 0)),
            pl.BlockSpec((H, Dq), lambda i: (0, 0)),
            pl.BlockSpec((H, Dkv), lambda i: (0, 0)),
            pl.BlockSpec((H, Dkv), lambda i: (0, 0)),
            pl.BlockSpec((tm, head_dim), lambda i: (i, 0)),
            pl.BlockSpec((tm, head_dim), lambda i: (i, 0)),
        ],
        out_specs=(
            pl.BlockSpec((tm, Dq), lambda i: (i, 0)),
            pl.BlockSpec((tm, Dkv), lambda i: (i, 0)),
            pl.BlockSpec((tm, Dkv), lambda i: (i, 0)),
        ),
        compiler_params=_compiler_params(("parallel",)),
    )(x2d, norm_w.reshape(1, H), wq, wk, wv, cos2d, sin2d)


# --------------------------------------------------------------------------
# Kernel 2: flash-style attention (all heads per body, GQA via head indexing)
# --------------------------------------------------------------------------

def _flash_attn_kernel(q_ref, k_ref, v_ref, mask_ref, o_ref,
                       m_ref, l_ref, acc_ref, *, n_heads, n_rep, head_dim):
    ki = pl.program_id(2)

    @pl.when(ki == 0)
    def _():
        m_ref[...] = jnp.full_like(m_ref, -1e30)
        l_ref[...] = jnp.zeros_like(l_ref)
        acc_ref[...] = jnp.zeros_like(acc_ref)

    mask = mask_ref[0, 0].astype(jnp.float32)                       # [tq, tk]

    for h in range(n_heads):                                        # static unroll
        kvh = h // n_rep                                            # GQA mapping
        qh = q_ref[0][:, h * head_dim:(h + 1) * head_dim].astype(jnp.float32)
        kh = k_ref[0][:, kvh * head_dim:(kvh + 1) * head_dim].astype(jnp.float32)
        vh = v_ref[0][:, kvh * head_dim:(kvh + 1) * head_dim].astype(jnp.float32)

        # q is pre-scaled by 1/sqrt(D); contract on D without materializing k^T.
        s = jax.lax.dot_general(qh, kh, (((1,), (1,)), ((), ())),
                                preferred_element_type=jnp.float32) + mask  # [tq, tk]

        m_prev = m_ref[h]                                           # [tq, 1]
        m_new = jnp.maximum(m_prev, jnp.max(s, axis=-1, keepdims=True))
        alpha = jnp.exp(m_prev - m_new)
        p = jnp.exp(s - m_new)
        l_ref[h] = alpha * l_ref[h] + jnp.sum(p, axis=-1, keepdims=True)
        acc_ref[h] = alpha * acc_ref[h] + jnp.dot(p, vh, preferred_element_type=jnp.float32)
        m_ref[h] = m_new

    @pl.when(ki == pl.num_programs(2) - 1)
    def _():
        outs = []
        for h in range(n_heads):
            inv = pl.reciprocal(l_ref[h], approx=True)              # EUP slot, ~free
            outs.append(acc_ref[h] * inv)
        # Single lane-dense [tq, n_heads*D] store.
        o_ref[0] = jnp.concatenate(outs, axis=-1).astype(o_ref.dtype)


def pallas_attention(q, k, v, mask, *, n_heads, n_rep, head_dim):
    """q: [B, S, nH*D]; k, v: [B, S, nKV*D]; mask: [B, 1, S, S] -> [B, S, nH*D]."""
    B, S, QW = q.shape
    KW = k.shape[-1]
    tq = _pick_tile(S, 256, 8)
    tk = _pick_tile(S, 512, 128)   # mask block last dim must be 128-multiple or full S
    kernel = functools.partial(_flash_attn_kernel, n_heads=n_heads, n_rep=n_rep,
                               head_dim=head_dim)
    return pl.pallas_call(
        kernel,
        out_shape=jax.ShapeDtypeStruct((B, S, QW), q.dtype),
        grid=(B, S // tq, S // tk),
        in_specs=[
            pl.BlockSpec((1, tq, QW), lambda b, qi, ki: (b, qi, 0)),
            pl.BlockSpec((1, tk, KW), lambda b, qi, ki: (b, ki, 0)),
            pl.BlockSpec((1, tk, KW), lambda b, qi, ki: (b, ki, 0)),
            pl.BlockSpec((1, 1, tq, tk), lambda b, qi, ki: (b, 0, qi, ki)),
        ],
        out_specs=pl.BlockSpec((1, tq, QW), lambda b, qi, ki: (b, qi, 0)),
        scratch_shapes=[
            pltpu.VMEM((n_heads, tq, 1), jnp.float32),          # running max m
            pltpu.VMEM((n_heads, tq, 1), jnp.float32),          # running sum l
            pltpu.VMEM((n_heads, tq, head_dim), jnp.float32),   # output accumulator
        ],
        compiler_params=_compiler_params(("parallel", "parallel", "arbitrary")),
    )(q, k, v, mask)


# --------------------------------------------------------------------------
# Kernel 3: fused o_proj + residual add
# --------------------------------------------------------------------------

def _oproj_residual_kernel(a_ref, wo_ref, res_ref, o_ref):
    a = a_ref[...].astype(jnp.float32)
    out = jnp.dot(a, wo_ref[...].astype(jnp.float32), preferred_element_type=jnp.float32)
    o_ref[...] = (res_ref[...].astype(jnp.float32) + out).astype(o_ref.dtype)


def fused_oproj_residual(attn2d, wo, residual2d):
    M, K = attn2d.shape
    H = wo.shape[1]
    tm = _pick_tile(M, 256, 8)
    return pl.pallas_call(
        _oproj_residual_kernel,
        out_shape=jax.ShapeDtypeStruct((M, H), residual2d.dtype),
        grid=(M // tm,),
        in_specs=[
            pl.BlockSpec((tm, K), lambda i: (i, 0)),
            pl.BlockSpec((K, H), lambda i: (0, 0)),
            pl.BlockSpec((tm, H), lambda i: (i, 0)),
        ],
        out_specs=pl.BlockSpec((tm, H), lambda i: (i, 0)),
        compiler_params=_compiler_params(("parallel",)),
    )(attn2d, wo, residual2d)


# --------------------------------------------------------------------------
# Kernel 4: fused RMSNorm + MLP (gelu-tanh gate * up -> down) + residual,
#           streaming the intermediate dimension with a VMEM accumulator.
# --------------------------------------------------------------------------

def _norm_mlp_residual_kernel(x_ref, nw_ref, wg_ref, wu_ref, wd_ref, o_ref,
                              xn_ref, acc_ref, *, eps):
    j = pl.program_id(1)

    @pl.when(j == 0)
    def _():
        x = x_ref[...].astype(jnp.float32)
        var = jnp.mean(x * x, axis=-1, keepdims=True)
        xn_ref[...] = (x * jax.lax.rsqrt(var + eps)
                       * (1.0 + nw_ref[...].astype(jnp.float32)))
        acc_ref[...] = jnp.zeros_like(acc_ref)

    xn = xn_ref[...]
    g = jnp.dot(xn, wg_ref[...].astype(jnp.float32), preferred_element_type=jnp.float32)
    # gelu, tanh approximation (torch gelu(approximate='tanh')), computed once per I-tile
    g = 0.5 * g * (1.0 + jnp.tanh(0.7978845608028654 * (g + 0.044715 * g * g * g)))
    u = jnp.dot(xn, wu_ref[...].astype(jnp.float32), preferred_element_type=jnp.float32)
    z = g * u
    acc_ref[...] += jnp.dot(z, wd_ref[...].astype(jnp.float32),
                            preferred_element_type=jnp.float32)

    @pl.when(j == pl.num_programs(1) - 1)
    def _():
        o_ref[...] = (x_ref[...].astype(jnp.float32) + acc_ref[...]).astype(o_ref.dtype)


def fused_norm_mlp_residual(x2d, norm_w, wg, wu, wd, *, eps):
    M, H = x2d.shape
    I = wg.shape[1]
    tm = _pick_tile(M, 256, 8)
    ti = _pick_tile(I, 512, 128)
    kernel = functools.partial(_norm_mlp_residual_kernel, eps=eps)
    return pl.pallas_call(
        kernel,
        out_shape=jax.ShapeDtypeStruct((M, H), x2d.dtype),
        grid=(M // tm, I // ti),
        in_specs=[
            pl.BlockSpec((tm, H), lambda i, j: (i, 0)),
            pl.BlockSpec((1, H), lambda i, j: (0, 0)),
            pl.BlockSpec((H, ti), lambda i, j: (0, j)),
            pl.BlockSpec((H, ti), lambda i, j: (0, j)),
            pl.BlockSpec((ti, H), lambda i, j: (j, 0)),
        ],
        out_specs=pl.BlockSpec((tm, H), lambda i, j: (i, 0)),
        scratch_shapes=[
            pltpu.VMEM((tm, H), jnp.float32),   # normalized x (computed once per row tile)
            pltpu.VMEM((tm, H), jnp.float32),   # down-proj accumulator
        ],
        compiler_params=_compiler_params(("parallel", "arbitrary")),
    )(x2d, norm_w.reshape(1, H), wg, wu, wd)


# --------------------------------------------------------------------------
# Kernel 5: standalone RMSNorm (final norm)
# --------------------------------------------------------------------------

def _rmsnorm_kernel(x_ref, nw_ref, o_ref, *, eps):
    x = x_ref[...].astype(jnp.float32)
    var = jnp.mean(x * x, axis=-1, keepdims=True)
    xn = x * jax.lax.rsqrt(var + eps)
    o_ref[...] = (xn * (1.0 + nw_ref[...].astype(jnp.float32))).astype(o_ref.dtype)


def pallas_rmsnorm(x2d, weight, eps):
    M, H = x2d.shape
    tm = _pick_tile(M, 512, 8)
    return pl.pallas_call(
        functools.partial(_rmsnorm_kernel, eps=eps),
        out_shape=jax.ShapeDtypeStruct((M, H), x2d.dtype),
        grid=(M // tm,),
        in_specs=[
            pl.BlockSpec((tm, H), lambda i: (i, 0)),
            pl.BlockSpec((1, H), lambda i: (0, 0)),
        ],
        out_specs=pl.BlockSpec((tm, H), lambda i: (i, 0)),
        compiler_params=_compiler_params(("parallel",)),
    )(x2d, weight.reshape(1, H))


# --------------------------------------------------------------------------
# Plain-JAX glue (cheap, shape-only or tiny elementwise work)
# --------------------------------------------------------------------------

def rope_cos_sin(position_ids, head_dim, theta, dtype):
    inv_freq = 1.0 / (
        theta ** (jnp.arange(0, head_dim, 2, dtype=jnp.float32) / head_dim)
    )
    freqs = position_ids.astype(jnp.float32)[:, :, None] * inv_freq[None, None, :]
    emb = jnp.concatenate([freqs, freqs], axis=-1)          # [B, S, D]
    return jnp.cos(emb).astype(dtype), jnp.sin(emb).astype(dtype)


# --------------------------------------------------------------------------
# Model definition
# --------------------------------------------------------------------------

class Config:
    vocab_size = 256
    hidden_size = 32
    intermediate_size = 64
    num_hidden_layers = 2
    num_attention_heads = 4
    num_key_value_heads = 2
    head_dim = 16
    rms_norm_eps = 1e-6
    rope_theta = 10000.0


def init_params(cfg, key):
    """Deterministic synthetic weights.  Linear weights stored pre-transposed
    ([in, out]) so kernels compute x @ W directly (equivalent to torch x @ W.T)."""
    H, I, D = cfg.hidden_size, cfg.intermediate_size, cfg.head_dim
    nH, nKV = cfg.num_attention_heads, cfg.num_key_value_heads

    def dense(k, shape):
        return 0.02 * jax.random.normal(k, shape, dtype=jnp.float32)

    keys = jax.random.split(key, cfg.num_hidden_layers * 7)
    layers = []
    for li in range(cfg.num_hidden_layers):
        k = keys[li * 7:(li + 1) * 7]
        layers.append(dict(
            q_w=dense(k[0], (H, nH * D)),
            k_w=dense(k[1], (H, nKV * D)),
            v_w=dense(k[2], (H, nKV * D)),
            o_w=dense(k[3], (nH * D, H)),
            gate_w=dense(k[4], (H, I)),
            up_w=dense(k[5], (H, I)),
            down_w=dense(k[6], (I, H)),
            input_ln=jnp.zeros((H,), jnp.float32),   # Gemma RMSNorm init = zeros
            post_ln=jnp.zeros((H,), jnp.float32),
        ))
    return dict(layers=layers, final_ln=jnp.zeros((H,), jnp.float32))


def gemma_forward(params, input_embeds, attention_mask, position_ids, cfg):
    """GemmaModel.forward: scale embeddings, run decoder layers, final RMSNorm."""
    B, S, H = input_embeds.shape
    nH, nKV, D = cfg.num_attention_heads, cfg.num_key_value_heads, cfg.head_dim
    n_rep = nH // nKV
    eps = cfg.rms_norm_eps
    scale = 1.0 / math.sqrt(D)
    M = B * S

    # GemmaModel: scale embeddings by sqrt(hidden_size)
    hidden = input_embeds * jnp.asarray(H ** 0.5, input_embeds.dtype)

    cos, sin = rope_cos_sin(position_ids, D, cfg.rope_theta, hidden.dtype)
    cos2, sin2 = cos.reshape(M, D), sin.reshape(M, D)

    h2 = hidden.reshape(M, H)            # tokens-as-rows; no transposes from here on
    for layer in params["layers"]:
        # ---- self attention block (norm + qkv + rope fused; scale folded into q) ----
        q, k, v = fused_norm_qkv_rope(
            h2, layer["input_ln"], layer["q_w"], layer["k_w"], layer["v_w"],
            cos2, sin2, eps=eps, n_heads=nH, n_kv_heads=nKV, head_dim=D, scale=scale)

        attn = pallas_attention(
            q.reshape(B, S, nH * D), k.reshape(B, S, nKV * D), v.reshape(B, S, nKV * D),
            attention_mask, n_heads=nH, n_rep=n_rep, head_dim=D)        # [B, S, nH*D]

        h2 = fused_oproj_residual(attn.reshape(M, nH * D), layer["o_w"], h2)

        # ---- MLP block (norm + gate/up/down + residual fused) ----
        h2 = fused_norm_mlp_residual(
            h2, layer["post_ln"], layer["gate_w"], layer["up_w"], layer["down_w"],
            eps=eps)

    h2 = pallas_rmsnorm(h2, params["final_ln"], eps)
    return h2.reshape(B, S, H)


# --------------------------------------------------------------------------
# Driver
# --------------------------------------------------------------------------

if __name__ == "__main__":
    cfg = Config()
    B, S = 2, 8

    key = jax.random.PRNGKey(0)
    k_params, k_embeds = jax.random.split(key)

    params = init_params(cfg, k_params)

    # GemmaModel.forward consumes embeddings directly.
    input_embeds = jax.random.normal(
        k_embeds, (B, S, cfg.hidden_size), dtype=jnp.float32)
    position_ids = jnp.broadcast_to(jnp.arange(S, dtype=jnp.int32)[None, :], (B, S))

    # Additive causal mask [B, 1, S, S] (finite large-negative; f32 throughout).
    causal = jnp.tril(jnp.ones((S, S), dtype=bool))
    attention_mask = jnp.where(causal, 0.0, -1e9).astype(jnp.float32)
    attention_mask = jnp.broadcast_to(attention_mask[None, None, :, :], (B, 1, S, S))

    fwd = jax.jit(functools.partial(gemma_forward, cfg=cfg))
    out = fwd(params, input_embeds, attention_mask, position_ids)
    out = jax.block_until_ready(out)

    assert out.shape == (B, S, cfg.hidden_size)
    assert out.dtype == jnp.float32
    assert bool(jnp.all(jnp.isfinite(out)))
    print("KERNEL_OK")
</pallas_src>

<mosaic_0001>
module attributes {stable_mosaic.version = 11 : i64} {
  func.func @_norm_qkv_rope_kernel(%arg0: i32, %arg1: memref<16x32xf32, #tpu.memory_space<vmem>>, %arg2: memref<1x32xf32, #tpu.memory_space<vmem>>, %arg3: memref<32x64xf32, #tpu.memory_space<vmem>>, %arg4: memref<32x32xf32, #tpu.memory_space<vmem>>, %arg5: memref<32x32xf32, #tpu.memory_space<vmem>>, %arg6: memref<16x16xf32, #tpu.memory_space<vmem>>, %arg7: memref<16x16xf32, #tpu.memory_space<vmem>>, %arg8: memref<16x64xf32, #tpu.memory_space<vmem>>, %arg9: memref<16x32xf32, #tpu.memory_space<vmem>>, %arg10: memref<16x32xf32, #tpu.memory_space<vmem>>) attributes {dimension_semantics = [#tpu.dimension_semantics<parallel>], iteration_bounds = array<i64: 1>, scalar_prefetch = 0 : i64, scratch_operands = 0 : i64, tpu.core_type = #tpu.core_type<tc>, window_params = [{transform_indices = @transform_0, window_bounds = array<i64: 16, 32>}, {pipeline_mode = #tpu.pipeline_mode<synchronous>, transform_indices = @transform_1, window_bounds = array<i64: 1, 32>}, {pipeline_mode = #tpu.pipeline_mode<synchronous>, transform_indices = @transform_2, window_bounds = array<i64: 32, 64>}, {pipeline_mode = #tpu.pipeline_mode<synchronous>, transform_indices = @transform_3, window_bounds = array<i64: 32, 32>}, {pipeline_mode = #tpu.pipeline_mode<synchronous>, transform_indices = @transform_4, window_bounds = array<i64: 32, 32>}, {transform_indices = @transform_5, window_bounds = array<i64: 16, 16>}, {transform_indices = @transform_6, window_bounds = array<i64: 16, 16>}, {transform_indices = @transform_7, window_bounds = array<i64: 16, 64>}, {transform_indices = @transform_8, window_bounds = array<i64: 16, 32>}, {transform_indices = @transform_9, window_bounds = array<i64: 16, 32>}]} {
    %c0 = arith.constant 0 : index
    %c0_0 = arith.constant 0 : index
    %0 = vector.load %arg1[%c0, %c0_0] : memref<16x32xf32, #tpu.memory_space<vmem>>, vector<16x32xf32>
    %1 = arith.mulf %0, %0 : vector<16x32xf32>
    %cst = arith.constant dense<0.000000e+00> : vector<16xf32>
    %2 = vector.multi_reduction <add>, %1, %cst [1] : vector<16x32xf32> to vector<16xf32>
    %3 = vector.shape_cast %2 : vector<16xf32> to vector<16x1xf32>
    %cst_1 = arith.constant 3.200000e+01 : f32
    %4 = vector.broadcast %cst_1 : f32 to vector<16x1xf32>
    %5 = arith.divf %3, %4 : vector<16x1xf32>
    %cst_2 = arith.constant 9.99999997E-7 : f32
    %6 = vector.broadcast %cst_2 : f32 to vector<16x1xf32>
    %7 = arith.addf %5, %6 : vector<16x1xf32>
    %8 = math.rsqrt %7 : vector<16x1xf32>
    %9 = vector.broadcast %8 : vector<16x1xf32> to vector<16x32xf32>
    %10 = arith.mulf %0, %9 : vector<16x32xf32>
    %c0_3 = arith.constant 0 : index
    %c0_4 = arith.constant 0 : index
    %11 = vector.load %arg2[%c0_3, %c0_4] : memref<1x32xf32, #tpu.memory_space<vmem>>, vector<1x32xf32>
    %cst_5 = arith.constant 1.000000e+00 : f32
    %12 = vector.broadcast %cst_5 : f32 to vector<1x32xf32>
    %13 = arith.addf %12, %11 : vector<1x32xf32>
    %14 = vector.broadcast %13 : vector<1x32xf32> to vector<16x32xf32>
    %15 = arith.mulf %10, %14 : vector<16x32xf32>
    %c0_6 = arith.constant 0 : index
    %c0_7 = arith.constant 0 : index
    %16 = vector.load %arg6[%c0_6, %c0_7] : memref<16x16xf32, #tpu.memory_space<vmem>>, vector<16x16xf32>
    %c0_8 = arith.constant 0 : index
    %c0_9 = arith.constant 0 : index
    %17 = vector.load %arg7[%c0_8, %c0_9] : memref<16x16xf32, #tpu.memory_space<vmem>>, vector<16x16xf32>
    %c0_10 = arith.constant 0 : index
    %c0_11 = arith.constant 0 : index
    %18 = vector.load %arg3[%c0_10, %c0_11] : memref<32x64xf32, #tpu.memory_space<vmem>>, vector<32x64xf32>
    %cst_12 = arith.constant dense<0.000000e+00> : vector<16x64xf32>
    %19 = tpu.matmul %15, %18, %cst_12 {dimension_numbers = #tpu.dot_dimension_numbers<[1], [0], [0], [1], [0, 0, 1, 1], [], []>} : vector<16x32xf32>, vector<32x64xf32>, vector<16x64xf32> -> vector<16x64xf32>
    %c0_13 = arith.constant 0 : index
    %c0_14 = arith.constant 0 : index
    %20 = vector.load %arg4[%c0_13, %c0_14] : memref<32x32xf32, #tpu.memory_space<vmem>>, vector<32x32xf32>
    %cst_15 = arith.constant dense<0.000000e+00> : vector<16x32xf32>
    %21 = tpu.matmul %15, %20, %cst_15 {dimension_numbers = #tpu.dot_dimension_numbers<[1], [0], [0], [1], [0, 0, 1, 1], [], []>} : vector<16x32xf32>, vector<32x32xf32>, vector<16x32xf32> -> vector<16x32xf32>
    %c0_16 = arith.constant 0 : index
    %c0_17 = arith.constant 0 : index
    %22 = vector.load %arg5[%c0_16, %c0_17] : memref<32x32xf32, #tpu.memory_space<vmem>>, vector<32x32xf32>
    %cst_18 = arith.constant dense<0.000000e+00> : vector<16x32xf32>
    %23 = tpu.matmul %15, %22, %cst_18 {dimension_numbers = #tpu.dot_dimension_numbers<[1], [0], [0], [1], [0, 0, 1, 1], [], []>} : vector<16x32xf32>, vector<32x32xf32>, vector<16x32xf32> -> vector<16x32xf32>
    %24 = vector.extract_strided_slice %19 {offsets = [0, 0], sizes = [16, 16], strides = [1, 1]} : vector<16x64xf32> to vector<16x16xf32>
    %25 = vector.extract_strided_slice %24 {offsets = [0, 8], sizes = [16, 8], strides = [1, 1]} : vector<16x16xf32> to vector<16x8xf32>
    %cst_19 = arith.constant 0.000000e+00 : f32
    %26 = vector.broadcast %cst_19 : f32 to vector<16x8xf32>
    %27 = arith.subf %26, %25 : vector<16x8xf32>
    %28 = vector.extract_strided_slice %24 {offsets = [0, 0], sizes = [16, 8], strides = [1, 1]} : vector<16x16xf32> to vector<16x8xf32>
    %29 = tpu.concatenate %27, %28 in 1 : vector<16x8xf32>, vector<16x8xf32> -> vector<16x16xf32>
    %30 = arith.mulf %24, %16 : vector<16x16xf32>
    %31 = arith.mulf %29, %17 : vector<16x16xf32>
    %32 = arith.addf %30, %31 : vector<16x16xf32>
    %33 = vector.extract_strided_slice %19 {offsets = [0, 16], sizes = [16, 16], strides = [1, 1]} : vector<16x64xf32> to vector<16x16xf32>
    %34 = vector.extract_strided_slice %33 {offsets = [0, 8], sizes = [16, 8], strides = [1, 1]} : vector<16x16xf32> to vector<16x8xf32>
    %cst_20 = arith.constant 0.000000e+00 : f32
    %35 = vector.broadcast %cst_20 : f32 to vector<16x8xf32>
    %36 = arith.subf %35, %34 : vector<16x8xf32>
    %37 = vector.extract_strided_slice %33 {offsets = [0, 0], sizes = [16, 8], strides = [1, 1]} : vector<16x16xf32> to vector<16x8xf32>
    %38 = tpu.concatenate %36, %37 in 1 : vector<16x8xf32>, vector<16x8xf32> -> vector<16x16xf32>
    %39 = arith.mulf %33, %16 : vector<16x16xf32>
    %40 = arith.mulf %38, %17 : vector<16x16xf32>
    %41 = arith.addf %39, %40 : vector<16x16xf32>
    %42 = vector.extract_strided_slice %19 {offsets = [0, 32], sizes = [16, 16], strides = [1, 1]} : vector<16x64xf32> to vector<16x16xf32>
    %43 = vector.extract_strided_slice %42 {offsets = [0, 8], sizes = [16, 8], strides = [1, 1]} : vector<16x16xf32> to vector<16x8xf32>
    %cst_21 = arith.constant 0.000000e+00 : f32
    %44 = vector.broadcast %cst_21 : f32 to vector<16x8xf32>
    %45 = arith.subf %44, %43 : vector<16x8xf32>
    %46 = vector.extract_strided_slice %42 {offsets = [0, 0], sizes = [16, 8], strides = [1, 1]} : vector<16x16xf32> to vector<16x8xf32>
    %47 = tpu.concatenate %45, %46 in 1 : vector<16x8xf32>, vector<16x8xf32> -> vector<16x16xf32>
    %48 = arith.mulf %42, %16 : vector<16x16xf32>
    %49 = arith.mulf %47, %17 : vector<16x16xf32>
    %50 = arith.addf %48, %49 : vector<16x16xf32>
    %51 = vector.extract_strided_slice %19 {offsets = [0, 48], sizes = [16, 16], strides = [1, 1]} : vector<16x64xf32> to vector<16x16xf32>
    %52 = vector.extract_strided_slice %51 {offsets = [0, 8], sizes = [16, 8], strides = [1, 1]} : vector<16x16xf32> to vector<16x8xf32>
    %cst_22 = arith.constant 0.000000e+00 : f32
    %53 = vector.broadcast %cst_22 : f32 to vector<16x8xf32>
    %54 = arith.subf %53, %52 : vector<16x8xf32>
    %55 = vector.extract_strided_slice %51 {offsets = [0, 0], sizes = [16, 8], strides = [1, 1]} : vector<16x16xf32> to vector<16x8xf32>
    %56 = tpu.concatenate %54, %55 in 1 : vector<16x8xf32>, vector<16x8xf32> -> vector<16x16xf32>
    %57 = arith.mulf %51, %16 : vector<16x16xf32>
    %58 = arith.mulf %56, %17 : vector<16x16xf32>
    %59 = arith.addf %57, %58 : vector<16x16xf32>
    %60 = tpu.concatenate %32, %41, %50, %59 in 1 : vector<16x16xf32>, vector<16x16xf32>, vector<16x16xf32>, vector<16x16xf32> -> vector<16x64xf32>
    %cst_23 = arith.constant 2.500000e-01 : f32
    %61 = vector.broadcast %cst_23 : f32 to vector<16x64xf32>
    %62 = arith.mulf %60, %61 : vector<16x64xf32>
    %63 = vector.extract_strided_slice %21 {offsets = [0, 0], sizes = [16, 16], strides = [1, 1]} : vector<16x32xf32> to vector<16x16xf32>
    %64 = vector.extract_strided_slice %63 {offsets = [0, 8], sizes = [16, 8], strides = [1, 1]} : vector<16x16xf32> to vector<16x8xf32>
    %cst_24 = arith.constant 0.000000e+00 : f32
    %65 = vector.broadcast %cst_24 : f32 to vector<16x8xf32>
    %66 = arith.subf %65, %64 : vector<16x8xf32>
    %67 = vector.extract_strided_slice %63 {offsets = [0, 0], sizes = [16, 8], strides = [1, 1]} : vector<16x16xf32> to vector<16x8xf32>
    %68 = tpu.concatenate %66, %67 in 1 : vector<16x8xf32>, vector<16x8xf32> -> vector<16x16xf32>
    %69 = arith.mulf %63, %16 : vector<16x16xf32>
    %70 = arith.mulf %68, %17 : vector<16x16xf32>
    %71 = arith.addf %69, %70 : vector<16x16xf32>
    %72 = vector.extract_strided_slice %21 {offsets = [0, 16], sizes = [16, 16], strides = [1, 1]} : vector<16x32xf32> to vector<16x16xf32>
    %73 = vector.extract_strided_slice %72 {offsets = [0, 8], sizes = [16, 8], strides = [1, 1]} : vector<16x16xf32> to vector<16x8xf32>
    %cst_25 = arith.constant 0.000000e+00 : f32
    %74 = vector.broadcast %cst_25 : f32 to vector<16x8xf32>
    %75 = arith.subf %74, %73 : vector<16x8xf32>
    %76 = vector.extract_strided_slice %72 {offsets = [0, 0], sizes = [16, 8], strides = [1, 1]} : vector<16x16xf32> to vector<16x8xf32>
    %77 = tpu.concatenate %75, %76 in 1 : vector<16x8xf32>, vector<16x8xf32> -> vector<16x16xf32>
    %78 = arith.mulf %72, %16 : vector<16x16xf32>
    %79 = arith.mulf %77, %17 : vector<16x16xf32>
    %80 = arith.addf %78, %79 : vector<16x16xf32>
    %81 = tpu.concatenate %71, %80 in 1 : vector<16x16xf32>, vector<16x16xf32> -> vector<16x32xf32>
    %c0_26 = arith.constant 0 : index
    %c0_27 = arith.constant 0 : index
    %82 = vector.load %arg8[%c0_26, %c0_27] : memref<16x64xf32, #tpu.memory_space<vmem>>, vector<16x64xf32>
    tpu.vector_store %arg8[%c0_26, %c0_27], %62 {strides = array<i32>} : memref<16x64xf32, #tpu.memory_space<vmem>>, vector<16x64xf32>,
    %c0_28 = arith.constant 0 : index
    %c0_29 = arith.constant 0 : index
    %83 = vector.load %arg9[%c0_28, %c0_29] : memref<16x32xf32, #tpu.memory_space<vmem>>, vector<16x32xf32>
    tpu.vector_store %arg9[%c0_28, %c0_29], %81 {strides = array<i32>} : memref<16x32xf32, #tpu.memory_space<vmem>>, vector<16x32xf32>,
    %c0_30 = arith.constant 0 : index
    %c0_31 = arith.constant 0 : index
    %84 = vector.load %arg10[%c0_30, %c0_31] : memref<16x32xf32, #tpu.memory_space<vmem>>, vector<16x32xf32>
    tpu.vector_store %arg10[%c0_30, %c0_31], %23 {strides = array<i32>} : memref<16x32xf32, #tpu.memory_space<vmem>>, vector<16x32xf32>,
    return
  }
  func.func @transform_0(%arg0: i32) -> (i32, i32) {
    %c0_i32 = arith.constant 0 : i32
    %c0_i32_0 = arith.constant 0 : i32
    return %arg0, %c0_i32 : i32, i32
  }
  func.func @transform_1(%arg0: i32) -> (i32, i32) {
    %c0_i32 = arith.constant 0 : i32
    %c0_i32_0 = arith.constant 0 : i32
    %c0_i32_1 = arith.constant 0 : i32
    return %c0_i32, %c0_i32_0 : i32, i32
  }
  func.func @transform_2(%arg0: i32) -> (i32, i32) {
    %c0_i32 = arith.constant 0 : i32
    %c0_i32_0 = arith.constant 0 : i32
    %c0_i32_1 = arith.constant 0 : i32
    return %c0_i32, %c0_i32_0 : i32, i32
  }
  func.func @transform_3(%arg0: i32) -> (i32, i32) {
    %c0_i32 = arith.constant 0 : i32
    %c0_i32_0 = arith.constant 0 : i32
    %c0_i32_1 = arith.constant 0 : i32
    return %c0_i32, %c0_i32_0 : i32, i32
  }
  func.func @transform_4(%arg0: i32) -> (i32, i32) {
    %c0_i32 = arith.constant 0 : i32
    %c0_i32_0 = arith.constant 0 : i32
    %c0_i32_1 = arith.constant 0 : i32
    return %c0_i32, %c0_i32_0 : i32, i32
  }
  func.func @transform_5(%arg0: i32) -> (i32, i32) {
    %c0_i32 = arith.constant 0 : i32
    %c0_i32_0 = arith.constant 0 : i32
    return %arg0, %c0_i32 : i32, i32
  }
  func.func @transform_6(%arg0: i32) -> (i32, i32) {
    %c0_i32 = arith.constant 0 : i32
    %c0_i32_0 = arith.constant 0 : i32
    return %arg0, %c0_i32 : i32, i32
  }
  func.func @transform_7(%arg0: i32) -> (i32, i32) {
    %c0_i32 = arith.constant 0 : i32
    %c0_i32_0 = arith.constant 0 : i32
    return %arg0, %c0_i32 : i32, i32
  }
  func.func @transform_8(%arg0: i32) -> (i32, i32) {
    %c0_i32 = arith.constant 0 : i32
    %c0_i32_0 = arith.constant 0 : i32
    return %arg0, %c0_i32 : i32, i32
  }
  func.func @transform_9(%arg0: i32) -> (i32, i32) {
    %c0_i32 = arith.constant 0 : i32
    %c0_i32_0 = arith.constant 0 : i32
    return %arg0, %c0_i32 : i32, i32
  }
}

module attributes {stable_mosaic.version = 11 : i64} {
  func.func @_flash_attn_kernel(%arg0: i32, %arg1: i32, %arg2: i32, %arg3: memref<1x8x64xf32, #tpu.memory_space<vmem>>, %arg4: memref<1x8x32xf32, #tpu.memory_space<vmem>>, %arg5: memref<1x8x32xf32, #tpu.memory_space<vmem>>, %arg6: memref<1x1x8x8xf32, #tpu.memory_space<vmem>>, %arg7: memref<1x8x64xf32, #tpu.memory_space<vmem>>, %arg8: memref<4x8x1xf32, #tpu.memory_space<vmem>>, %arg9: memref<4x8x1xf32, #tpu.memory_space<vmem>>, %arg10: memref<4x8x16xf32, #tpu.memory_space<vmem>>) attributes {dimension_semantics = [#tpu.dimension_semantics<parallel>, #tpu.dimension_semantics<parallel>, #tpu.dimension_semantics<arbitrary>], iteration_bounds = array<i64: 2, 1, 1>, scalar_prefetch = 0 : i64, scratch_operands = 3 : i64, tpu.core_type = #tpu.core_type<tc>, window_params = [{transform_indices = @transform_0, window_bounds = array<i64: 1, 8, 64>}, {transform_indices = @transform_1, window_bounds = array<i64: 1, 8, 32>}, {transform_indices = @transform_2, window_bounds = array<i64: 1, 8, 32>}, {transform_indices = @transform_3, window_bounds = array<i64: 1, 1, 8, 8>}, {transform_indices = @transform_4, window_bounds = array<i64: 1, 8, 64>}]} {
    %c0_i32 = arith.constant 0 : i32
    %0 = arith.cmpi eq, %arg2, %c0_i32 : i32
    %1 = arith.extui %0 : i1 to i32
    %c0_i32_0 = arith.constant 0 : i32
    %2 = arith.cmpi ne, %1, %c0_i32_0 : i32
    scf.if %2 {
      %cst_126 = arith.constant -1.000000e+30 : f32
      %176 = vector.broadcast %cst_126 : f32 to vector<4x8x1xf32>
      %c0_127 = arith.constant 0 : index
      %c0_128 = arith.constant 0 : index
      %c0_129 = arith.constant 0 : index
      %177 = vector.load %arg8[%c0_127, %c0_128, %c0_129] : memref<4x8x1xf32, #tpu.memory_space<vmem>>, vector<4x8x1xf32>
      tpu.vector_store %arg8[%c0_127, %c0_128, %c0_129], %176 {strides = array<i32>} : memref<4x8x1xf32, #tpu.memory_space<vmem>>, vector<4x8x1xf32>,
      %cst_130 = arith.constant 0.000000e+00 : f32
      %178 = vector.broadcast %cst_130 : f32 to vector<4x8x1xf32>
      %c0_131 = arith.constant 0 : index
      %c0_132 = arith.constant 0 : index
      %c0_133 = arith.constant 0 : index
      %179 = vector.load %arg9[%c0_131, %c0_132, %c0_133] : memref<4x8x1xf32, #tpu.memory_space<vmem>>, vector<4x8x1xf32>
      tpu.vector_store %arg9[%c0_131, %c0_132, %c0_133], %178 {strides = array<i32>} : memref<4x8x1xf32, #tpu.memory_space<vmem>>, vector<4x8x1xf32>,
      %cst_134 = arith.constant 0.000000e+00 : f32
      %180 = vector.broadcast %cst_134 : f32 to vector<4x8x16xf32>
      %c0_135 = arith.constant 0 : index
      %c0_136 = arith.constant 0 : index
      %c0_137 = arith.constant 0 : index
      %181 = vector.load %arg10[%c0_135, %c0_136, %c0_137] : memref<4x8x16xf32, #tpu.memory_space<vmem>>, vector<4x8x16xf32>
      tpu.vector_store %arg10[%c0_135, %c0_136, %c0_137], %180 {strides = array<i32>} : memref<4x8x16xf32, #tpu.memory_space<vmem>>, vector<4x8x16xf32>,
    } else {
    }
    %c0 = arith.constant 0 : index
    %c0_1 = arith.constant 0 : index
    %c0_2 = arith.constant 0 : index
    %c0_3 = arith.constant 0 : index
    %3 = vector.load %arg6[%c0, %c0_1, %c0_2, %c0_3] : memref<1x1x8x8xf32, #tpu.memory_space<vmem>>, vector<1x1x8x8xf32>
    %4 = vector.shape_cast %3 : vector<1x1x8x8xf32> to vector<8x8xf32>
    %c0_4 = arith.constant 0 : index
    %c0_5 = arith.constant 0 : index
    %c0_6 = arith.constant 0 : index
    %5 = vector.load %arg3[%c0_4, %c0_5, %c0_6] : memref<1x8x64xf32, #tpu.memory_space<vmem>>, vector<1x8x64xf32>
    %6 = vector.shape_cast %5 : vector<1x8x64xf32> to vector<8x64xf32>
    %7 = vector.extract_strided_slice %6 {offsets = [0, 0], sizes = [8, 16], strides = [1, 1]} : vector<8x64xf32> to vector<8x16xf32>
    %c0_7 = arith.constant 0 : index
    %c0_8 = arith.constant 0 : index
    %c0_9 = arith.constant 0 : index
    %8 = vector.load %arg4[%c0_7, %c0_8, %c0_9] : memref<1x8x32xf32, #tpu.memory_space<vmem>>, vector<1x8x32xf32>
    %9 = vector.shape_cast %8 : vector<1x8x32xf32> to vector<8x32xf32>
    %10 = vector.extract_strided_slice %9 {offsets = [0, 0], sizes = [8, 16], strides = [1, 1]} : vector<8x32xf32> to vector<8x16xf32>
    %c0_10 = arith.constant 0 : index
    %c0_11 = arith.constant 0 : index
    %c0_12 = arith.constant 0 : index
    %11 = vector.load %arg5[%c0_10, %c0_11, %c0_12] : memref<1x8x32xf32, #tpu.memory_space<vmem>>, vector<1x8x32xf32>
    %12 = vector.shape_cast %11 : vector<1x8x32xf32> to vector<8x32xf32>
    %13 = vector.extract_strided_slice %12 {offsets = [0, 0], sizes = [8, 16], strides = [1, 1]} : vector<8x32xf32> to vector<8x16xf32>
    %cst = arith.constant dense<0.000000e+00> : vector<8x8xf32>
    %14 = tpu.matmul %7, %10, %cst {dimension_numbers = #tpu.dot_dimension_numbers<[1], [1], [0], [0], [0, 0, 1, 0], [], []>} : vector<8x16xf32>, vector<8x16xf32>, vector<8x8xf32> -> vector<8x8xf32>
    %15 = arith.addf %14, %4 : vector<8x8xf32>
    %c0_13 = arith.constant 0 : index
    %c0_14 = arith.constant 0 : index
    %c0_15 = arith.constant 0 : index
    %16 = vector.load %arg8[%c0_13, %c0_14, %c0_15] : memref<4x8x1xf32, #tpu.memory_space<vmem>>, vector<1x8x1xf32>
    %17 = vector.shape_cast %16 : vector<1x8x1xf32> to vector<8x1xf32>
    %cst_16 = arith.constant dense<0xFF800000> : vector<8xf32>
    %18 = vector.multi_reduction <maximumf>, %15, %cst_16 [1] : vector<8x8xf32> to vector<8xf32>
    %19 = vector.shape_cast %18 : vector<8xf32> to vector<8x1xf32>
    %20 = arith.maximumf %17, %19 : vector<8x1xf32>
    %21 = arith.subf %17, %20 : vector<8x1xf32>
    %22 = math.exp %21 : vector<8x1xf32>
    %23 = vector.broadcast %20 : vector<8x1xf32> to vector<8x8xf32>
    %24 = arith.subf %15, %23 : vector<8x8xf32>
    %25 = math.exp %24 : vector<8x8xf32>
    %c0_17 = arith.constant 0 : index
    %c0_18 = arith.constant 0 : index
    %c0_19 = arith.constant 0 : index
    %26 = vector.load %arg9[%c0_17, %c0_18, %c0_19] : memref<4x8x1xf32, #tpu.memory_space<vmem>>, vector<1x8x1xf32>
    %27 = vector.shape_cast %26 : vector<1x8x1xf32> to vector<8x1xf32>
    %28 = arith.mulf %22, %27 : vector<8x1xf32>
    %cst_20 = arith.constant dense<0.000000e+00> : vector<8xf32>
    %29 = vector.multi_reduction <add>, %25, %cst_20 [1] : vector<8x8xf32> to vector<8xf32>
    %30 = vector.shape_cast %29 : vector<8xf32> to vector<8x1xf32>
    %31 = arith.addf %28, %30 : vector<8x1xf32>
    %c0_21 = arith.constant 0 : index
    %c0_22 = arith.constant 0 : index
    %c0_23 = arith.constant 0 : index
    %32 = vector.load %arg9[%c0_21, %c0_22, %c0_23] : memref<4x8x1xf32, #tpu.memory_space<vmem>>, vector<1x8x1xf32>
    %33 = vector.shape_cast %32 : vector<1x8x1xf32> to vector<8x1xf32>
    %34 = vector.shape_cast %31 : vector<8x1xf32> to vector<1x8x1xf32>
    tpu.vector_store %arg9[%c0_21, %c0_22, %c0_23], %34 {strides = array<i32>} : memref<4x8x1xf32, #tpu.memory_space<vmem>>, vector<1x8x1xf32>,
    %c0_24 = arith.constant 0 : index
    %c0_25 = arith.constant 0 : index
    %c0_26 = arith.constant 0 : index
    %35 = vector.load %arg10[%c0_24, %c0_25, %c0_26] : memref<4x8x16xf32, #tpu.memory_space<vmem>>, vector<1x8x16xf32>
    %36 = vector.shape_cast %35 : vector<1x8x16xf32> to vector<8x16xf32>
    %37 = vector.broadcast %22 : vector<8x1xf32> to vector<8x16xf32>
    %38 = arith.mulf %37, %36 : vector<8x16xf32>
    %cst_27 = arith.constant dense<0.000000e+00> : vector<8x16xf32>
    %39 = tpu.matmul %25, %13, %cst_27 {dimension_numbers = #tpu.dot_dimension_numbers<[1], [0], [0], [1], [0, 0, 1, 1], [], []>} : vector<8x8xf32>, vector<8x16xf32>, vector<8x16xf32> -> vector<8x16xf32>
    %40 = arith.addf %38, %39 : vector<8x16xf32>
    %c0_28 = arith.constant 0 : index
    %c0_29 = arith.constant 0 : index
    %c0_30 = arith.constant 0 : index
    %41 = vector.load %arg10[%c0_28, %c0_29, %c0_30] : memref<4x8x16xf32, #tpu.memory_space<vmem>>, vector<1x8x16xf32>
    %42 = vector.shape_cast %41 : vector<1x8x16xf32> to vector<8x16xf32>
    %43 = vector.shape_cast %40 : vector<8x16xf32> to vector<1x8x16xf32>
    tpu.vector_store %arg10[%c0_28, %c0_29, %c0_30], %43 {strides = array<i32>} : memref<4x8x16xf32, #tpu.memory_space<vmem>>, vector<1x8x16xf32>,
    %c0_31 = arith.constant 0 : index
    %c0_32 = arith.constant 0 : index
    %c0_33 = arith.constant 0 : index
    %44 = vector.load %arg8[%c0_31, %c0_32, %c0_33] : memref<4x8x1xf32, #tpu.memory_space<vmem>>, vector<1x8x1xf32>
    %45 = vector.shape_cast %44 : vector<1x8x1xf32> to vector<8x1xf32>
    %46 = vector.shape_cast %20 : vector<8x1xf32> to vector<1x8x1xf32>
    tpu.vector_store %arg8[%c0_31, %c0_32, %c0_33], %46 {strides = array<i32>} : memref<4x8x1xf32, #tpu.memory_space<vmem>>, vector<1x8x1xf32>,
    %c0_34 = arith.constant 0 : index
    %c0_35 = arith.constant 0 : index
    %c0_36 = arith.constant 0 : index
    %47 = vector.load %arg3[%c0_34, %c0_35, %c0_36] : memref<1x8x64xf32, #tpu.memory_space<vmem>>, vector<1x8x64xf32>
    %48 = vector.shape_cast %47 : vector<1x8x64xf32> to vector<8x64xf32>
    %49 = vector.extract_strided_slice %48 {offsets = [0, 16], sizes = [8, 16], strides = [1, 1]} : vector<8x64xf32> to vector<8x16xf32>
    %c0_37 = arith.constant 0 : index
    %c0_38 = arith.constant 0 : index
    %c0_39 = arith.constant 0 : index
    %50 = vector.load %arg4[%c0_37, %c0_38, %c0_39] : memref<1x8x32xf32, #tpu.memory_space<vmem>>, vector<1x8x32xf32>
    %51 = vector.shape_cast %50 : vector<1x8x32xf32> to vector<8x32xf32>
    %52 = vector.extract_strided_slice %51 {offsets = [0, 0], sizes = [8, 16], strides = [1, 1]} : vector<8x32xf32> to vector<8x16xf32>
    %c0_40 = arith.constant 0 : index
    %c0_41 = arith.constant 0 : index
    %c0_42 = arith.constant 0 : index
    %53 = vector.load %arg5[%c0_40, %c0_41, %c0_42] : memref<1x8x32xf32, #tpu.memory_space<vmem>>, vector<1x8x32xf32>
    %54 = vector.shape_cast %53 : vector<1x8x32xf32> to vector<8x32xf32>
    %55 = vector.extract_strided_slice %54 {offsets = [0, 0], sizes = [8, 16], strides = [1, 1]} : vector<8x32xf32> to vector<8x16xf32>
    %cst_43 = arith.constant dense<0.000000e+00> : vector<8x8xf32>
    %56 = tpu.matmul %49, %52, %cst_43 {dimension_numbers = #tpu.dot_dimension_numbers<[1], [1], [0], [0], [0, 0, 1, 0], [], []>} : vector<8x16xf32>, vector<8x16xf32>, vector<8x8xf32> -> vector<8x8xf32>
    %57 = arith.addf %56, %4 : vector<8x8xf32>
    %c1 = arith.constant 1 : index
    %c0_44 = arith.constant 0 : index
    %c0_45 = arith.constant 0 : index
    %58 = vector.load %arg8[%c1, %c0_44, %c0_45] : memref<4x8x1xf32, #tpu.memory_space<vmem>>, vector<1x8x1xf32>
    %59 = vector.shape_cast %58 : vector<1x8x1xf32> to vector<8x1xf32>
    %cst_46 = arith.constant dense<0xFF800000> : vector<8xf32>
    %60 = vector.multi_reduction <maximumf>, %57, %cst_46 [1] : vector<8x8xf32> to vector<8xf32>
    %61 = vector.shape_cast %60 : vector<8xf32> to vector<8x1xf32>
    %62 = arith.maximumf %59, %61 : vector<8x1xf32>
    %63 = arith.subf %59, %62 : vector<8x1xf32>
    %64 = math.exp %63 : vector<8x1xf32>
    %65 = vector.broadcast %62 : vector<8x1xf32> to vector<8x8xf32>
    %66 = arith.subf %57, %65 : vector<8x8xf32>
    %67 = math.exp %66 : vector<8x8xf32>
    %c1_47 = arith.constant 1 : index
    %c0_48 = arith.constant 0 : index
    %c0_49 = arith.constant 0 : index
    %68 = vector.load %arg9[%c1_47, %c0_48, %c0_49] : memref<4x8x1xf32, #tpu.memory_space<vmem>>, vector<1x8x1xf32>
    %69 = vector.shape_cast %68 : vector<1x8x1xf32> to vector<8x1xf32>
    %70 = arith.mulf %64, %69 : vector<8x1xf32>
    %cst_50 = arith.constant dense<0.000000e+00> : vector<8xf32>
    %71 = vector.multi_reduction <add>, %67, %cst_50 [1] : vector<8x8xf32> to vector<8xf32>
    %72 = vector.shape_cast %71 : vector<8xf32> to vector<8x1xf32>
    %73 = arith.addf %70, %72 : vector<8x1xf32>
    %c1_51 = arith.constant 1 : index
    %c0_52 = arith.constant 0 : index
    %c0_53 = arith.constant 0 : index
    %74 = vector.load %arg9[%c1_51, %c0_52, %c0_53] : memref<4x8x1xf32, #tpu.memory_space<vmem>>, vector<1x8x1xf32>
    %75 = vector.shape_cast %74 : vector<1x8x1xf32> to vector<8x1xf32>
    %76 = vector.shape_cast %73 : vector<8x1xf32> to vector<1x8x1xf32>
    tpu.vector_store %arg9[%c1_51, %c0_52, %c0_53], %76 {strides = array<i32>} : memref<4x8x1xf32, #tpu.memory_space<vmem>>, vector<1x8x1xf32>,
    %c1_54 = arith.constant 1 : index
    %c0_55 = arith.constant 0 : index
    %c0_56 = arith.constant 0 : index
    %77 = vector.load %arg10[%c1_54, %c0_55, %c0_56] : memref<4x8x16xf32, #tpu.memory_space<vmem>>, vector<1x8x16xf32>
    %78 = vector.shape_cast %77 : vector<1x8x16xf32> to vector<8x16xf32>
    %79 = vector.broadcast %64 : vector<8x1xf32> to vector<8x16xf32>
    %80 = arith.mulf %79, %78 : vector<8x16xf32>
    %cst_57 = arith.constant dense<0.000000e+00> : vector<8x16xf32>
    %81 = tpu.matmul %67, %55, %cst_57 {dimension_numbers = #tpu.dot_dimension_numbers<[1], [0], [0], [1], [0, 0, 1, 1], [], []>} : vector<8x8xf32>, vector<8x16xf32>, vector<8x16xf32> -> vector<8x16xf32>
    %82 = arith.addf %80, %81 : vector<8x16xf32>
    %c1_58 = arith.constant 1 : index
    %c0_59 = arith.constant 0 : index
    %c0_60 = arith.constant 0 : index
    %83 = vector.load %arg10[%c1_58, %c0_59, %c0_60] : memref<4x8x16xf32, #tpu.memory_space<vmem>>, vector<1x8x16xf32>
    %84 = vector.shape_cast %83 : vector<1x8x16xf32> to vector<8x16xf32>
    %85 = vector.shape_cast %82 : vector<8x16xf32> to vector<1x8x16xf32>
    tpu.vector_store %arg10[%c1_58, %c0_59, %c0_60], %85 {strides = array<i32>} : memref<4x8x16xf32, #tpu.memory_space<vmem>>, vector<1x8x16xf32>,
    %c1_61 = arith.constant 1 : index
    %c0_62 = arith.constant 0 : index
    %c0_63 = arith.constant 0 : index
    %86 = vector.load %arg8[%c1_61, %c0_62, %c0_63] : memref<4x8x1xf32, #tpu.memory_space<vmem>>, vector<1x8x1xf32>
    %87 = vector.shape_cast %86 : vector<1x8x1xf32> to vector<8x1xf32>
    %88 = vector.shape_cast %62 : vector<8x1xf32> to vector<1x8x1xf32>
    tpu.vector_store %arg8[%c1_61, %c0_62, %c0_63], %88 {strides = array<i32>} : memref<4x8x1xf32, #tpu.memory_space<vmem>>, vector<1x8x1xf32>,
    %c0_64 = arith.constant 0 : index
    %c0_65 = arith.constant 0 : index
    %c0_66 = arith.constant 0 : index
    %89 = vector.load %arg3[%c0_64, %c0_65, %c0_66] : memref<1x8x64xf32, #tpu.memory_space<vmem>>, vector<1x8x64xf32>
    %90 = vector.shape_cast %89 : vector<1x8x64xf32> to vector<8x64xf32>
    %91 = vector.extract_strided_slice %90 {offsets = [0, 32], sizes = [8, 16], strides = [1, 1]} : vector<8x64xf32> to vector<8x16xf32>
    %c0_67 = arith.constant 0 : index
    %c0_68 = arith.constant 0 : index
    %c0_69 = arith.constant 0 : index
    %92 = vector.load %arg4[%c0_67, %c0_68, %c0_69] : memref<1x8x32xf32, #tpu.memory_space<vmem>>, vector<1x8x32xf32>
    %93 = vector.shape_cast %92 : vector<1x8x32xf32> to vector<8x32xf32>
    %94 = vector.extract_strided_slice %93 {offsets = [0, 16], sizes = [8, 16], strides = [1, 1]} : vector<8x32xf32> to vector<8x16xf32>
    %c0_70 = arith.constant 0 : index
    %c0_71 = arith.constant 0 : index
    %c0_72 = arith.constant 0 : index
    %95 = vector.load %arg5[%c0_70, %c0_71, %c0_72] : memref<1x8x32xf32, #tpu.memory_space<vmem>>, vector<1x8x32xf32>
    %96 = vector.shape_cast %95 : vector<1x8x32xf32> to vector<8x32xf32>
    %97 = vector.extract_strided_slice %96 {offsets = [0, 16], sizes = [8, 16], strides = [1, 1]} : vector<8x32xf32> to vector<8x16xf32>
    %cst_73 = arith.constant dense<0.000000e+00> : vector<8x8xf32>
    %98 = tpu.matmul %91, %94, %cst_73 {dimension_numbers = #tpu.dot_dimension_numbers<[1], [1], [0], [0], [0, 0, 1, 0], [], []>} : vector<8x16xf32>, vector<8x16xf32>, vector<8x8xf32> -> vector<8x8xf32>
    %99 = arith.addf %98, %4 : vector<8x8xf32>
    %c2 = arith.constant 2 : index
    %c0_74 = arith.constant 0 : index
    %c0_75 = arith.constant 0 : index
    %100 = vector.load %arg8[%c2, %c0_74, %c0_75] : memref<4x8x1xf32, #tpu.memory_space<vmem>>, vector<1x8x1xf32>
    %101 = vector.shape_cast %100 : vector<1x8x1xf32> to vector<8x1xf32>
    %cst_76 = arith.constant dense<0xFF800000> : vector<8xf32>
    %102 = vector.multi_reduction <maximumf>, %99, %cst_76 [1] : vector<8x8xf32> to vector<8xf32>
    %103 = vector.shape_cast %102 : vector<8xf32> to vector<8x1xf32>
    %104 = arith.maximumf %101, %103 : vector<8x1xf32>
    %105 = arith.subf %101, %104 : vector<8x1xf32>
    %106 = math.exp %105 : vector<8x1xf32>
    %107 = vector.broadcast %104 : vector<8x1xf32> to vector<8x8xf32>
    %108 = arith.subf %99, %107 : vector<8x8xf32>
    %109 = math.exp %108 : vector<8x8xf32>
    %c2_77 = arith.constant 2 : index
    %c0_78 = arith.constant 0 : index
    %c0_79 = arith.constant 0 : index
    %110 = vector.load %arg9[%c2_77, %c0_78, %c0_79] : memref<4x8x1xf32, #tpu.memory_space<vmem>>, vector<1x8x1xf32>
    %111 = vector.shape_cast %110 : vector<1x8x1xf32> to vector<8x1xf32>
    %112 = arith.mulf %106, %111 : vector<8x1xf32>
    %cst_80 = arith.constant dense<0.000000e+00> : vector<8xf32>
    %113 = vector.multi_reduction <add>, %109, %cst_80 [1] : vector<8x8xf32> to vector<8xf32>
    %114 = vector.shape_cast %113 : vector<8xf32> to vector<8x1xf32>
    %115 = arith.addf %112, %114 : vector<8x1xf32>
    %c2_81 = arith.constant 2 : index
    %c0_82 = arith.constant 0 : index
    %c0_83 = arith.constant 0 : index
    %116 = vector.load %arg9[%c2_81, %c0_82, %c0_83] : memref<4x8x1xf32, #tpu.memory_space<vmem>>, vector<1x8x1xf32>
    %117 = vector.shape_cast %116 : vector<1x8x1xf32> to vector<8x1xf32>
    %118 = vector.shape_cast %115 : vector<8x1xf32> to vector<1x8x1xf32>
    tpu.vector_store %arg9[%c2_81, %c0_82, %c0_83], %118 {strides = array<i32>} : memref<4x8x1xf32, #tpu.memory_space<vmem>>, vector<1x8x1xf32>,
    %c2_84 = arith.constant 2 : index
    %c0_85 = arith.constant 0 : index
    %c0_86 = arith.constant 0 : index
    %119 = vector.load %arg10[%c2_84, %c0_85, %c0_86] : memref<4x8x16xf32, #tpu.memory_space<vmem>>, vector<1x8x16xf32>
    %120 = vector.shape_cast %119 : vector<1x8x16xf32> to vector<8x16xf32>
    %121 = vector.broadcast %106 : vector<8x1xf32> to vector<8x16xf32>
    %122 = arith.mulf %121, %120 : vector<8x16xf32>
    %cst_87 = arith.constant dense<0.000000e+00> : vector<8x16xf32>
    %123 = tpu.matmul %109, %97, %cst_87 {dimension_numbers = #tpu.dot_dimension_numbers<[1], [0], [0], [1], [0, 0, 1, 1], [], []>} : vector<8x8xf32>, vector<8x16xf32>, vector<8x16xf32> -> vector<8x16xf32>
    %124 = arith.addf %122, %123 : vector<8x16xf32>
    %c2_88 = arith.constant 2 : index
    %c0_89 = arith.constant 0 : index
    %c0_90 = arith.constant 0 : index
    %125 = vector.load %arg10[%c2_88, %c0_89, %c0_90] : memref<4x8x16xf32, #tpu.memory_space<vmem>>, vector<1x8x16xf32>
    %126 = vector.shape_cast %125 : vector<1x8x16xf32> to vector<8x16xf32>
    %127 = vector.shape_cast %124 : vector<8x16xf32> to vector<1x8x16xf32>
    tpu.vector_store %arg10[%c2_88, %c0_89, %c0_90], %127 {strides = array<i32>} : memref<4x8x16xf32, #tpu.memory_space<vmem>>, vector<1x8x16xf32>,
    %c2_91 = arith.constant 2 : index
    %c0_92 = arith.constant 0 : index
    %c0_93 = arith.constant 0 : index
    %128 = vector.load %arg8[%c2_91, %c0_92, %c0_93] : memref<4x8x1xf32, #tpu.memory_space<vmem>>, vector<1x8x1xf32>
    %129 = vector.shape_cast %128 : vector<1x8x1xf32> to vector<8x1xf32>
    %130 = vector.shape_cast %104 : vector<8x1xf32> to vector<1x8x1xf32>
    tpu.vector_store %arg8[%c2_91, %c0_92, %c0_93], %130 {strides = array<i32>} : memref<4x8x1xf32, #tpu.memory_space<vmem>>, vector<1x8x1xf32>,
    %c0_94 = arith.constant 0 : index
    %c0_95 = arith.constant 0 : index
    %c0_96 = arith.constant 0 : index
    %131 = vector.load %arg3[%c0_94, %c0_95, %c0_96] : memref<1x8x64xf32, #tpu.memory_space<vmem>>, vector<1x8x64xf32>
    %132 = vector.shape_cast %131 : vector<1x8x64xf32> to vector<8x64xf32>
    %133 = vector.extract_strided_slice %132 {offsets = [0, 48], sizes = [8, 16], strides = [1, 1]} : vector<8x64xf32> to vector<8x16xf32>
    %c0_97 = arith.constant 0 : index
    %c0_98 = arith.constant 0 : index
    %c0_99 = arith.constant 0 : index
    %134 = vector.load %arg4[%c0_97, %c0_98, %c0_99] : memref<1x8x32xf32, #tpu.memory_space<vmem>>, vector<1x8x32xf32>
    %135 = vector.shape_cast %134 : vector<1x8x32xf32> to vector<8x32xf32>
    %136 = vector.extract_strided_slice %135 {offsets = [0, 16], sizes = [8, 16], strides = [1, 1]} : vector<8x32xf32> to vector<8x16xf32>
    %c0_100 = arith.constant 0 : index
    %c0_101 = arith.constant 0 : index
    %c0_102 = arith.constant 0 : index
    %137 = vector.load %arg5[%c0_100, %c0_101, %c0_102] : memref<1x8x32xf32, #tpu.memory_space<vmem>>, vector<1x8x32xf32>
    %138 = vector.shape_cast %137 : vector<1x8x32xf32> to vector<8x32xf32>
    %139 = vector.extract_strided_slice %138 {offsets = [0, 16], sizes = [8, 16], strides = [1, 1]} : vector<8x32xf32> to vector<8x16xf32>
    %cst_103 = arith.constant dense<0.000000e+00> : vector<8x8xf32>
    %140 = tpu.matmul %133, %136, %cst_103 {dimension_numbers = #tpu.dot_dimension_numbers<[1], [1], [0], [0], [0, 0, 1, 0], [], []>} : vector<8x16xf32>, vector<8x16xf32>, vector<8x8xf32> -> vector<8x8xf32>
    %141 = arith.addf %140, %4 : vector<8x8xf32>
    %c3 = arith.constant 3 : index
    %c0_104 = arith.constant 0 : index
    %c0_105 = arith.constant 0 : index
    %142 = vector.load %arg8[%c3, %c0_104, %c0_105] : memref<4x8x1xf32, #tpu.memory_space<vmem>>, vector<1x8x1xf32>
    %143 = vector.shape_cast %142 : vector<1x8x1xf32> to vector<8x1xf32>
    %cst_106 = arith.constant dense<0xFF800000> : vector<8xf32>
    %144 = vector.multi_reduction <maximumf>, %141, %cst_106 [1] : vector<8x8xf32> to vector<8xf32>
    %145 = vector.shape_cast %144 : vector<8xf32> to vector<8x1xf32>
    %146 = arith.maximumf %143, %145 : vector<8x1xf32>
    %147 = arith.subf %143, %146 : vector<8x1xf32>
    %148 = math.exp %147 : vector<8x1xf32>
    %149 = vector.broadcast %146 : vector<8x1xf32> to vector<8x8xf32>
    %150 = arith.subf %141, %149 : vector<8x8xf32>
    %151 = math.exp %150 : vector<8x8xf32>
    %c3_107 = arith.constant 3 : index
    %c0_108 = arith.constant 0 : index
    %c0_109 = arith.constant 0 : index
    %152 = vector.load %arg9[%c3_107, %c0_108, %c0_109] : memref<4x8x1xf32, #tpu.memory_space<vmem>>, vector<1x8x1xf32>
    %153 = vector.shape_cast %152 : vector<1x8x1xf32> to vector<8x1xf32>
    %154 = arith.mulf %148, %153 : vector<8x1xf32>
    %cst_110 = arith.constant dense<0.000000e+00> : vector<8xf32>
    %155 = vector.multi_reduction <add>, %151, %cst_110 [1] : vector<8x8xf32> to vector<8xf32>
    %156 = vector.shape_cast %155 : vector<8xf32> to vector<8x1xf32>
    %157 = arith.addf %154, %156 : vector<8x1xf32>
    %c3_111 = arith.constant 3 : index
    %c0_112 = arith.constant 0 : index
    %c0_113 = arith.constant 0 : index
    %158 = vector.load %arg9[%c3_111, %c0_112, %c0_113] : memref<4x8x1xf32, #tpu.memory_space<vmem>>, vector<1x8x1xf32>
    %159 = vector.shape_cast %158 : vector<1x8x1xf32> to vector<8x1xf32>
    %160 = vector.shape_cast %157 : vector<8x1xf32> to vector<1x8x1xf32>
    tpu.vector_store %arg9[%c3_111, %c0_112, %c0_113], %160 {strides = array<i32>} : memref<4x8x1xf32, #tpu.memory_space<vmem>>, vector<1x8x1xf32>,
    %c3_114 = arith.constant 3 : index
    %c0_115 = arith.constant 0 : index
    %c0_116 = arith.constant 0 : index
    %161 = vector.load %arg10[%c3_114, %c0_115, %c0_116] : memref<4x8x16xf32, #tpu.memory_space<vmem>>, vector<1x8x16xf32>
    %162 = vector.shape_cast %161 : vector<1x8x16xf32> to vector<8x16xf32>
    %163 = vector.broadcast %148 : vector<8x1xf32> to vector<8x16xf32>
    %164 = arith.mulf %163, %162 : vector<8x16xf32>
    %cst_117 = arith.constant dense<0.000000e+00> : vector<8x16xf32>
    %165 = tpu.matmul %151, %139, %cst_117 {dimension_numbers = #tpu.dot_dimension_numbers<[1], [0], [0], [1], [0, 0, 1, 1], [], []>} : vector<8x8xf32>, vector<8x16xf32>, vector<8x16xf32> -> vector<8x16xf32>
    %166 = arith.addf %164, %165 : vector<8x16xf32>
    %c3_118 = arith.constant 3 : index
    %c0_119 = arith.constant 0 : index
    %c0_120 = arith.constant 0 : index
    %167 = vector.load %arg10[%c3_118, %c0_119, %c0_120] : memref<4x8x16xf32, #tpu.memory_space<vmem>>, vector<1x8x16xf32>
    %168 = vector.shape_cast %167 : vector<1x8x16xf32> to vector<8x16xf32>
    %169 = vector.shape_cast %166 : vector<8x16xf32> to vector<1x8x16xf32>
    tpu.vector_store %arg10[%c3_118, %c0_119, %c0_120], %169 {strides = array<i32>} : memref<4x8x16xf32, #tpu.memory_space<vmem>>, vector<1x8x16xf32>,
    %c3_121 = arith.constant 3 : index
    %c0_122 = arith.constant 0 : index
    %c0_123 = arith.constant 0 : index
    %170 = vector.load %arg8[%c3_121, %c0_122, %c0_123] : memref<4x8x1xf32, #tpu.memory_space<vmem>>, vector<1x8x1xf32>
    %171 = vector.shape_cast %170 : vector<1x8x1xf32> to vector<8x1xf32>
    %172 = vector.shape_cast %146 : vector<8x1xf32> to vector<1x8x1xf32>
    tpu.vector_store %arg8[%c3_121, %c0_122, %c0_123], %172 {strides = array<i32>} : memref<4x8x1xf32, #tpu.memory_space<vmem>>, vector<1x8x1xf32>,
    %c0_i32_124 = arith.constant 0 : i32
    %173 = arith.cmpi eq, %arg2, %c0_i32_124 : i32
    %174 = arith.extui %173 : i1 to i32
    %c0_i32_125 = arith.constant 0 : i32
    %175 = arith.cmpi ne, %174, %c0_i32_125 : i32
    scf.if %175 {
      %c0_126 = arith.constant 0 : index
      %c0_127 = arith.constant 0 : index
      %c0_128 = arith.constant 0 : index
      %176 = vector.load %arg9[%c0_126, %c0_127, %c0_128] : memref<4x8x1xf32, #tpu.memory_space<vmem>>, vector<1x8x1xf32>
      %177 = vector.shape_cast %176 : vector<1x8x1xf32> to vector<8x1xf32>
      %178 = tpu.reciprocal %177 {approx = true} : vector<8x1xf32> -> vector<8x1xf32>
      %c0_129 = arith.constant 0 : index
      %c0_130 = arith.constant 0 : index
      %c0_131 = arith.constant 0 : index
      %179 = vector.load %arg10[%c0_129, %c0_130, %c0_131] : memref<4x8x16xf32, #tpu.memory_space<vmem>>, vector<1x8x16xf32>
      %180 = vector.shape_cast %179 : vector<1x8x16xf32> to vector<8x16xf32>
      %181 = vector.broadcast %178 : vector<8x1xf32> to vector<8x16xf32>
      %182 = arith.mulf %180, %181 : vector<8x16xf32>
      %c1_132 = arith.constant 1 : index
      %c0_133 = arith.constant 0 : index
      %c0_134 = arith.constant 0 : index
      %183 = vector.load %arg9[%c1_132, %c0_133, %c0_134] : memref<4x8x1xf32, #tpu.memory_space<vmem>>, vector<1x8x1xf32>
      %184 = vector.shape_cast %183 : vector<1x8x1xf32> to vector<8x1xf32>
      %185 = tpu.reciprocal %184 {approx = true} : vector<8x1xf32> -> vector<8x1xf32>
      %c1_135 = arith.constant 1 : index
      %c0_136 = arith.constant 0 : index
      %c0_137 = arith.constant 0 : index
      %186 = vector.load %arg10[%c1_135, %c0_136, %c0_137] : memref<4x8x16xf32, #tpu.memory_space<vmem>>, vector<1x8x16xf32>
      %187 = vector.shape_cast %186 : vector<1x8x16xf32> to vector<8x16xf32>
      %188 = vector.broadcast %185 : vector<8x1xf32> to vector<8x16xf32>
      %189 = arith.mulf %187, %188 : vector<8x16xf32>
      %c2_138 = arith.constant 2 : index
      %c0_139 = arith.constant 0 : index
      %c0_140 = arith.constant 0 : index
      %190 = vector.load %arg9[%c2_138, %c0_139, %c0_140] : memref<4x8x1xf32, #tpu.memory_space<vmem>>, vector<1x8x1xf32>
      %191 = vector.shape_cast %190 : vector<1x8x1xf32> to vector<8x1xf32>
      %192 = tpu.reciprocal %191 {approx = true} : vector<8x1xf32> -> vector<8x1xf32>
      %c2_141 = arith.constant 2 : index
      %c0_142 = arith.constant 0 : index
      %c0_143 = arith.constant 0 : index
      %193 = vector.load %arg10[%c2_141, %c0_142, %c0_143] : memref<4x8x16xf32, #tpu.memory_space<vmem>>, vector<1x8x16xf32>
      %194 = vector.shape_cast %193 : vector<1x8x16xf32> to vector<8x16xf32>
      %195 = vector.broadcast %192 : vector<8x1xf32> to vector<8x16xf32>
      %196 = arith.mulf %194, %195 : vector<8x16xf32>
      %c3_144 = arith.constant 3 : index
      %c0_145 = arith.constant 0 : index
      %c0_146 = arith.constant 0 : index
      %197 = vector.load %arg9[%c3_144, %c0_145, %c0_146] : memref<4x8x1xf32, #tpu.memory_space<vmem>>, vector<1x8x1xf32>
      %198 = vector.shape_cast %197 : vector<1x8x1xf32> to vector<8x1xf32>
      %199 = tpu.reciprocal %198 {approx = true} : vector<8x1xf32> -> vector<8x1xf32>
      %c3_147 = arith.constant 3 : index
      %c0_148 = arith.constant 0 : index
      %c0_149 = arith.constant 0 : index
      %200 = vector.load %arg10[%c3_147, %c0_148, %c0_149] : memref<4x8x16xf32, #tpu.memory_space<vmem>>, vector<1x8x16xf32>
      %201 = vector.shape_cast %200 : vector<1x8x16xf32> to vector<8x16xf32>
      %202 = vector.broadcast %199 : vector<8x1xf32> to vector<8x16xf32>
      %203 = arith.mulf %201, %202 : vector<8x16xf32>
      %204 = tpu.concatenate %182, %189, %196, %203 in 1 : vector<8x16xf32>, vector<8x16xf32>, vector<8x16xf32>, vector<8x16xf32> -> vector<8x64xf32>
      %c0_150 = arith.constant 0 : index
      %c0_151 = arith.constant 0 : index
      %c0_152 = arith.constant 0 : index
      %205 = vector.load %arg7[%c0_150, %c0_151, %c0_152] : memref<1x8x64xf32, #tpu.memory_space<vmem>>, vector<1x8x64xf32>
      %206 = vector.shape_cast %205 : vector<1x8x64xf32> to vector<8x64xf32>
      %207 = vector.shape_cast %204 : vector<8x64xf32> to vector<1x8x64xf32>
      tpu.vector_store %arg7[%c0_150, %c0_151, %c0_152], %207 {strides = array<i32>} : memref<1x8x64xf32, #tpu.memory_space<vmem>>, vector<1x8x64xf32>,
    } else {
    }
    return
  }
  func.func @transform_0(%arg0: i32, %arg1: i32, %arg2: i32) -> (i32, i32, i32) {
    %c0_i32 = arith.constant 0 : i32
    %c0_i32_0 = arith.constant 0 : i32
    return %arg0, %arg1, %c0_i32 : i32, i32, i32
  }
  func.func @transform_1(%arg0: i32, %arg1: i32, %arg2: i32) -> (i32, i32, i32) {
    %c0_i32 = arith.constant 0 : i32
    %c0_i32_0 = arith.constant 0 : i32
    return %arg0, %arg2, %c0_i32 : i32, i32, i32
  }
  func.func @transform_2(%arg0: i32, %arg1: i32, %arg2: i32) -> (i32, i32, i32) {
    %c0_i32 = arith.constant 0 : i32
    %c0_i32_0 = arith.constant 0 : i32
    return %arg0, %arg2, %c0_i32 : i32, i32, i32
  }
  func.func @transform_3(%arg0: i32, %arg1: i32, %arg2: i32) -> (i32, i32, i32, i32) {
    %c0_i32 = arith.constant 0 : i32
    %c0_i32_0 = arith.constant 0 : i32
    return %arg0, %c0_i32, %arg1, %arg2 : i32, i32, i32, i32
  }
  func.func @transform_4(%arg0: i32, %arg1: i32, %arg2: i32) -> (i32, i32, i32) {
    %c0_i32 = arith.constant 0 : i32
    %c0_i32_0 = arith.constant 0 : i32
    return %arg0, %arg1, %c0_i32 : i32, i32, i32
  }
}

module attributes {stable_mosaic.version = 11 : i64} {
  func.func @_oproj_residual_kernel(%arg0: i32, %arg1: memref<16x64xf32, #tpu.memory_space<vmem>>, %arg2: memref<64x32xf32, #tpu.memory_space<vmem>>, %arg3: memref<16x32xf32, #tpu.memory_space<vmem>>, %arg4: memref<16x32xf32, #tpu.memory_space<vmem>>) attributes {dimension_semantics = [#tpu.dimension_semantics<parallel>], iteration_bounds = array<i64: 1>, scalar_prefetch = 0 : i64, scratch_operands = 0 : i64, tpu.core_type = #tpu.core_type<tc>, window_params = [{transform_indices = @transform_0, window_bounds = array<i64: 16, 64>}, {pipeline_mode = #tpu.pipeline_mode<synchronous>, transform_indices = @transform_1, window_bounds = array<i64: 64, 32>}, {transform_indices = @transform_2, window_bounds = array<i64: 16, 32>}, {transform_indices = @transform_3, window_bounds = array<i64: 16, 32>}]} {
    %c0 = arith.constant 0 : index
    %c0_0 = arith.constant 0 : index
    %0 = vector.load %arg1[%c0, %c0_0] : memref<16x64xf32, #tpu.memory_space<vmem>>, vector<16x64xf32>
    %c0_1 = arith.constant 0 : index
    %c0_2 = arith.constant 0 : index
    %1 = vector.load %arg2[%c0_1, %c0_2] : memref<64x32xf32, #tpu.memory_space<vmem>>, vector<64x32xf32>
    %cst = arith.constant dense<0.000000e+00> : vector<16x32xf32>
    %2 = tpu.matmul %0, %1, %cst {dimension_numbers = #tpu.dot_dimension_numbers<[1], [0], [0], [1], [0, 0, 1, 1], [], []>} : vector<16x64xf32>, vector<64x32xf32>, vector<16x32xf32> -> vector<16x32xf32>
    %c0_3 = arith.constant 0 : index
    %c0_4 = arith.constant 0 : index
    %3 = vector.load %arg3[%c0_3, %c0_4] : memref<16x32xf32, #tpu.memory_space<vmem>>, vector<16x32xf32>
    %4 = arith.addf %3, %2 : vector<16x32xf32>
    %c0_5 = arith.constant 0 : index
    %c0_6 = arith.constant 0 : index
    %5 = vector.load %arg4[%c0_5, %c0_6] : memref<16x32xf32, #tpu.memory_space<vmem>>, vector<16x32xf32>
    tpu.vector_store %arg4[%c0_5, %c0_6], %4 {strides = array<i32>} : memref<16x32xf32, #tpu.memory_space<vmem>>, vector<16x32xf32>,
    return
  }
  func.func @transform_0(%arg0: i32) -> (i32, i32) {
    %c0_i32 = arith.constant 0 : i32
    %c0_i32_0 = arith.constant 0 : i32
    return %arg0, %c0_i32 : i32, i32
  }
  func.func @transform_1(%arg0: i32) -> (i32, i32) {
    %c0_i32 = arith.constant 0 : i32
    %c0_i32_0 = arith.constant 0 : i32
    %c0_i32_1 = arith.constant 0 : i32
    return %c0_i32, %c0_i32_0 : i32, i32
  }
  func.func @transform_2(%arg0: i32) -> (i32, i32) {
    %c0_i32 = arith.constant 0 : i32
    %c0_i32_0 = arith.constant 0 : i32
    return %arg0, %c0_i32 : i32, i32
  }
  func.func @transform_3(%arg0: i32) -> (i32, i32) {
    %c0_i32 = arith.constant 0 : i32
    %c0_i32_0 = arith.constant 0 : i32
    return %arg0, %c0_i32 : i32, i32
  }
}

module attributes {stable_mosaic.version = 11 : i64} {
  func.func @_norm_mlp_residual_kernel(%arg0: i32, %arg1: i32, %arg2: memref<16x32xf32, #tpu.memory_space<vmem>>, %arg3: memref<1x32xf32, #tpu.memory_space<vmem>>, %arg4: memref<32x64xf32, #tpu.memory_space<vmem>>, %arg5: memref<32x64xf32, #tpu.memory_space<vmem>>, %arg6: memref<64x32xf32, #tpu.memory_space<vmem>>, %arg7: memref<16x32xf32, #tpu.memory_space<vmem>>, %arg8: memref<16x32xf32, #tpu.memory_space<vmem>>, %arg9: memref<16x32xf32, #tpu.memory_space<vmem>>) attributes {dimension_semantics = [#tpu.dimension_semantics<parallel>, #tpu.dimension_semantics<arbitrary>], iteration_bounds = array<i64: 1, 1>, scalar_prefetch = 0 : i64, scratch_operands = 2 : i64, tpu.core_type = #tpu.core_type<tc>, window_params = [{transform_indices = @transform_0, window_bounds = array<i64: 16, 32>}, {pipeline_mode = #tpu.pipeline_mode<synchronous>, transform_indices = @transform_1, window_bounds = array<i64: 1, 32>}, {transform_indices = @transform_2, window_bounds = array<i64: 32, 64>}, {transform_indices = @transform_3, window_bounds = array<i64: 32, 64>}, {transform_indices = @transform_4, window_bounds = array<i64: 64, 32>}, {transform_indices = @transform_5, window_bounds = array<i64: 16, 32>}]} {
    %c0_i32 = arith.constant 0 : i32
    %0 = arith.cmpi eq, %arg1, %c0_i32 : i32
    %1 = arith.extui %0 : i1 to i32
    %c0_i32_0 = arith.constant 0 : i32
    %2 = arith.cmpi ne, %1, %c0_i32_0 : i32
    scf.if %2 {
      %c0_20 = arith.constant 0 : index
      %c0_21 = arith.constant 0 : index
      %30 = vector.load %arg2[%c0_20, %c0_21] : memref<16x32xf32, #tpu.memory_space<vmem>>, vector<16x32xf32>
      %31 = arith.mulf %30, %30 : vector<16x32xf32>
      %cst_22 = arith.constant dense<0.000000e+00> : vector<16xf32>
      %32 = vector.multi_reduction <add>, %31, %cst_22 [1] : vector<16x32xf32> to vector<16xf32>
      %33 = vector.shape_cast %32 : vector<16xf32> to vector<16x1xf32>
      %cst_23 = arith.constant 3.200000e+01 : f32
      %34 = vector.broadcast %cst_23 : f32 to vector<16x1xf32>
      %35 = arith.divf %33, %34 : vector<16x1xf32>
      %cst_24 = arith.constant 9.99999997E-7 : f32
      %36 = vector.broadcast %cst_24 : f32 to vector<16x1xf32>
      %37 = arith.addf %35, %36 : vector<16x1xf32>
      %38 = math.rsqrt %37 : vector<16x1xf32>
      %39 = vector.broadcast %38 : vector<16x1xf32> to vector<16x32xf32>
      %40 = arith.mulf %30, %39 : vector<16x32xf32>
      %c0_25 = arith.constant 0 : index
      %c0_26 = arith.constant 0 : index
      %41 = vector.load %arg3[%c0_25, %c0_26] : memref<1x32xf32, #tpu.memory_space<vmem>>, vector<1x32xf32>
      %cst_27 = arith.constant 1.000000e+00 : f32
      %42 = vector.broadcast %cst_27 : f32 to vector<1x32xf32>
      %43 = arith.addf %42, %41 : vector<1x32xf32>
      %44 = vector.broadcast %43 : vector<1x32xf32> to vector<16x32xf32>
      %45 = arith.mulf %40, %44 : vector<16x32xf32>
      %c0_28 = arith.constant 0 : index
      %c0_29 = arith.constant 0 : index
      %46 = vector.load %arg8[%c0_28, %c0_29] : memref<16x32xf32, #tpu.memory_space<vmem>>, vector<16x32xf32>
      tpu.vector_store %arg8[%c0_28, %c0_29], %45 {strides = array<i32>} : memref<16x32xf32, #tpu.memory_space<vmem>>, vector<16x32xf32>,
      %cst_30 = arith.constant 0.000000e+00 : f32
      %47 = vector.broadcast %cst_30 : f32 to vector<16x32xf32>
      %c0_31 = arith.constant 0 : index
      %c0_32 = arith.constant 0 : index
      %48 = vector.load %arg9[%c0_31, %c0_32] : memref<16x32xf32, #tpu.memory_space<vmem>>, vector<16x32xf32>
      tpu.vector_store %arg9[%c0_31, %c0_32], %47 {strides = array<i32>} : memref<16x32xf32, #tpu.memory_space<vmem>>, vector<16x32xf32>,
    } else {
    }
    %c0 = arith.constant 0 : index
    %c0_1 = arith.constant 0 : index
    %3 = vector.load %arg8[%c0, %c0_1] : memref<16x32xf32, #tpu.memory_space<vmem>>, vector<16x32xf32>
    %c0_2 = arith.constant 0 : index
    %c0_3 = arith.constant 0 : index
    %4 = vector.load %arg4[%c0_2, %c0_3] : memref<32x64xf32, #tpu.memory_space<vmem>>, vector<32x64xf32>
    %cst = arith.constant dense<0.000000e+00> : vector<16x64xf32>
    %5 = tpu.matmul %3, %4, %cst {dimension_numbers = #tpu.dot_dimension_numbers<[1], [0], [0], [1], [0, 0, 1, 1], [], []>} : vector<16x32xf32>, vector<32x64xf32>, vector<16x64xf32> -> vector<16x64xf32>
    %cst_4 = arith.constant 5.000000e-01 : f32
    %6 = vector.broadcast %cst_4 : f32 to vector<16x64xf32>
    %7 = arith.mulf %6, %5 : vector<16x64xf32>
    %cst_5 = arith.constant 4.471500e-02 : f32
    %8 = vector.broadcast %cst_5 : f32 to vector<16x64xf32>
    %9 = arith.mulf %8, %5 : vector<16x64xf32>
    %10 = arith.mulf %9, %5 : vector<16x64xf32>
    %11 = arith.mulf %10, %5 : vector<16x64xf32>
    %12 = arith.addf %5, %11 : vector<16x64xf32>
    %cst_6 = arith.constant 0.797884583 : f32
    %13 = vector.broadcast %cst_6 : f32 to vector<16x64xf32>
    %14 = arith.mulf %13, %12 : vector<16x64xf32>
    %15 = math.tanh %14 : vector<16x64xf32>
    %cst_7 = arith.constant 1.000000e+00 : f32
    %16 = vector.broadcast %cst_7 : f32 to vector<16x64xf32>
    %17 = arith.addf %16, %15 : vector<16x64xf32>
    %18 = arith.mulf %7, %17 : vector<16x64xf32>
    %c0_8 = arith.constant 0 : index
    %c0_9 = arith.constant 0 : index
    %19 = vector.load %arg5[%c0_8, %c0_9] : memref<32x64xf32, #tpu.memory_space<vmem>>, vector<32x64xf32>
    %cst_10 = arith.constant dense<0.000000e+00> : vector<16x64xf32>
    %20 = tpu.matmul %3, %19, %cst_10 {dimension_numbers = #tpu.dot_dimension_numbers<[1], [0], [0], [1], [0, 0, 1, 1], [], []>} : vector<16x32xf32>, vector<32x64xf32>, vector<16x64xf32> -> vector<16x64xf32>
    %21 = arith.mulf %18, %20 : vector<16x64xf32>
    %c0_11 = arith.constant 0 : index
    %c0_12 = arith.constant 0 : index
    %22 = vector.load %arg9[%c0_11, %c0_12] : memref<16x32xf32, #tpu.memory_space<vmem>>, vector<16x32xf32>
    %c0_13 = arith.constant 0 : index
    %c0_14 = arith.constant 0 : index
    %23 = vector.load %arg6[%c0_13, %c0_14] : memref<64x32xf32, #tpu.memory_space<vmem>>, vector<64x32xf32>
    %cst_15 = arith.constant dense<0.000000e+00> : vector<16x32xf32>
    %24 = tpu.matmul %21, %23, %cst_15 {dimension_numbers = #tpu.dot_dimension_numbers<[1], [0], [0], [1], [0, 0, 1, 1], [], []>} : vector<16x64xf32>, vector<64x32xf32>, vector<16x32xf32> -> vector<16x32xf32>
    %25 = arith.addf %22, %24 : vector<16x32xf32>
    %c0_16 = arith.constant 0 : index
    %c0_17 = arith.constant 0 : index
    %26 = vector.load %arg9[%c0_16, %c0_17] : memref<16x32xf32, #tpu.memory_space<vmem>>, vector<16x32xf32>
    tpu.vector_store %arg9[%c0_16, %c0_17], %25 {strides = array<i32>} : memref<16x32xf32, #tpu.memory_space<vmem>>, vector<16x32xf32>,
    %c0_i32_18 = arith.constant 0 : i32
    %27 = arith.cmpi eq, %arg1, %c0_i32_18 : i32
    %28 = arith.extui %27 : i1 to i32
    %c0_i32_19 = arith.constant 0 : i32
    %29 = arith.cmpi ne, %28, %c0_i32_19 : i32
    scf.if %29 {
      %c0_20 = arith.constant 0 : index
      %c0_21 = arith.constant 0 : index
      %30 = vector.load %arg2[%c0_20, %c0_21] : memref<16x32xf32, #tpu.memory_space<vmem>>, vector<16x32xf32>
      %c0_22 = arith.constant 0 : index
      %c0_23 = arith.constant 0 : index
      %31 = vector.load %arg9[%c0_22, %c0_23] : memref<16x32xf32, #tpu.memory_space<vmem>>, vector<16x32xf32>
      %32 = arith.addf %30, %31 : vector<16x32xf32>
      %c0_24 = arith.constant 0 : index
      %c0_25 = arith.constant 0 : index
      %33 = vector.load %arg7[%c0_24, %c0_25] : memref<16x32xf32, #tpu.memory_space<vmem>>, vector<16x32xf32>
      tpu.vector_store %arg7[%c0_24, %c0_25], %32 {strides = array<i32>} : memref<16x32xf32, #tpu.memory_space<vmem>>, vector<16x32xf32>,
    } else {
    }
    return
  }
  func.func @transform_0(%arg0: i32, %arg1: i32) -> (i32, i32) {
    %c0_i32 = arith.constant 0 : i32
    %c0_i32_0 = arith.constant 0 : i32
    return %arg0, %c0_i32 : i32, i32
  }
  func.func @transform_1(%arg0: i32, %arg1: i32) -> (i32, i32) {
    %c0_i32 = arith.constant 0 : i32
    %c0_i32_0 = arith.constant 0 : i32
    %c0_i32_1 = arith.constant 0 : i32
    return %c0_i32, %c0_i32_0 : i32, i32
  }
  func.func @transform_2(%arg0: i32, %arg1: i32) -> (i32, i32) {
    %c0_i32 = arith.constant 0 : i32
    %c0_i32_0 = arith.constant 0 : i32
    return %c0_i32, %arg1 : i32, i32
  }
  func.func @transform_3(%arg0: i32, %arg1: i32) -> (i32, i32) {
    %c0_i32 = arith.constant 0 : i32
    %c0_i32_0 = arith.constant 0 : i32
    return %c0_i32, %arg1 : i32, i32
  }
  func.func @transform_4(%arg0: i32, %arg1: i32) -> (i32, i32) {
    %c0_i32 = arith.constant 0 : i32
    %c0_i32_0 = arith.constant 0 : i32
    return %arg1, %c0_i32 : i32, i32
  }
  func.func @transform_5(%arg0: i32, %arg1: i32) -> (i32, i32) {
    %c0_i32 = arith.constant 0 : i32
    %c0_i32_0 = arith.constant 0 : i32
    return %arg0, %c0_i32 : i32, i32
  }
}

module attributes {stable_mosaic.version = 11 : i64} {
  func.func @_rmsnorm_kernel(%arg0: i32, %arg1: memref<16x32xf32, #tpu.memory_space<vmem>>, %arg2: memref<1x32xf32, #tpu.memory_space<vmem>>, %arg3: memref<16x32xf32, #tpu.memory_space<vmem>>) attributes {dimension_semantics = [#tpu.dimension_semantics<parallel>], iteration_bounds = array<i64: 1>, scalar_prefetch = 0 : i64, scratch_operands = 0 : i64, tpu.core_type = #tpu.core_type<tc>, window_params = [{transform_indices = @transform_0, window_bounds = array<i64: 16, 32>}, {pipeline_mode = #tpu.pipeline_mode<synchronous>, transform_indices = @transform_1, window_bounds = array<i64: 1, 32>}, {transform_indices = @transform_2, window_bounds = array<i64: 16, 32>}]} {
    %c0 = arith.constant 0 : index
    %c0_0 = arith.constant 0 : index
    %0 = vector.load %arg1[%c0, %c0_0] : memref<16x32xf32, #tpu.memory_space<vmem>>, vector<16x32xf32>
    %1 = arith.mulf %0, %0 : vector<16x32xf32>
    %cst = arith.constant dense<0.000000e+00> : vector<16xf32>
    %2 = vector.multi_reduction <add>, %1, %cst [1] : vector<16x32xf32> to vector<16xf32>
    %3 = vector.shape_cast %2 : vector<16xf32> to vector<16x1xf32>
    %cst_1 = arith.constant 3.200000e+01 : f32
    %4 = vector.broadcast %cst_1 : f32 to vector<16x1xf32>
    %5 = arith.divf %3, %4 : vector<16x1xf32>
    %cst_2 = arith.constant 9.99999997E-7 : f32
    %6 = vector.broadcast %cst_2 : f32 to vector<16x1xf32>
    %7 = arith.addf %5, %6 : vector<16x1xf32>
    %8 = math.rsqrt %7 : vector<16x1xf32>
    %9 = vector.broadcast %8 : vector<16x1xf32> to vector<16x32xf32>
    %10 = arith.mulf %0, %9 : vector<16x32xf32>
    %c0_3 = arith.constant 0 : index
    %c0_4 = arith.constant 0 : index
    %11 = vector.load %arg2[%c0_3, %c0_4] : memref<1x32xf32, #tpu.memory_space<vmem>>, vector<1x32xf32>
    %cst_5 = arith.constant 1.000000e+00 : f32
    %12 = vector.broadcast %cst_5 : f32 to vector<1x32xf32>
    %13 = arith.addf %12, %11 : vector<1x32xf32>
    %14 = vector.broadcast %13 : vector<1x32xf32> to vector<16x32xf32>
    %15 = arith.mulf %10, %14 : vector<16x32xf32>
    %c0_6 = arith.constant 0 : index
    %c0_7 = arith.constant 0 : index
    %16 = vector.load %arg3[%c0_6, %c0_7] : memref<16x32xf32, #tpu.memory_space<vmem>>, vector<16x32xf32>
    tpu.vector_store %arg3[%c0_6, %c0_7], %15 {strides = array<i32>} : memref<16x32xf32, #tpu.memory_space<vmem>>, vector<16x32xf32>,
    return
  }
  func.func @transform_0(%arg0: i32) -> (i32, i32) {
    %c0_i32 = arith.constant 0 : i32
    %c0_i32_0 = arith.constant 0 : i32
    return %arg0, %c0_i32 : i32, i32
  }
  func.func @transform_1(%arg0: i32) -> (i32, i32) {
    %c0_i32 = arith.constant 0 : i32
    %c0_i32_0 = arith.constant 0 : i32
    %c0_i32_1 = arith.constant 0 : i32
    return %c0_i32, %c0_i32_0 : i32, i32
  }
  func.func @transform_2(%arg0: i32) -> (i32, i32) {
    %c0_i32 = arith.constant 0 : i32
    %c0_i32_0 = arith.constant 0 : i32
    return %arg0, %c0_i32 : i32, i32
  }
}

</mosaic_0001>

<llo_original>
// kernel: gemma_forward.11
$region0: #{gemma_forward.11}
  #allocation0 [shape = 'u32[]', space=smem, size = 0x4, offset = 0x4, fixed_abs, tag = 'smem constant byte address 0x4 - core index']
  #allocation1 [shape = 'u32[144,128]{1,0:T(1,128)}', space=vmem, size = 0x12000, scoped, tag = 'internal scratch']
  %s0 = inlined_call_operand.vmem [shape: f32[16,64], index: 0, kind: input, shape index: {}]
  %s1 = inlined_call_operand.vmem [shape: f32[64,32], index: 1, kind: input, shape index: {}]
  %s2 = inlined_call_operand.vmem [shape: f32[16,32], index: 2, kind: input, shape index: {}]
  %s3 = inlined_call_operand.vmem [shape: f32[16,32], index: 3, kind: output, shape index: {}]
  %s4 = sld [smem:[#allocation0]]
  $region22: #{gemma_forward.11} parent=0
    _
  %s6 = ssub.s32 1, %s4
  %s7 = scalar_select 0, %s6, %s4
  // Predicated region
  $region2: #{gemma_forward.11} parent=0 // pred_check
    _
  $region3: #{gemma_forward.11} parent=0 // pred_check_branch
    %9 = sbr.rel (0) target = $region5
  $region4: #{gemma_forward.11} parent=0 // pred_region
    _
  $region5: #{gemma_forward.11} parent=0 // pred_fallthru
    _
  // Predicated region
  $region6: #{gemma_forward.11} parent=0 // pred_check
    _
  $region7: #{gemma_forward.11} parent=0 // pred_check_branch
    %11 = sbr.rel (0) target = $region9
  $region8: #{gemma_forward.11} parent=0 // pred_region
    _
  $region9: #{gemma_forward.11} parent=0 // pred_fallthru
    _
  // Predicated region
  $region10: #{gemma_forward.11} parent=0 // pred_check
    _
  $region11: #{gemma_forward.11} parent=0 // pred_check_branch
    %13 = sbr.rel (0) target = $region13
  $region12: #{gemma_forward.11} parent=0 // pred_region
    _
  $region13: #{gemma_forward.11} parent=0 // pred_fallthru
    _
  %v14 = vld [vmem:[%s0] sm:$0xff]
  %v15 = vld [vmem:[%s0 + $0x8] sm:$0xff]
  %v16 = vld [vmem:[%s1] sm:$0xff]
  %v17 = vld [vmem:[%s1 + $0x8] sm:$0xff]
  %v18 = vld [vmem:[%s1 + $0x10] sm:$0xff]
  %v19 = vld [vmem:[%s1 + $0x18] sm:$0xff]
  %v20 = vld [vmem:[%s1 + $0x20] sm:$0xff]
  %v21 = vld [vmem:[%s1 + $0x28] sm:$0xff]
  %v22 = vld [vmem:[%s1 + $0x30] sm:$0xff]
  %v23 = vld [vmem:[%s1 + $0x38] sm:$0xff]
  %vm24 = vcmask 523264
  %v26 = vsel %vm24, %v14, 0
  %v29 = vsel %vm24, %v15, 0
  %31 = vmatprep.subr.mxu0 0.0
  %32 = vmatpush1.msra.mxu0 %v16
  %33 = vmatprep.subr.mxu0 0.0
  %34 = vmatpush1.msra.mxu0 %v17
  %35 = vmatprep.subr.mxu0 0.0
  %36 = vmatpush1.msra.mxu0 %v18
  %37 = vmatprep.subr.mxu0 0.0
  %38 = vmatpush1.msra.mxu0 %v19
  %39 = vmatprep.subr.mxu0 0.0
  %40 = vmatpush1.msra.mxu0 %v20
  %41 = vmatprep.subr.mxu0 0.0
  %42 = vmatpush1.msra.mxu0 %v21
  %43 = vmatprep.subr.mxu0 0.0
  %44 = vmatpush1.msra.mxu0 %v22
  %45 = vmatprep.subr.mxu0 0.0
  %46 = vmatpush1.msra.mxu0 %v23
  %47 = vmatprep.subr.mxu0 0.0
  %48 = vmatpush1.msra.mxu0 0.0
  %49 = vmatprep.subr.mxu0 0.0
  %50 = vmatpush1.msra.mxu0 0.0
  %51 = vmatprep.subr.mxu0 0.0
  %52 = vmatpush1.msra.mxu0 0.0
  %53 = vmatprep.subr.mxu0 0.0
  %54 = vmatpush1.msra.mxu0 0.0
  %55 = vmatprep.subr.mxu0 0.0
  %56 = vmatpush1.msra.mxu0 0.0
  %57 = vmatprep.subr.mxu0 0.0
  %58 = vmatpush1.msra.mxu0 0.0
  %59 = vmatprep.subr.mxu0 0.0
  %60 = vmatpush1.msra.mxu0 0.0
  %61 = vmatprep.subr.mxu0 0.0
  %62 = vmatpush1.msra.mxu0 0.0
  %63 = vmatprep.subr.mxu0 0.0
  %64 = vmatpush1.msra.mxu0 0.0
  %65 = vmatprep.subr.mxu0 0.0
  %66 = vmatpush1.msra.mxu0 0.0
  %67 = vmatprep.subr.mxu0 0.0
  %68 = vmatpush1.msra.mxu0 0.0
  %69 = vmatprep.subr.mxu0 0.0
  %70 = vmatpush1.msra.mxu0 0.0
  %71 = vmatprep.subr.mxu0 0.0
  %72 = vmatpush1.msra.mxu0 0.0
  %73 = vmatprep.subr.mxu0 0.0
  %74 = vmatpush1.msra.mxu0 0.0
  %75 = vmatprep.subr.mxu0 0.0
  %76 = vmatpush1.msra.mxu0 0.0
  %77 = vmatprep.subr.mxu0 0.0
  %78 = vmatpush1.msra.mxu0 0.0
  %79 = vmatprep.subr.mxu0 0.0
  %80 = vmatpush1.msra.mxu0 0.0
  %81 = vmatprep.subr.mxu0 0.0
  %82 = vmatpush1.msra.mxu0 0.0
  %83 = vmatprep.subr.mxu0 0.0
  %84 = vmatpush1.msra.mxu0 0.0
  %85 = vmatprep.subr.mxu0 0.0
  %86 = vmatpush1.msra.mxu0 0.0
  %87 = vmatprep.subr.mxu0 0.0
  %88 = vmatpush1.msra.mxu0 0.0
  %89 = vmatprep.subr.mxu0 0.0
  %90 = vmatpush1.msra.mxu0 0.0
  %91 = vmatprep.subr.mxu0 0.0
  %92 = vmatpush1.msra.mxu0 0.0
  %93 = vmatprep.subr.mxu0 0.0
  %94 = vmatpush1.msra.mxu0 0.0
  %95 = vmatprep.mubr.f32.mxu0 0.0
  %96 = vmatmul.mubr.f32.gmra.mrb[0].mxu0 %v26
  %v97 = vpop.f32.mrb[0].mxu0
  %v98 = vadd.f32 0.0, %v97
  %v99 = vpop.f32.mrb[0].mxu0
  %100 = vmatprep.mubr.f32.mxu0 0.0
  %101 = vmatmul.mubr.f32.gmra.mrb[0].mxu0 %v29
  %v102 = vpop.f32.mrb[0].mxu0
  %v103 = vadd.f32 0.0, %v102
  %v104 = vpop.f32.mrb[0].mxu0
  %105 = vdwg.mxu0
  %v106 = vld [vmem:[%s2] sm:$0xff]
  %v107 = vld [vmem:[%s2 + $0x8] sm:$0xff]
  %v108 = vadd.f32 %v106, %v98
  %v109 = vadd.f32 %v107, %v103
  %vm110 = vcmask 261120
  %111 = vst.msk [vmem:[%s3] sm:$0xff] %vm110, %v108
  %112 = vst.msk [vmem:[%s3 + $0x8] sm:$0xff] %vm110, %v109
  // Predicated region
  $region14: #{gemma_forward.11} parent=0 // pred_check
    _
  $region15: #{gemma_forward.11} parent=0 // pred_check_branch
    %114 = sbr.rel (0) target = $region17
  $region16: #{gemma_forward.11} parent=0 // pred_region
    _
  $region17: #{gemma_forward.11} parent=0 // pred_fallthru
    _
  // Predicated region
  $region18: #{gemma_forward.11} parent=0 // pred_check
    _
  $region19: #{gemma_forward.11} parent=0 // pred_check_branch
    %116 = sbr.rel (0) target = $region21
  $region20: #{gemma_forward.11} parent=0 // pred_region
    _
  $region21: #{gemma_forward.11} parent=0 // pred_fallthru
    _

// kernel: gemma_forward.12
$region0: #{gemma_forward.12}
  #allocation0 [shape = 'u32[]', space=smem, size = 0x4, offset = 0x4, fixed_abs, tag = 'smem constant byte address 0x4 - core index']
  #allocation1 [shape = 'u32[144,128]{1,0:T(1,128)}', space=vmem, size = 0x12000, scoped, tag = 'internal scratch']
  #allocation2 [shape = 'f32[16,32]{1,0:T(8,128)}', space=vmem, size = 0x2000, scoped, tag = 'scratch operand']
  #allocation3 [shape = 'f32[16,32]{1,0:T(8,128)}', space=vmem, size = 0x2000, scoped, tag = 'scratch operand']
  %s0 = inlined_call_operand.vmem [shape: f32[16,32], index: 0, kind: input, shape index: {}]
  %s1 = inlined_call_operand.vmem [shape: f32[1,32], index: 1, kind: input, shape index: {}]
  %s2 = inlined_call_operand.vmem [shape: f32[32,64], index: 2, kind: input, shape index: {}]
  %s3 = inlined_call_operand.vmem [shape: f32[32,64], index: 3, kind: input, shape index: {}]
  %s4 = inlined_call_operand.vmem [shape: f32[64,32], index: 4, kind: input, shape index: {}]
  %s5 = inlined_call_operand.vmem [shape: f32[16,32], index: 5, kind: output, shape index: {}]
  %s6 = sld [smem:[#allocation0]]
  $region38: #{gemma_forward.12} parent=0
    _
  %s8 = ssub.s32 1, %s6
  %s9 = scalar_select 0, %s8, %s6
  // Predicated region
  $region2: #{gemma_forward.12} parent=0 // pred_check
    _
  $region3: #{gemma_forward.12} parent=0 // pred_check_branch
    %11 = sbr.rel (0) target = $region5
  $region4: #{gemma_forward.12} parent=0 // pred_region
    _
  $region5: #{gemma_forward.12} parent=0 // pred_fallthru
    _
  // Predicated region
  $region6: #{gemma_forward.12} parent=0 // pred_check
    _
  $region7: #{gemma_forward.12} parent=0 // pred_check_branch
    %13 = sbr.rel (0) target = $region9
  $region8: #{gemma_forward.12} parent=0 // pred_region
    _
  $region9: #{gemma_forward.12} parent=0 // pred_fallthru
    _
  // Predicated region
  $region10: #{gemma_forward.12} parent=0 // pred_check
    _
  $region11: #{gemma_forward.12} parent=0 // pred_check_branch
    %15 = sbr.rel (0) target = $region13
  $region12: #{gemma_forward.12} parent=0 // pred_region
    _
  $region13: #{gemma_forward.12} parent=0 // pred_fallthru
    _
  // Predicated region
  $region14: #{gemma_forward.12} parent=0 // pred_check
    _
  $region15: #{gemma_forward.12} parent=0 // pred_check_branch
    %17 = sbr.rel (0) target = $region17
  $region16: #{gemma_forward.12} parent=0 // pred_region
    _
  $region17: #{gemma_forward.12} parent=0 // pred_fallthru
    _
  // Predicated region
  $region18: #{gemma_forward.12} parent=0 // pred_check
    _
  $region19: #{gemma_forward.12} parent=0 // pred_check_branch
    %19 = sbr.rel (0) target = $region21
  $region20: #{gemma_forward.12} parent=0 // pred_region
    _
  $region21: #{gemma_forward.12} parent=0 // pred_fallthru
    _
  %p20 = scmp.eq.s32.totalorder 0, 0
  // Predicated region
  $region22: #{gemma_forward.12} parent=0 // pred_check
    %p21 = pneg %p20
  $region23: #{gemma_forward.12} parent=0 // pred_check_branch
    %23 = sbr.rel (%p21) target = $region25
  $region24: #{gemma_forward.12} parent=0 // pred_region
    %v24 = vld [vmem:[%s0] sm:$0xff]
    %v25 = vld [vmem:[%s0 + $0x8] sm:$0xff]
    %v26 = vmul.f32 %v24, %v24
    %v27 = vmul.f32 %v25, %v25
    %vm28 = vcmask 261120
    %v29 = vsel %vm28, %v26, 0.0
    %30 = vadd.xlane.f32.xlu0 %v29
    %v31 = vpop.xlane.xlu0 %30
    %v32 = vsel %vm28, %v27, 0.0
    %33 = vadd.xlane.f32.xlu0 %v32
    %v34 = vpop.xlane.xlu0 %33
    %v35 = vrcp.pop 32.0
    %v36 = vmul.f32 %v31, %v35
    %v37 = vmul.f32 %v34, %v35
    %v38 = vadd.f32 %v36, 1e-06
    %v39 = vadd.f32 %v37, 1e-06
    %v40 = vrsqrt.pop %v38
    %v41 = vrsqrt.pop %v39
    %v42 = vmul.f32 %v24, %v40
    %v43 = vmul.f32 %v25, %v41
    %v44 = vld [vmem:[%s1] sm:$0x1]
    %v45 = vadd.f32 %v44, 1.0
    %v47 = vlaneseq
    %v48 = vshrl.u32 %v47, 7
    %v49 = vsub.s32 0, %v48
    %v50 = vrot.slane %v45, %v49
    %v52 = vmul.f32 %v42, %v50
    %v53 = vmul.f32 %v43, %v50
    %54 = vst.msk [vmem:[#allocation2] sm:$0xff] %vm28, %v52
    %55 = vst.msk [vmem:[#allocation2 + $0x8] sm:$0xff] %vm28, %v53
    %56 = vst.msk [vmem:[#allocation3] sm:$0xff] %vm28, 0.0
    %57 = vst.msk [vmem:[#allocation3 + $0x8] sm:$0xff] %vm28, 0.0
  $region25: #{gemma_forward.12} parent=0 // pred_fallthru
    _
  %v58 = vld [vmem:[#allocation2] sm:$0xff]
  %v59 = vld [vmem:[#allocation2 + $0x8] sm:$0xff]
  %v60 = vld [vmem:[%s2] sm:$0xff]
  %v61 = vld [vmem:[%s2 + $0x8] sm:$0xff]
  %v62 = vld [vmem:[%s2 + $0x10] sm:$0xff]
  %v63 = vld [vmem:[%s2 + $0x18] sm:$0xff]
  %vm64 = vcmask 261120
  %v66 = vsel %vm64, %v58, 0
  %v69 = vsel %vm64, %v59, 0
  %71 = vmatprep.subr.mxu0 0.0
  %72 = vmatpush1.msra.mxu0 %v60
  %73 = vmatprep.subr.mxu0 0.0
  %74 = vmatpush1.msra.mxu0 %v61
  %75 = vmatprep.subr.mxu0 0.0
  %76 = vmatpush1.msra.mxu0 %v62
  %77 = vmatprep.subr.mxu0 0.0
  %78 = vmatpush1.msra.mxu0 %v63
  %79 = vmatprep.subr.mxu0 0.0
  %80 = vmatpush1.msra.mxu0 0.0
  %81 = vmatprep.subr.mxu0 0.0
  %82 = vmatpush1.msra.mxu0 0.0
  %83 = vmatprep.subr.mxu0 0.0
  %84 = vmatpush1.msra.mxu0 0.0
  %85 = vmatprep.subr.mxu0 0.0
  %86 = vmatpush1.msra.mxu0 0.0
  %87 = vmatprep.subr.mxu0 0.0
  %88 = vmatpush1.msra.mxu0 0.0
  %89 = vmatprep.subr.mxu0 0.0
  %90 = vmatpush1.msra.mxu0 0.0
  %91 = vmatprep.subr.mxu0 0.0
  %92 = vmatpush1.msra.mxu0 0.0
  %93 = vmatprep.subr.mxu0 0.0
  %94 = vmatpush1.msra.mxu0 0.0
  %95 = vmatprep.subr.mxu0 0.0
  %96 = vmatpush1.msra.mxu0 0.0
  %97 = vmatprep.subr.mxu0 0.0
  %98 = vmatpush1.msra.mxu0 0.0
  %99 = vmatprep.subr.mxu0 0.0
  %100 = vmatpush1.msra.mxu0 0.0
  %101 = vmatprep.subr.mxu0 0.0
  %102 = vmatpush1.msra.mxu0 0.0
  %103 = vmatprep.subr.mxu0 0.0
  %104 = vmatpush1.msra.mxu0 0.0
  %105 = vmatprep.subr.mxu0 0.0
  %106 = vmatpush1.msra.mxu0 0.0
  %107 = vmatprep.subr.mxu0 0.0
  %108 = vmatpush1.msra.mxu0 0.0
  %109 = vmatprep.subr.mxu0 0.0
  %110 = vmatpush1.msra.mxu0 0.0
  %111 = vmatprep.subr.mxu0 0.0
  %112 = vmatpush1.msra.mxu0 0.0
  %113 = vmatprep.subr.mxu0 0.0
  %114 = vmatpush1.msra.mxu0 0.0
  %115 = vmatprep.subr.mxu0 0.0
  %116 = vmatpush1.msra.mxu0 0.0
  %117 = vmatprep.subr.mxu0 0.0
  %118 = vmatpush1.msra.mxu0 0.0
  %119 = vmatprep.subr.mxu0 0.0
  %120 = vmatpush1.msra.mxu0 0.0
  %121 = vmatprep.subr.mxu0 0.0
  %122 = vmatpush1.msra.mxu0 0.0
  %123 = vmatprep.subr.mxu0 0.0
  %124 = vmatpush1.msra.mxu0 0.0
  %125 = vmatprep.subr.mxu0 0.0
  %126 = vmatpush1.msra.mxu0 0.0
  %127 = vmatprep.subr.mxu0 0.0
  %128 = vmatpush1.msra.mxu0 0.0
  %129 = vmatprep.subr.mxu0 0.0
  %130 = vmatpush1.msra.mxu0 0.0
  %131 = vmatprep.subr.mxu0 0.0
  %132 = vmatpush1.msra.mxu0 0.0
  %133 = vmatprep.subr.mxu0 0.0
  %134 = vmatpush1.msra.mxu0 0.0
  %135 = vmatprep.mubr.f32.mxu0 0.0
  %136 = vmatmul.mubr.f32.gmra.mrb[0].mxu0 %v66
  %v137 = vpop.f32.mrb[0].mxu0
  %v138 = vadd.f32 0.0, %v137
  %v139 = vpop.f32.mrb[0].mxu0
  %140 = vmatprep.mubr.f32.mxu0 0.0
  %141 = vmatmul.mubr.f32.gmra.mrb[0].mxu0 %v69
  %v142 = vpop.f32.mrb[0].mxu0
  %v143 = vadd.f32 0.0, %v142
  %v144 = vpop.f32.mrb[0].mxu0
  %145 = vdwg.mxu0
  %v146 = vmul.f32 %v138, 0.5
  %v147 = vmul.f32 %v143, 0.5
  %v148 = vmul.f32 %v138, 0.044715
  %v149 = vmul.f32 %v143, 0.044715
  %v150 = vmul.f32 %v148, %v138
  %v151 = vmul.f32 %v149, %v143
  %v152 = vmul.f32 %v150, %v138
  %v153 = vmul.f32 %v151, %v143
  %v154 = vadd.f32 %v138, %v152
  %v155 = vadd.f32 %v143, %v153
  %v156 = vmul.f32 %v154, 0.7978846
  %v157 = vmul.f32 %v155, 0.7978846
  %v158 = vtanh.pop %v156
  %v159 = vtanh.pop %v157
  %v160 = vadd.f32 %v158, 1.0
  %v161 = vadd.f32 %v159, 1.0
  %v162 = vmul.f32 %v146, %v160
  %v163 = vmul.f32 %v147, %v161
  %v164 = vld [vmem:[%s3] sm:$0xff]
  %v165 = vld [vmem:[%s3 + $0x8] sm:$0xff]
  %v166 = vld [vmem:[%s3 + $0x10] sm:$0xff]
  %v167 = vld [vmem:[%s3 + $0x18] sm:$0xff]
  %168 = vmatprep.subr.mxu0 0.0
  %169 = vmatpush1.msra.mxu0 %v164
  %170 = vmatprep.subr.mxu0 0.0
  %171 = vmatpush1.msra.mxu0 %v165
  %172 = vmatprep.subr.mxu0 0.0
  %173 = vmatpush1.msra.mxu0 %v166
  %174 = vmatprep.subr.mxu0 0.0
  %175 = vmatpush1.msra.mxu0 %v167
  %176 = vmatprep.subr.mxu0 0.0
  %177 = vmatpush1.msra.mxu0 0.0
  %178 = vmatprep.subr.mxu0 0.0
  %179 = vmatpush1.msra.mxu0 0.0
  %180 = vmatprep.subr.mxu0 0.0
  %181 = vmatpush1.msra.mxu0 0.0
  %182 = vmatprep.subr.mxu0 0.0
  %183 = vmatpush1.msra.mxu0 0.0
  %184 = vmatprep.subr.mxu0 0.0
  %185 = vmatpush1.msra.mxu0 0.0
  %186 = vmatprep.subr.mxu0 0.0
  %187 = vmatpush1.msra.mxu0 0.0
  %188 = vmatprep.subr.mxu0 0.0
  %189 = vmatpush1.msra.mxu0 0.0
  %190 = vmatprep.subr.mxu0 0.0
  %191 = vmatpush1.msra.mxu0 0.0
  %192 = vmatprep.subr.mxu0 0.0
  %193 = vmatpush1.msra.mxu0 0.0
  %194 = vmatprep.subr.mxu0 0.0
  %195 = vmatpush1.msra.mxu0 0.0
  %196 = vmatprep.subr.mxu0 0.0
  %197 = vmatpush1.msra.mxu0 0.0
  %198 = vmatprep.subr.mxu0 0.0
  %199 = vmatpush1.msra.mxu0 0.0
  %200 = vmatprep.subr.mxu0 0.0
  %201 = vmatpush1.msra.mxu0 0.0
  %202 = vmatprep.subr.mxu0 0.0
  %203 = vmatpush1.msra.mxu0 0.0
  %204 = vmatprep.subr.mxu0 0.0
  %205 = vmatpush1.msra.mxu0 0.0
  %206 = vmatprep.subr.mxu0 0.0
  %207 = vmatpush1.msra.mxu0 0.0
  %208 = vmatprep.subr.mxu0 0.0
  %209 = vmatpush1.msra.mxu0 0.0
  %210 = vmatprep.subr.mxu0 0.0
  %211 = vmatpush1.msra.mxu0 0.0
  %212 = vmatprep.subr.mxu0 0.0
  %213 = vmatpush1.msra.mxu0 0.0
  %214 = vmatprep.subr.mxu0 0.0
  %215 = vmatpush1.msra.mxu0 0.0
  %216 = vmatprep.subr.mxu0 0.0
  %217 = vmatpush1.msra.mxu0 0.0
  %218 = vmatprep.subr.mxu0 0.0
  %219 = vmatpush1.msra.mxu0 0.0
  %220 = vmatprep.subr.mxu0 0.0
  %221 = vmatpush1.msra.mxu0 0.0
  %222 = vmatprep.subr.mxu0 0.0
  %223 = vmatpush1.msra.mxu0 0.0
  %224 = vmatprep.subr.mxu0 0.0
  %225 = vmatpush1.msra.mxu0 0.0
  %226 = vmatprep.subr.mxu0 0.0
  %227 = vmatpush1.msra.mxu0 0.0
  %228 = vmatprep.subr.mxu0 0.0
  %229 = vmatpush1.msra.mxu0 0.0
  %230 = vmatprep.subr.mxu0 0.0
  %231 = vmatpush1.msra.mxu0 0.0
  %232 = vmatprep.mubr.f32.mxu0 0.0
  %233 = vmatmul.mubr.f32.gmra.mrb[0].mxu0 %v66
  %v234 = vpop.f32.mrb[0].mxu0
  %v235 = vadd.f32 0.0, %v234
  %v236 = vpop.f32.mrb[0].mxu0
  %237 = vmatprep.mubr.f32.mxu0 0.0
  %238 = vmatmul.mubr.f32.gmra.mrb[0].mxu0 %v69
  %v239 = vpop.f32.mrb[0].mxu0
  %v240 = vadd.f32 0.0, %v239
  %v241 = vpop.f32.mrb[0].mxu0
  %242 = vdwg.mxu0
  %v243 = vmul.f32 %v162, %v235
  %v244 = vmul.f32 %v163, %v240
  %v245 = vld [vmem:[#allocation3] sm:$0xff]
  %v246 = vld [vmem:[#allocation3 + $0x8] sm:$0xff]
  %v247 = vld [vmem:[%s4] sm:$0xff]
  %v248 = vld [vmem:[%s4 + $0x8] sm:$0xff]
  %v249 = vld [vmem:[%s4 + $0x10] sm:$0xff]
  %v250 = vld [vmem:[%s4 + $0x18] sm:$0xff]
  %v251 = vld [vmem:[%s4 + $0x20] sm:$0xff]
  %v252 = vld [vmem:[%s4 + $0x28] sm:$0xff]
  %v253 = vld [vmem:[%s4 + $0x30] sm:$0xff]
  %v254 = vld [vmem:[%s4 + $0x38] sm:$0xff]
  %vm255 = vcmask 523264
  %v257 = vsel %vm255, %v243, 0
  %v260 = vsel %vm255, %v244, 0
  %262 = vmatprep.subr.mxu0 0.0
  %263 = vmatpush1.msra.mxu0 %v247
  %264 = vmatprep.subr.mxu0 0.0
  %265 = vmatpush1.msra.mxu0 %v248
  %266 = vmatprep.subr.mxu0 0.0
  %267 = vmatpush1.msra.mxu0 %v249
  %268 = vmatprep.subr.mxu0 0.0
  %269 = vmatpush1.msra.mxu0 %v250
  %270 = vmatprep.subr.mxu0 0.0
  %271 = vmatpush1.msra.mxu0 %v251
  %272 = vmatprep.subr.mxu0 0.0
  %273 = vmatpush1.msra.mxu0 %v252
  %274 = vmatprep.subr.mxu0 0.0
  %275 = vmatpush1.msra.mxu0 %v253
  %276 = vmatprep.subr.mxu0 0.0
  %277 = vmatpush1.msra.mxu0 %v254
  %278 = vmatprep.subr.mxu0 0.0
  %279 = vmatpush1.msra.mxu0 0.0
  %280 = vmatprep.subr.mxu0 0.0
  %281 = vmatpush1.msra.mxu0 0.0
  %282 = vmatprep.subr.mxu0 0.0
  %283 = vmatpush1.msra.mxu0 0.0
  %284 = vmatprep.subr.mxu0 0.0
  %285 = vmatpush1.msra.mxu0 0.0
  %286 = vmatprep.subr.mxu0 0.0
  %287 = vmatpush1.msra.mxu0 0.0
  %288 = vmatprep.subr.mxu0 0.0
  %289 = vmatpush1.msra.mxu0 0.0
  %290 = vmatprep.subr.mxu0 0.0
  %291 = vmatpush1.msra.mxu0 0.0
  %292 = vmatprep.subr.mxu0 0.0
  %293 = vmatpush1.msra.mxu0 0.0
  %294 = vmatprep.subr.mxu0 0.0
  %295 = vmatpush1.msra.mxu0 0.0
  %296 = vmatprep.subr.mxu0 0.0
  %297 = vmatpush1.msra.mxu0 0.0
  %298 = vmatprep.subr.mxu0 0.0
  %299 = vmatpush1.msra.mxu0 0.0
  %300 = vmatprep.subr.mxu0 0.0
  %301 = vmatpush1.msra.mxu0 0.0
  %302 = vmatprep.subr.mxu0 0.0
  %303 = vmatpush1.msra.mxu0 0.0
  %304 = vmatprep.subr.mxu0 0.0
  %305 = vmatpush1.msra.mxu0 0.0
  %306 = vmatprep.subr.mxu0 0.0
  %307 = vmatpush1.msra.mxu0 0.0
  %308 = vmatprep.subr.mxu0 0.0
  %309 = vmatpush1.msra.mxu0 0.0
  %310 = vmatprep.subr.mxu0 0.0
  %311 = vmatpush1.msra.mxu0 0.0
  %312 = vmatprep.subr.mxu0 0.0
  %313 = vmatpush1.msra.mxu0 0.0
  %314 = vmatprep.subr.mxu0 0.0
  %315 = vmatpush1.msra.mxu0 0.0
  %316 = vmatprep.subr.mxu0 0.0
  %317 = vmatpush1.msra.mxu0 0.0
  %318 = vmatprep.subr.mxu0 0.0
  %319 = vmatpush1.msra.mxu0 0.0
  %320 = vmatprep.subr.mxu0 0.0
  %321 = vmatpush1.msra.mxu0 0.0
  %322 = vmatprep.subr.mxu0 0.0
  %323 = vmatpush1.msra.mxu0 0.0
  %324 = vmatprep.subr.mxu0 0.0
  %325 = vmatpush1.msra.mxu0 0.0
  %326 = vmatprep.mubr.f32.mxu0 0.0
  %327 = vmatmul.mubr.f32.gmra.mrb[0].mxu0 %v257
  %v328 = vpop.f32.mrb[0].mxu0
  %v329 = vadd.f32 0.0, %v328
  %v330 = vpop.f32.mrb[0].mxu0
  %331 = vmatprep.mubr.f32.mxu0 0.0
  %332 = vmatmul.mubr.f32.gmra.mrb[0].mxu0 %v260
  %v333 = vpop.f32.mrb[0].mxu0
  %v334 = vadd.f32 0.0, %v333
  %v335 = vpop.f32.mrb[0].mxu0
  %336 = vdwg.mxu0
  %v337 = vadd.f32 %v245, %v329
  %v338 = vadd.f32 %v246, %v334
  %339 = vst.msk [vmem:[#allocation3] sm:$0xff] %vm64, %v337
  %340 = vst.msk [vmem:[#allocation3 + $0x8] sm:$0xff] %vm64, %v338
  // Predicated region
  $region26: #{gemma_forward.12} parent=0 // pred_check
    %p341 = pneg %p20
  $region27: #{gemma_forward.12} parent=0 // pred_check_branch
    %343 = sbr.rel (%p341) target = $region29
  $region28: #{gemma_forward.12} parent=0 // pred_region
    %v344 = vld [vmem:[%s0] sm:$0xff]
    %v345 = vld [vmem:[%s0 + $0x8] sm:$0xff]
    %v346 = vld [vmem:[#allocation3] sm:$0xff]
    %v347 = vld [vmem:[#allocation3 + $0x8] sm:$0xff]
    %v348 = vadd.f32 %v344, %v346
    %v349 = vadd.f32 %v345, %v347
    %350 = vst.msk [vmem:[%s5] sm:$0xff] %vm64, %v348
    %351 = vst.msk [vmem:[%s5 + $0x8] sm:$0xff] %vm64, %v349
  $region29: #{gemma_forward.12} parent=0 // pred_fallthru
    _
  // Predicated region
  $region30: #{gemma_forward.12} parent=0 // pred_check
    _
  $region31: #{gemma_forward.12} parent=0 // pred_check_branch
    %353 = sbr.rel (0) target = $region33
  $region32: #{gemma_forward.12} parent=0 // pred_region
    _
  $region33: #{gemma_forward.12} parent=0 // pred_fallthru
    _
  // Predicated region
  $region34: #{gemma_forward.12} parent=0 // pred_check
    _
  $region35: #{gemma_forward.12} parent=0 // pred_check_branch
    %355 = sbr.rel (0) target = $region37
  $region36: #{gemma_forward.12} parent=0 // pred_region
    _
  $region37: #{gemma_forward.12} parent=0 // pred_fallthru
    _

// kernel: gemma_forward.9
$region0: #{gemma_forward.9}
  #allocation0 [shape = 'u32[]', space=smem, size = 0x4, offset = 0x4, fixed_abs, tag = 'smem constant byte address 0x4 - core index']
  #allocation1 [shape = 'u32[144,128]{1,0:T(1,128)}', space=vmem, size = 0x12000, scoped, tag = 'internal scratch']
  %s0 = inlined_call_operand.vmem [shape: f32[16,32], index: 0, kind: input, shape index: {}]
  %s1 = inlined_call_operand.vmem [shape: f32[1,32], index: 1, kind: input, shape index: {}]
  %s2 = inlined_call_operand.vmem [shape: f32[32,64], index: 2, kind: input, shape index: {}]
  %s3 = inlined_call_operand.vmem [shape: f32[32,32], index: 3, kind: input, shape index: {}]
  %s4 = inlined_call_operand.vmem [shape: f32[32,32], index: 4, kind: input, shape index: {}]
  %s5 = inlined_call_operand.vmem [shape: f32[16,16], index: 5, kind: input, shape index: {}]
  %s6 = inlined_call_operand.vmem [shape: f32[16,16], index: 6, kind: input, shape index: {}]
  %s7 = inlined_call_operand.vmem [shape: f32[16,64], index: 7, kind: output, shape index: {0}]
  %s8 = inlined_call_operand.vmem [shape: f32[16,32], index: 8, kind: output, shape index: {1}]
  %s9 = inlined_call_operand.vmem [shape: f32[16,32], index: 9, kind: output, shape index: {2}]
  %10 = xla_tuple %s7, %s8, %s9
  %s11 = sld [smem:[#allocation0]]
  $region54: #{gemma_forward.9} parent=0
    _
  %s13 = ssub.s32 1, %s11
  %s14 = scalar_select 0, %s13, %s11
  // Predicated region
  $region2: #{gemma_forward.9} parent=0 // pred_check
    _
  $region3: #{gemma_forward.9} parent=0 // pred_check_branch
    %16 = sbr.rel (0) target = $region5
  $region4: #{gemma_forward.9} parent=0 // pred_region
    _
  $region5: #{gemma_forward.9} parent=0 // pred_fallthru
    _
  // Predicated region
  $region6: #{gemma_forward.9} parent=0 // pred_check
    _
  $region7: #{gemma_forward.9} parent=0 // pred_check_branch
    %18 = sbr.rel (0) target = $region9
  $region8: #{gemma_forward.9} parent=0 // pred_region
    _
  $region9: #{gemma_forward.9} parent=0 // pred_fallthru
    _
  // Predicated region
  $region10: #{gemma_forward.9} parent=0 // pred_check
    _
  $region11: #{gemma_forward.9} parent=0 // pred_check_branch
    %20 = sbr.rel (0) target = $region13
  $region12: #{gemma_forward.9} parent=0 // pred_region
    _
  $region13: #{gemma_forward.9} parent=0 // pred_fallthru
    _
  // Predicated region
  $region14: #{gemma_forward.9} parent=0 // pred_check
    _
  $region15: #{gemma_forward.9} parent=0 // pred_check_branch
    %22 = sbr.rel (0) target = $region17
  $region16: #{gemma_forward.9} parent=0 // pred_region
    _
  $region17: #{gemma_forward.9} parent=0 // pred_fallthru
    _
  // Predicated region
  $region18: #{gemma_forward.9} parent=0 // pred_check
    _
  $region19: #{gemma_forward.9} parent=0 // pred_check_branch
    %24 = sbr.rel (0) target = $region21
  $region20: #{gemma_forward.9} parent=0 // pred_region
    _
  $region21: #{gemma_forward.9} parent=0 // pred_fallthru
    _
  // Predicated region
  $region22: #{gemma_forward.9} parent=0 // pred_check
    _
  $region23: #{gemma_forward.9} parent=0 // pred_check_branch
    %26 = sbr.rel (0) target = $region25
  $region24: #{gemma_forward.9} parent=0 // pred_region
    _
  $region25: #{gemma_forward.9} parent=0 // pred_fallthru
    _
  // Predicated region
  $region26: #{gemma_forward.9} parent=0 // pred_check
    _
  $region27: #{gemma_forward.9} parent=0 // pred_check_branch
    %28 = sbr.rel (0) target = $region29
  $region28: #{gemma_forward.9} parent=0 // pred_region
    _
  $region29: #{gemma_forward.9} parent=0 // pred_fallthru
    _
  %v29 = vld [vmem:[%s0] sm:$0xff]
  %v30 = vld [vmem:[%s0 + $0x8] sm:$0xff]
  %v31 = vmul.f32 %v29, %v29
  %v32 = vmul.f32 %v30, %v30
  %vm33 = vcmask 261120
  %v34 = vsel %vm33, %v31, 0.0
  %35 = vadd.xlane.f32.xlu0 %v34
  %v36 = vpop.xlane.xlu0 %35
  %v37 = vsel %vm33, %v32, 0.0
  %38 = vadd.xlane.f32.xlu0 %v37
  %v39 = vpop.xlane.xlu0 %38
  %v40 = vrcp.pop 32.0
  %v41 = vmul.f32 %v36, %v40
  %v42 = vmul.f32 %v39, %v40
  %v43 = vadd.f32 %v41, 1e-06
  %v44 = vadd.f32 %v42, 1e-06
  %v45 = vrsqrt.pop %v43
  %v46 = vrsqrt.pop %v44
  %v47 = vmul.f32 %v29, %v45
  %v48 = vmul.f32 %v30, %v46
  %v49 = vld [vmem:[%s1] sm:$0x1]
  %v50 = vadd.f32 %v49, 1.0
  %v52 = vlaneseq
  %v53 = vshrl.u32 %v52, 7
  %v54 = vsub.s32 0, %v53
  %v55 = vrot.slane %v50, %v54
  %v57 = vmul.f32 %v47, %v55
  %v58 = vmul.f32 %v48, %v55
  %v59 = vld [vmem:[%s5] sm:$0xff]
  %v60 = vld [vmem:[%s5 + $0x8] sm:$0xff]
  %v61 = vld [vmem:[%s6] sm:$0xff]
  %v62 = vld [vmem:[%s6 + $0x8] sm:$0xff]
  %v63 = vld [vmem:[%s2] sm:$0xff]
  %v64 = vld [vmem:[%s2 + $0x8] sm:$0xff]
  %v65 = vld [vmem:[%s2 + $0x10] sm:$0xff]
  %v66 = vld [vmem:[%s2 + $0x18] sm:$0xff]
  %v68 = vsel %vm33, %v57, 0
  %v71 = vsel %vm33, %v58, 0
  %73 = vmatprep.subr.mxu0 0.0
  %74 = vmatpush1.msra.mxu0 %v63
  %75 = vmatprep.subr.mxu0 0.0
  %76 = vmatpush1.msra.mxu0 %v64
  %77 = vmatprep.subr.mxu0 0.0
  %78 = vmatpush1.msra.mxu0 %v65
  %79 = vmatprep.subr.mxu0 0.0
  %80 = vmatpush1.msra.mxu0 %v66
  %81 = vmatprep.subr.mxu0 0.0
  %82 = vmatpush1.msra.mxu0 0.0
  %83 = vmatprep.subr.mxu0 0.0
  %84 = vmatpush1.msra.mxu0 0.0
  %85 = vmatprep.subr.mxu0 0.0
  %86 = vmatpush1.msra.mxu0 0.0
  %87 = vmatprep.subr.mxu0 0.0
  %88 = vmatpush1.msra.mxu0 0.0
  %89 = vmatprep.subr.mxu0 0.0
  %90 = vmatpush1.msra.mxu0 0.0
  %91 = vmatprep.subr.mxu0 0.0
  %92 = vmatpush1.msra.mxu0 0.0
  %93 = vmatprep.subr.mxu0 0.0
  %94 = vmatpush1.msra.mxu0 0.0
  %95 = vmatprep.subr.mxu0 0.0
  %96 = vmatpush1.msra.mxu0 0.0
  %97 = vmatprep.subr.mxu0 0.0
  %98 = vmatpush1.msra.mxu0 0.0
  %99 = vmatprep.subr.mxu0 0.0
  %100 = vmatpush1.msra.mxu0 0.0
  %101 = vmatprep.subr.mxu0 0.0
  %102 = vmatpush1.msra.mxu0 0.0
  %103 = vmatprep.subr.mxu0 0.0
  %104 = vmatpush1.msra.mxu0 0.0
  %105 = vmatprep.subr.mxu0 0.0
  %106 = vmatpush1.msra.mxu0 0.0
  %107 = vmatprep.subr.mxu0 0.0
  %108 = vmatpush1.msra.mxu0 0.0
  %109 = vmatprep.subr.mxu0 0.0
  %110 = vmatpush1.msra.mxu0 0.0
  %111 = vmatprep.subr.mxu0 0.0
  %112 = vmatpush1.msra.mxu0 0.0
  %113 = vmatprep.subr.mxu0 0.0
  %114 = vmatpush1.msra.mxu0 0.0
  %115 = vmatprep.subr.mxu0 0.0
  %116 = vmatpush1.msra.mxu0 0.0
  %117 = vmatprep.subr.mxu0 0.0
  %118 = vmatpush1.msra.mxu0 0.0
  %119 = vmatprep.subr.mxu0 0.0
  %120 = vmatpush1.msra.mxu0 0.0
  %121 = vmatprep.subr.mxu0 0.0
  %122 = vmatpush1.msra.mxu0 0.0
  %123 = vmatprep.subr.mxu0 0.0
  %124 = vmatpush1.msra.mxu0 0.0
  %125 = vmatprep.subr.mxu0 0.0
  %126 = vmatpush1.msra.mxu0 0.0
  %127 = vmatprep.subr.mxu0 0.0
  %128 = vmatpush1.msra.mxu0 0.0
  %129 = vmatprep.subr.mxu0 0.0
  %130 = vmatpush1.msra.mxu0 0.0
  %131 = vmatprep.subr.mxu0 0.0
  %132 = vmatpush1.msra.mxu0 0.0
  %133 = vmatprep.subr.mxu0 0.0
  %134 = vmatpush1.msra.mxu0 0.0
  %135 = vmatprep.subr.mxu0 0.0
  %136 = vmatpush1.msra.mxu0 0.0
  %137 = vmatprep.mubr.f32.mxu0 0.0
  %138 = vmatmul.mubr.f32.gmra.mrb[0].mxu0 %v68
  %v139 = vpop.f32.mrb[0].mxu0
  %v140 = vadd.f32 0.0, %v139
  %v141 = vpop.f32.mrb[0].mxu0
  %142 = vmatprep.mubr.f32.mxu0 0.0
  %143 = vmatmul.mubr.f32.gmra.mrb[0].mxu0 %v71
  %v144 = vpop.f32.mrb[0].mxu0
  %v145 = vadd.f32 0.0, %v144
  %v146 = vpop.f32.mrb[0].mxu0
  %147 = vdwg.mxu0
  %v148 = vld [vmem:[%s3] sm:$0xff]
  %v149 = vld [vmem:[%s3 + $0x8] sm:$0xff]
  %v150 = vld [vmem:[%s3 + $0x10] sm:$0xff]
  %v151 = vld [vmem:[%s3 + $0x18] sm:$0xff]
  %152 = vmatprep.subr.mxu0 0.0
  %153 = vmatpush1.msra.mxu0 %v148
  %154 = vmatprep.subr.mxu0 0.0
  %155 = vmatpush1.msra.mxu0 %v149
  %156 = vmatprep.subr.mxu0 0.0
  %157 = vmatpush1.msra.mxu0 %v150
  %158 = vmatprep.subr.mxu0 0.0
  %159 = vmatpush1.msra.mxu0 %v151
  %160 = vmatprep.subr.mxu0 0.0
  %161 = vmatpush1.msra.mxu0 0.0
  %162 = vmatprep.subr.mxu0 0.0
  %163 = vmatpush1.msra.mxu0 0.0
  %164 = vmatprep.subr.mxu0 0.0
  %165 = vmatpush1.msra.mxu0 0.0
  %166 = vmatprep.subr.mxu0 0.0
  %167 = vmatpush1.msra.mxu0 0.0
  %168 = vmatprep.subr.mxu0 0.0
  %169 = vmatpush1.msra.mxu0 0.0
  %170 = vmatprep.subr.mxu0 0.0
  %171 = vmatpush1.msra.mxu0 0.0
  %172 = vmatprep.subr.mxu0 0.0
  %173 = vmatpush1.msra.mxu0 0.0
  %174 = vmatprep.subr.mxu0 0.0
  %175 = vmatpush1.msra.mxu0 0.0
  %176 = vmatprep.subr.mxu0 0.0
  %177 = vmatpush1.msra.mxu0 0.0
  %178 = vmatprep.subr.mxu0 0.0
  %179 = vmatpush1.msra.mxu0 0.0
  %180 = vmatprep.subr.mxu0 0.0
  %181 = vmatpush1.msra.mxu0 0.0
  %182 = vmatprep.subr.mxu0 0.0
  %183 = vmatpush1.msra.mxu0 0.0
  %184 = vmatprep.subr.mxu0 0.0
  %185 = vmatpush1.msra.mxu0 0.0
  %186 = vmatprep.subr.mxu0 0.0
  %187 = vmatpush1.msra.mxu0 0.0
  %188 = vmatprep.subr.mxu0 0.0
  %189 = vmatpush1.msra.mxu0 0.0
  %190 = vmatprep.subr.mxu0 0.0
  %191 = vmatpush1.msra.mxu0 0.0
  %192 = vmatprep.subr.mxu0 0.0
  %193 = vmatpush1.msra.mxu0 0.0
  %194 = vmatprep.subr.mxu0 0.0
  %195 = vmatpush1.msra.mxu0 0.0
  %196 = vmatprep.subr.mxu0 0.0
  %197 = vmatpush1.msra.mxu0 0.0
  %198 = vmatprep.subr.mxu0 0.0
  %199 = vmatpush1.msra.mxu0 0.0
  %200 = vmatprep.subr.mxu0 0.0
  %201 = vmatpush1.msra.mxu0 0.0
  %202 = vmatprep.subr.mxu0 0.0
  %203 = vmatpush1.msra.mxu0 0.0
  %204 = vmatprep.subr.mxu0 0.0
  %205 = vmatpush1.msra.mxu0 0.0
  %206 = vmatprep.subr.mxu0 0.0
  %207 = vmatpush1.msra.mxu0 0.0
  %208 = vmatprep.subr.mxu0 0.0
  %209 = vmatpush1.msra.mxu0 0.0
  %210 = vmatprep.subr.mxu0 0.0
  %211 = vmatpush1.msra.mxu0 0.0
  %212 = vmatprep.subr.mxu0 0.0
  %213 = vmatpush1.msra.mxu0 0.0
  %214 = vmatprep.subr.mxu0 0.0
  %215 = vmatpush1.msra.mxu0 0.0
  %216 = vmatprep.mubr.f32.mxu0 0.0
  %217 = vmatmul.mubr.f32.gmra.mrb[0].mxu0 %v68
  %v218 = vpop.f32.mrb[0].mxu0
  %v219 = vadd.f32 0.0, %v218
  %v220 = vpop.f32.mrb[0].mxu0
  %221 = vmatprep.mubr.f32.mxu0 0.0
  %222 = vmatmul.mubr.f32.gmra.mrb[0].mxu0 %v71
  %v223 = vpop.f32.mrb[0].mxu0
  %v224 = vadd.f32 0.0, %v223
  %v225 = vpop.f32.mrb[0].mxu0
  %226 = vdwg.mxu0
  %v227 = vld [vmem:[%s4] sm:$0xff]
  %v228 = vld [vmem:[%s4 + $0x8] sm:$0xff]
  %v229 = vld [vmem:[%s4 + $0x10] sm:$0xff]
  %v230 = vld [vmem:[%s4 + $0x18] sm:$0xff]
  %231 = vmatprep.subr.mxu0 0.0
  %232 = vmatpush1.msra.mxu0 %v227
  %233 = vmatprep.subr.mxu0 0.0
  %234 = vmatpush1.msra.mxu0 %v228
  %235 = vmatprep.subr.mxu0 0.0
  %236 = vmatpush1.msra.mxu0 %v229
  %237 = vmatprep.subr.mxu0 0.0
  %238 = vmatpush1.msra.mxu0 %v230
  %239 = vmatprep.subr.mxu0 0.0
  %240 = vmatpush1.msra.mxu0 0.0
  %241 = vmatprep.subr.mxu0 0.0
  %242 = vmatpush1.msra.mxu0 0.0
  %243 = vmatprep.subr.mxu0 0.0
  %244 = vmatpush1.msra.mxu0 0.0
  %245 = vmatprep.subr.mxu0 0.0
  %246 = vmatpush1.msra.mxu0 0.0
  %247 = vmatprep.subr.mxu0 0.0
  %248 = vmatpush1.msra.mxu0 0.0
  %249 = vmatprep.subr.mxu0 0.0
  %250 = vmatpush1.msra.mxu0 0.0
  %251 = vmatprep.subr.mxu0 0.0
  %252 = vmatpush1.msra.mxu0 0.0
  %253 = vmatprep.subr.mxu0 0.0
  %254 = vmatpush1.msra.mxu0 0.0
  %255 = vmatprep.subr.mxu0 0.0
  %256 = vmatpush1.msra.mxu0 0.0
  %257 = vmatprep.subr.mxu0 0.0
  %258 = vmatpush1.msra.mxu0 0.0
  %259 = vmatprep.subr.mxu0 0.0
  %260 = vmatpush1.msra.mxu0 0.0
  %261 = vmatprep.subr.mxu0 0.0
  %262 = vmatpush1.msra.mxu0 0.0
  %263 = vmatprep.subr.mxu0 0.0
  %264 = vmatpush1.msra.mxu0 0.0
  %265 = vmatprep.subr.mxu0 0.0
  %266 = vmatpush1.msra.mxu0 0.0
  %267 = vmatprep.subr.mxu0 0.0
  %268 = vmatpush1.msra.mxu0 0.0
  %269 = vmatprep.subr.mxu0 0.0
  %270 = vmatpush1.msra.mxu0 0.0
  %271 = vmatprep.subr.mxu0 0.0
  %272 = vmatpush1.msra.mxu0 0.0
  %273 = vmatprep.subr.mxu0 0.0
  %274 = vmatpush1.msra.mxu0 0.0
  %275 = vmatprep.subr.mxu0 0.0
  %276 = vmatpush1.msra.mxu0 0.0
  %277 = vmatprep.subr.mxu0 0.0
  %278 = vmatpush1.msra.mxu0 0.0
  %279 = vmatprep.subr.mxu0 0.0
  %280 = vmatpush1.msra.mxu0 0.0
  %281 = vmatprep.subr.mxu0 0.0
  %282 = vmatpush1.msra.mxu0 0.0
  %283 = vmatprep.subr.mxu0 0.0
  %284 = vmatpush1.msra.mxu0 0.0
  %285 = vmatprep.subr.mxu0 0.0
  %286 = vmatpush1.msra.mxu0 0.0
  %287 = vmatprep.subr.mxu0 0.0
  %288 = vmatpush1.msra.mxu0 0.0
  %289 = vmatprep.subr.mxu0 0.0
  %290 = vmatpush1.msra.mxu0 0.0
  %291 = vmatprep.subr.mxu0 0.0
  %292 = vmatpush1.msra.mxu0 0.0
  %293 = vmatprep.subr.mxu0 0.0
  %294 = vmatpush1.msra.mxu0 0.0
  %295 = vmatprep.mubr.f32.mxu0 0.0
  %296 = vmatmul.mubr.f32.gmra.mrb[0].mxu0 %v68
  %v297 = vpop.f32.mrb[0].mxu0
  %v298 = vadd.f32 0.0, %v297
  %v299 = vpop.f32.mrb[0].mxu0
  %300 = vmatprep.mubr.f32.mxu0 0.0
  %301 = vmatmul.mubr.f32.gmra.mrb[0].mxu0 %v71
  %v302 = vpop.f32.mrb[0].mxu0
  %v303 = vadd.f32 0.0, %v302
  %v304 = vpop.f32.mrb[0].mxu0
  %305 = vdwg.mxu0
  %v306 = vsub.f32 0.0, %v140
  %v307 = vsub.f32 0.0, %v145
  %310 = vrot.lane.b32.xlu0 %v306, 120
  %v311 = vpop.permute.xlu0 %310
  %312 = vrot.lane.b32.xlu0 %v307, 120
  %v313 = vpop.permute.xlu0 %312
  %318 = vrot.lane.b32.xlu0 %v140, 8
  %v319 = vpop.permute.xlu0 %318
  %320 = vrot.lane.b32.xlu0 %v145, 8
  %v321 = vpop.permute.xlu0 %320
  %vm324 = vcmask 64512
  %v325 = vsel %vm324, %v311, %v319
  %v326 = vsel %vm324, %v313, %v321
  %v327 = vmul.f32 %v140, %v59
  %v328 = vmul.f32 %v145, %v60
  %v329 = vmul.f32 %v325, %v61
  %v330 = vmul.f32 %v326, %v62
  %v331 = vadd.f32 %v327, %v329
  %v332 = vadd.f32 %v328, %v330
  %333 = vrot.lane.b32.xlu0 %v306, 104
  %v334 = vpop.permute.xlu0 %333
  %335 = vrot.lane.b32.xlu0 %v307, 104
  %v336 = vpop.permute.xlu0 %335
  %339 = vrot.lane.b32.xlu0 %v140, 120
  %v340 = vpop.permute.xlu0 %339
  %341 = vrot.lane.b32.xlu0 %v145, 120
  %v342 = vpop.permute.xlu0 %341
  %v345 = vsel %vm324, %v334, %v340
  %v346 = vsel %vm324, %v336, %v342
  %349 = vrot.lane.b32.xlu0 %v59, 16
  %v350 = vpop.permute.xlu0 %349
  %351 = vrot.lane.b32.xlu0 %v60, 16
  %v352 = vpop.permute.xlu0 %351
  %v355 = vmul.f32 %v140, %v350
  %v356 = vmul.f32 %v145, %v352
  %v357 = vmul.f32 %v345, %v61
  %v358 = vmul.f32 %v346, %v62
  %361 = vrot.lane.b32.xlu0 %v357, 16
  %v362 = vpop.permute.xlu0 %361
  %363 = vrot.lane.b32.xlu0 %v358, 16
  %v364 = vpop.permute.xlu0 %363
  %v367 = vadd.f32 %v355, %v362
  %v368 = vadd.f32 %v356, %v364
  %369 = vrot.lane.b32.xlu0 %v306, 88
  %v370 = vpop.permute.xlu0 %369
  %371 = vrot.lane.b32.xlu0 %v307, 88
  %v372 = vpop.permute.xlu0 %371
  %375 = vrot.lane.b32.xlu0 %v140, 104
  %v376 = vpop.permute.xlu0 %375
  %377 = vrot.lane.b32.xlu0 %v145, 104
  %v378 = vpop.permute.xlu0 %377
  %v381 = vsel %vm324, %v370, %v376
  %v382 = vsel %vm324, %v372, %v378
  %383 = vrot.lane.b32.xlu0 %v59, 32
  %v384 = vpop.permute.xlu0 %383
  %385 = vrot.lane.b32.xlu0 %v60, 32
  %v386 = vpop.permute.xlu0 %385
  %v389 = vmul.f32 %v140, %v384
  %v390 = vmul.f32 %v145, %v386
  %v391 = vmul.f32 %v381, %v61
  %v392 = vmul.f32 %v382, %v62
  %395 = vrot.lane.b32.xlu0 %v391, 32
  %v396 = vpop.permute.xlu0 %395
  %397 = vrot.lane.b32.xlu0 %v392, 32
  %v398 = vpop.permute.xlu0 %397
  %v401 = vadd.f32 %v389, %v396
  %v402 = vadd.f32 %v390, %v398
  %403 = vrot.lane.b32.xlu0 %v306, 72
  %v404 = vpop.permute.xlu0 %403
  %405 = vrot.lane.b32.xlu0 %v307, 72
  %v406 = vpop.permute.xlu0 %405
  %409 = vrot.lane.b32.xlu0 %v140, 88
  %v410 = vpop.permute.xlu0 %409
  %411 = vrot.lane.b32.xlu0 %v145, 88
  %v412 = vpop.permute.xlu0 %411
  %v415 = vsel %vm324, %v404, %v410
  %v416 = vsel %vm324, %v406, %v412
  %417 = vrot.lane.b32.xlu0 %v59, 48
  %v418 = vpop.permute.xlu0 %417
  %419 = vrot.lane.b32.xlu0 %v60, 48
  %v420 = vpop.permute.xlu0 %419
  %v423 = vmul.f32 %v140, %v418
  %v424 = vmul.f32 %v145, %v420
  %v425 = vmul.f32 %v415, %v61
  %v426 = vmul.f32 %v416, %v62
  %429 = vrot.lane.b32.xlu0 %v425, 48
  %v430 = vpop.permute.xlu0 %429
  %431 = vrot.lane.b32.xlu0 %v426, 48
  %v432 = vpop.permute.xlu0 %431
  %v435 = vadd.f32 %v423, %v430
  %v436 = vadd.f32 %v424, %v432
  %vm437 = vcmask 130048
  %v438 = vsel %vm437, %v331, %v367
  %v439 = vsel %vm437, %v332, %v368
  %v440 = vsel %vm33, %v438, %v401
  %v441 = vsel %vm33, %v439, %v402
  %vm442 = vcmask 392192
  %v443 = vsel %vm442, %v440, %v435
  %v444 = vsel %vm442, %v441, %v436
  %v445 = vmul.f32 %v443, 0.25
  %v446 = vmul.f32 %v444, 0.25
  %v447 = vsub.f32 0.0, %v219
  %v448 = vsub.f32 0.0, %v224
  %451 = vrot.lane.b32.xlu0 %v447, 120
  %v452 = vpop.permute.xlu0 %451
  %453 = vrot.lane.b32.xlu0 %v448, 120
  %v454 = vpop.permute.xlu0 %453
  %459 = vrot.lane.b32.xlu0 %v219, 8
  %v460 = vpop.permute.xlu0 %459
  %461 = vrot.lane.b32.xlu0 %v224, 8
  %v462 = vpop.permute.xlu0 %461
  %v465 = vsel %vm324, %v452, %v460
  %v466 = vsel %vm324, %v454, %v462
  %v467 = vmul.f32 %v219, %v59
  %v468 = vmul.f32 %v224, %v60
  %v469 = vmul.f32 %v465, %v61
  %v470 = vmul.f32 %v466, %v62
  %v471 = vadd.f32 %v467, %v469
  %v472 = vadd.f32 %v468, %v470
  %473 = vrot.lane.b32.xlu0 %v447, 104
  %v474 = vpop.permute.xlu0 %473
  %475 = vrot.lane.b32.xlu0 %v448, 104
  %v476 = vpop.permute.xlu0 %475
  %479 = vrot.lane.b32.xlu0 %v219, 120
  %v480 = vpop.permute.xlu0 %479
  %481 = vrot.lane.b32.xlu0 %v224, 120
  %v482 = vpop.permute.xlu0 %481
  %v485 = vsel %vm324, %v474, %v480
  %v486 = vsel %vm324, %v476, %v482
  %v487 = vmul.f32 %v219, %v350
  %v488 = vmul.f32 %v224, %v352
  %v489 = vmul.f32 %v485, %v61
  %v490 = vmul.f32 %v486, %v62
  %493 = vrot.lane.b32.xlu0 %v489, 16
  %v494 = vpop.permute.xlu0 %493
  %495 = vrot.lane.b32.xlu0 %v490, 16
  %v496 = vpop.permute.xlu0 %495
  %v499 = vadd.f32 %v487, %v494
  %v500 = vadd.f32 %v488, %v496
  %v501 = vsel %vm437, %v471, %v499
  %v502 = vsel %vm437, %v472, %v500
  %vm503 = vcmask 523264
  %504 = vst.msk [vmem:[%s7] sm:$0xff] %vm503, %v445
  %505 = vst.msk [vmem:[%s7 + $0x8] sm:$0xff] %vm503, %v446
  %506 = vst.msk [vmem:[%s8] sm:$0xff] %vm33, %v501
  %507 = vst.msk [vmem:[%s8 + $0x8] sm:$0xff] %vm33, %v502
  %508 = vst.msk [vmem:[%s9] sm:$0xff] %vm33, %v298
  %509 = vst.msk [vmem:[%s9 + $0x8] sm:$0xff] %vm33, %v303
  // Predicated region
  $region30: #{gemma_forward.9} parent=0 // pred_check
    _
  $region31: #{gemma_forward.9} parent=0 // pred_check_branch
    %511 = sbr.rel (0) target = $region33
  $region32: #{gemma_forward.9} parent=0 // pred_region
    _
  $region33: #{gemma_forward.9} parent=0 // pred_fallthru
    _
  // Predicated region
  $region34: #{gemma_forward.9} parent=0 // pred_check
    _
  $region35: #{gemma_forward.9} parent=0 // pred_check_branch
    %513 = sbr.rel (0) target = $region37
  $region36: #{gemma_forward.9} parent=0 // pred_region
    _
  $region37: #{gemma_forward.9} parent=0 // pred_fallthru
    _
  // Predicated region
  $region38: #{gemma_forward.9} parent=0 // pred_check
    _
  $region39: #{gemma_forward.9} parent=0 // pred_check_branch
    %515 = sbr.rel (0) target = $region41
  $region40: #{gemma_forward.9} parent=0 // pred_region
    _
  $region41: #{gemma_forward.9} parent=0 // pred_fallthru
    _
  // Predicated region
  $region42: #{gemma_forward.9} parent=0 // pred_check
    _
  $region43: #{gemma_forward.9} parent=0 // pred_check_branch
    %517 = sbr.rel (0) target = $region45
  $region44: #{gemma_forward.9} parent=0 // pred_region
    _
  $region45: #{gemma_forward.9} parent=0 // pred_fallthru
    _
  // Predicated region
  $region46: #{gemma_forward.9} parent=0 // pred_check
    _
  $region47: #{gemma_forward.9} parent=0 // pred_check_branch
    %519 = sbr.rel (0) target = $region49
  $region48: #{gemma_forward.9} parent=0 // pred_region
    _
  $region49: #{gemma_forward.9} parent=0 // pred_fallthru
    _
  // Predicated region
  $region50: #{gemma_forward.9} parent=0 // pred_check
    _
  $region51: #{gemma_forward.9} parent=0 // pred_check_branch
    %521 = sbr.rel (0) target = $region53
  $region52: #{gemma_forward.9} parent=0 // pred_region
    _
  $region53: #{gemma_forward.9} parent=0 // pred_fallthru
    _

// kernel: gemma_forward.10
$region0: #{gemma_forward.10}
  #allocation0 [shape = 'u32[]', space=smem, size = 0x4, offset = 0x4, fixed_abs, tag = 'smem constant byte address 0x4 - core index']
  #allocation1 [shape = 'u32[144,128]{1,0:T(1,128)}', space=vmem, size = 0x12000, scoped, tag = 'internal scratch']
  #allocation2 [shape = 'f32[4,8,1]{2,1,0:T(8,128)}', space=vmem, size = 0x4000, scoped, tag = 'scratch operand']
  #allocation3 [shape = 'f32[4,8,1]{2,1,0:T(8,128)}', space=vmem, size = 0x4000, scoped, tag = 'scratch operand']
  #allocation4 [shape = 'f32[4,8,16]{2,1,0:T(8,128)}', space=vmem, size = 0x4000, scoped, tag = 'scratch operand']
  %s0 = inlined_call_operand.vmem [shape: f32[2,8,64], index: 0, kind: input, shape index: {}]
  %s1 = inlined_call_operand.vmem [shape: f32[2,8,32], index: 1, kind: input, shape index: {}]
  %s2 = inlined_call_operand.vmem [shape: f32[2,8,32], index: 2, kind: input, shape index: {}]
  %s3 = inlined_call_operand.vmem [shape: f32[2,1,8,8], index: 3, kind: input, shape index: {}]
  %s4 = inlined_call_operand.vmem [shape: f32[2,8,64], index: 4, kind: output, shape index: {}]
  %s5 = sld [smem:[#allocation0]]
  $region57: #{gemma_forward.10} parent=0
    _
  %s7 = ssub.s32 1, %s5
  %s8 = scalar_select 0, %s7, %s5
  loop: start=0, step=1, limit=4
  $region2: #{gemma_forward.10} parent=0 // loop_pre_header
    _
  $region3: #{gemma_forward.10} parent=0 // loop_header
    %s10 = sphi 0, %s14
    %p11 = scmp.ge.s32.totalorder %s10, 4
    %s17 = sphi 0, %s36
    %s18 = sphi 0, %s32
    %s19 = sphi 0, %s28
    %s20 = sphi 0, %s17
    %s21 = sphi 0, %s18
    %s22 = sphi 0, %s19
    %s23 = sphi 0, %s20
    %s24 = sphi 0, %s21
    %s25 = sphi 0, %s22
    %s41 = sphi 0, %s43
    %s44 = sphi 0, %s41
    %s45 = sphi 0, %s44
    %s61 = sphi 0, %s45
    %s69 = sphi 0, %s71
    %s72 = sphi 0, %s69
    %s73 = sphi 0, %s72
    %s89 = sphi 0, %s73
    %s97 = sphi 0, %s99
    %s100 = sphi 0, %s97
    %s101 = sphi 0, %s100
    %s117 = sphi 0, %s101
    %s127 = sphi 0, %s129
    %s130 = sphi 0, %s127
    %s131 = sphi 0, %s130
    %s147 = sphi 0, %s131
    %s155 = sphi 0, %s157
    %s158 = sphi 0, %s155
    %s159 = sphi 0, %s158
    %s175 = sphi 0, %s159
  $region4: #{gemma_forward.10} parent=0 // loop_header_branch
    %13 = sbr.rel (%p11) target = $region8
  $region5: #{gemma_forward.10} parent=0 // loop_body
    %s15 = ssub.s32 %s10, 1
    %s16 = ssub.s32 %s10, 2
    %s26 = sadd.s32 1, %s19
    %p27 = scmp.ge.s32.totalorder %s26, 1
    %s28 = scalar_select %p27, 0, %s26
    %s29 = sadd.s32 1, %s18
    %s30 = scalar_select %p27, %s29, %s18
    %p31 = scmp.ge.s32.totalorder %s30, 1
    %s32 = scalar_select %p31, 0, %s30
    %s33 = sadd.s32 1, %s17
    %s34 = scalar_select %p31, %s33, %s17
    %p35 = scmp.ge.s32.totalorder %s34, 2
    %s36 = scalar_select %p35, 0, %s34
    %s37 = ssub.s32 %s17, %s36
    %s38 = ssub.s32 %s18, %s32
    %s39 = sor.u32 %s37, %s38
    %p40 = scmp.eq.s32.totalorder %s39, 0
    %s42 = sadd.s32 %s41, 1
    %s43 = scalar_select %p40, %s41, %s42
    %p46 = pneg %p40
    %p47 = scmp.eq.s32.totalorder %s10, 1
    %p48 = por %p46, %p47
    %p49 = scmp.ne.s32.totalorder %s41, %s44
    %p50 = scmp.eq.s32.totalorder %s10, 0
    %p51 = por %p49, %p50
    %p52 = scmp.ne.s32.totalorder %s41, %s44
    %p53 = scmp.eq.s32.totalorder %s15, 1
    %p54 = por %p52, %p53
    %p55 = scmp.ne.s32.totalorder %s44, %s45
    %p56 = scmp.eq.s32.totalorder %s15, 0
    %p57 = por %p55, %p56
    %p58 = scmp.ne.s32.totalorder %s44, %s45
    %p59 = scmp.eq.s32.totalorder %s16, 1
    %p60 = por %p58, %p59
    %p62 = scmp.ne.s32.totalorder %s45, %s61
    %p63 = scmp.eq.s32.totalorder %s16, 0
    %p64 = por %p62, %p63
    %s65 = ssub.s32 %s17, %s36
    %s66 = ssub.s32 %s19, %s28
    %s67 = sor.u32 %s65, %s66
    %p68 = scmp.eq.s32.totalorder %s67, 0
    %s70 = sadd.s32 %s69, 1
    %s71 = scalar_select %p68, %s69, %s70
    %p74 = pneg %p68
    %p75 = scmp.eq.s32.totalorder %s10, 1
    %p76 = por %p74, %p75
    %p77 = scmp.ne.s32.totalorder %s69, %s72
    %p78 = scmp.eq.s32.totalorder %s10, 0
    %p79 = por %p77, %p78
    %p80 = scmp.ne.s32.totalorder %s69, %s72
    %p81 = scmp.eq.s32.totalorder %s15, 1
    %p82 = por %p80, %p81
    %p83 = scmp.ne.s32.totalorder %s72, %s73
    %p84 = scmp.eq.s32.totalorder %s15, 0
    %p85 = por %p83, %p84
    %p86 = scmp.ne.s32.totalorder %s72, %s73
    %p87 = scmp.eq.s32.totalorder %s16, 1
    %p88 = por %p86, %p87
    %p90 = scmp.ne.s32.totalorder %s73, %s89
    %p91 = scmp.eq.s32.totalorder %s16, 0
    %p92 = por %p90, %p91
    %s93 = ssub.s32 %s17, %s36
    %s94 = ssub.s32 %s19, %s28
    %s95 = sor.u32 %s93, %s94
    %p96 = scmp.eq.s32.totalorder %s95, 0
    %s98 = sadd.s32 %s97, 1
    %s99 = scalar_select %p96, %s97, %s98
    %p102 = pneg %p96
    %p103 = scmp.eq.s32.totalorder %s10, 1
    %p104 = por %p102, %p103
    %p105 = scmp.ne.s32.totalorder %s97, %s100
    %p106 = scmp.eq.s32.totalorder %s10, 0
    %p107 = por %p105, %p106
    %p108 = scmp.ne.s32.totalorder %s97, %s100
    %p109 = scmp.eq.s32.totalorder %s15, 1
    %p110 = por %p108, %p109
    %p111 = scmp.ne.s32.totalorder %s100, %s101
    %p112 = scmp.eq.s32.totalorder %s15, 0
    %p113 = por %p111, %p112
    %p114 = scmp.ne.s32.totalorder %s100, %s101
    %p115 = scmp.eq.s32.totalorder %s16, 1
    %p116 = por %p114, %p115
    %p118 = scmp.ne.s32.totalorder %s101, %s117
    %p119 = scmp.eq.s32.totalorder %s16, 0
    %p120 = por %p118, %p119
    %s121 = ssub.s32 %s17, %s36
    %s122 = ssub.s32 %s18, %s32
    %s123 = sor.u32 %s121, %s122
    %s124 = ssub.s32 %s19, %s28
    %s125 = sor.u32 %s123, %s124
    %p126 = scmp.eq.s32.totalorder %s125, 0
    %s128 = sadd.s32 %s127, 1
    %s129 = scalar_select %p126, %s127, %s128
    %p132 = pneg %p126
    %p133 = scmp.eq.s32.totalorder %s10, 1
    %p134 = por %p132, %p133
    %p135 = scmp.ne.s32.totalorder %s127, %s130
    %p136 = scmp.eq.s32.totalorder %s10, 0
    %p137 = por %p135, %p136
    %p138 = scmp.ne.s32.totalorder %s127, %s130
    %p139 = scmp.eq.s32.totalorder %s15, 1
    %p140 = por %p138, %p139
    %p141 = scmp.ne.s32.totalorder %s130, %s131
    %p142 = scmp.eq.s32.totalorder %s15, 0
    %p143 = por %p141, %p142
    %p144 = scmp.ne.s32.totalorder %s130, %s131
    %p145 = scmp.eq.s32.totalorder %s16, 1
    %p146 = por %p144, %p145
    %p148 = scmp.ne.s32.totalorder %s131, %s147
    %p149 = scmp.eq.s32.totalorder %s16, 0
    %p150 = por %p148, %p149
    %s151 = ssub.s32 %s17, %s36
    %s152 = ssub.s32 %s18, %s32
    %s153 = sor.u32 %s151, %s152
    %p154 = scmp.eq.s32.totalorder %s153, 0
    %s156 = sadd.s32 %s155, 1
    %s157 = scalar_select %p154, %s155, %s156
    %p160 = pneg %p154
    %p161 = scmp.eq.s32.totalorder %s10, 1
    %p162 = por %p160, %p161
    %p163 = scmp.ne.s32.totalorder %s155, %s158
    %p164 = scmp.eq.s32.totalorder %s10, 0
    %p165 = por %p163, %p164
    %p166 = scmp.ne.s32.totalorder %s155, %s158
    %p167 = scmp.eq.s32.totalorder %s15, 1
    %p168 = por %p166, %p167
    %p169 = scmp.ne.s32.totalorder %s158, %s159
    %p170 = scmp.eq.s32.totalorder %s15, 0
    %p171 = por %p169, %p170
    %p172 = scmp.ne.s32.totalorder %s158, %s159
    %p173 = scmp.eq.s32.totalorder %s16, 1
    %p174 = por %p172, %p173
    %p176 = scmp.ne.s32.totalorder %s159, %s175
    %p177 = scmp.eq.s32.totalorder %s16, 0
    %p178 = por %p176, %p177
    %p179 = scmp.le.s32.totalorder 1, %s10
    %p180 = scmp.lt.s32.totalorder %s10, 3
    %p181 = pnand %p179, %p180
    %p182 = pneg %p181
    // Predicated region
    $region9: #{gemma_forward.10} parent=5 // pred_check
      _
    $region10: #{gemma_forward.10} parent=5 // pred_check_branch
      %184 = sbr.rel (%p181) target = $region12
    $region11: #{gemma_forward.10} parent=5 // pred_region
      %s185 = ssub.s32 %s10, 1
    $region12: #{gemma_forward.10} parent=5 // pred_fallthru
      _
    %p186 = scmp.lt.s32.totalorder %s10, 2
    // Predicated region
    $region13: #{gemma_forward.10} parent=5 // pred_check
      %p187 = pneg %p186
    $region14: #{gemma_forward.10} parent=5 // pred_check_branch
      %189 = sbr.rel (%p187) target = $region16
    $region15: #{gemma_forward.10} parent=5 // pred_region
      // Predicated region
      $region17: #{gemma_forward.10} parent=15 // pred_check
        %p190 = pneg %p51
      $region18: #{gemma_forward.10} parent=15 // pred_check_branch
        %192 = sbr.rel (%p190) target = $region20
      $region19: #{gemma_forward.10} parent=15 // pred_region
        %p193 = scmp.lt.s32.totalorder %s17, 1
        %s194 = scalar_select %p193, %s17, 1
        %p195 = scmp.lt.s32.totalorder %s18, 0
        %s196 = scalar_select %p195, %s18, 0
        %s197 = sadd.s32 %s196, %s194
        %s198 = smul.addr %s197, 8
        %s199 = scalar_lea.vmem %s0, %s198
      $region20: #{gemma_forward.10} parent=15 // pred_fallthru
        _
      // Predicated region
      $region21: #{gemma_forward.10} parent=15 // pred_check
        %p200 = pneg %p79
      $region22: #{gemma_forward.10} parent=15 // pred_check_branch
        %202 = sbr.rel (%p200) target = $region24
      $region23: #{gemma_forward.10} parent=15 // pred_region
        %p203 = scmp.lt.s32.totalorder %s17, 1
        %s204 = scalar_select %p203, %s17, 1
        %p205 = scmp.lt.s32.totalorder %s19, 0
        %s206 = scalar_select %p205, %s19, 0
        %s207 = sadd.s32 %s206, %s204
        %s208 = smul.addr %s207, 8
        %s209 = scalar_lea.vmem %s1, %s208
      $region24: #{gemma_forward.10} parent=15 // pred_fallthru
        _
      // Predicated region
      $region25: #{gemma_forward.10} parent=15 // pred_check
        %p210 = pneg %p107
      $region26: #{gemma_forward.10} parent=15 // pred_check_branch
        %212 = sbr.rel (%p210) target = $region28
      $region27: #{gemma_forward.10} parent=15 // pred_region
        %p213 = scmp.lt.s32.totalorder %s17, 1
        %s214 = scalar_select %p213, %s17, 1
        %p215 = scmp.lt.s32.totalorder %s19, 0
        %s216 = scalar_select %p215, %s19, 0
        %s217 = sadd.s32 %s216, %s214
        %s218 = smul.addr %s217, 8
        %s219 = scalar_lea.vmem %s2, %s218
      $region28: #{gemma_forward.10} parent=15 // pred_fallthru
        _
      // Predicated region
      $region29: #{gemma_forward.10} parent=15 // pred_check
        %p220 = pneg %p137
      $region30: #{gemma_forward.10} parent=15 // pred_check_branch
        %222 = sbr.rel (%p220) target = $region32
      $region31: #{gemma_forward.10} parent=15 // pred_region
        %p223 = scmp.lt.s32.totalorder %s17, 1
        %s224 = scalar_select %p223, %s17, 1
        %p225 = scmp.lt.s32.totalorder %s18, 0
        %s226 = scalar_select %p225, %s18, 0
        %p227 = scmp.lt.s32.totalorder %s19, 0
        %s228 = scalar_select %p227, %s19, 0
        %s229 = sadd.s32 %s228, %s226
        %s230 = sadd.s32 %s229, %s224
        %s231 = smul.addr %s230, 8
        %s232 = scalar_lea.vmem %s3, %s231
      $region32: #{gemma_forward.10} parent=15 // pred_fallthru
        _
    $region16: #{gemma_forward.10} parent=5 // pred_fallthru
      _
    %p233 = scmp.le.s32.totalorder 1, %s10
    %p234 = scmp.lt.s32.totalorder %s10, 3
    %p235 = pnand %p233, %p234
    %p236 = pneg %p235
    // Predicated region
    $region33: #{gemma_forward.10} parent=5 // pred_check
      _
    $region34: #{gemma_forward.10} parent=5 // pred_check_branch
      %238 = sbr.rel (%p235) target = $region36
    $region35: #{gemma_forward.10} parent=5 // pred_region
      %s239 = ssub.s32 %s10, 1
      %p240 = scmp.lt.s32.totalorder %s20, 1
      %s241 = scalar_select %p240, %s20, 1
      %p242 = scmp.lt.s32.totalorder %s21, 0
      %s243 = scalar_select %p242, %s21, 0
      %s244 = sadd.s32 %s243, %s241
      %s245 = smul.addr %s244, 8
      %s246 = scalar_lea.vmem %s0, %s245
      %p247 = pneg %p57
      %p248 = pneg %p54
      %p249 = scmp.lt.s32.totalorder %s20, 1
      %s250 = scalar_select %p249, %s20, 1
      %p251 = scmp.lt.s32.totalorder %s22, 0
      %s252 = scalar_select %p251, %s22, 0
      %s253 = sadd.s32 %s252, %s250
      %s254 = smul.addr %s253, 8
      %s255 = scalar_lea.vmem %s1, %s254
      %p256 = pneg %p85
      %p257 = pneg %p82
      %p258 = scmp.lt.s32.totalorder %s20, 1
      %s259 = scalar_select %p258, %s20, 1
      %p260 = scmp.lt.s32.totalorder %s22, 0
      %s261 = scalar_select %p260, %s22, 0
      %s262 = sadd.s32 %s261, %s259
      %s263 = smul.addr %s262, 8
      %s264 = scalar_lea.vmem %s2, %s263
      %p265 = pneg %p113
      %p266 = pneg %p110
      %p267 = scmp.lt.s32.totalorder %s20, 1
      %s268 = scalar_select %p267, %s20, 1
      %p269 = scmp.lt.s32.totalorder %s21, 0
      %s270 = scalar_select %p269, %s21, 0
      %p271 = scmp.lt.s32.totalorder %s22, 0
      %s272 = scalar_select %p271, %s22, 0
      %s273 = sadd.s32 %s272, %s270
      %s274 = sadd.s32 %s273, %s268
      %s275 = smul.addr %s274, 8
      %s276 = scalar_lea.vmem %s3, %s275
      %p277 = pneg %p143
      %p278 = pneg %p140
      %p279 = pneg %p171
      %p280 = pneg %p168
      %p281 = scmp.lt.s32.totalorder %s20, 1
      %s282 = scalar_select %p281, %s20, 1
      %p283 = scmp.lt.s32.totalorder %s21, 0
      %s284 = scalar_select %p283, %s21, 0
      %s285 = sadd.s32 %s284, %s282
      %s286 = smul.addr %s285, 8
      %s287 = scalar_lea.vmem %s4, %s286
      %p288 = scmp.lt.s32.totalorder %s20, 1
      %s289 = scalar_select %p288, %s20, 1
      %p290 = scmp.lt.s32.totalorder %s21, 0
      %s291 = scalar_select %p290, %s21, 0
      %s292 = sadd.s32 %s291, %s289
      %s293 = smul.addr %s292, 8
      %s294 = scalar_lea.vmem %s0, %s293
      %p295 = scmp.lt.s32.totalorder %s20, 1
      %s296 = scalar_select %p295, %s20, 1
      %p297 = scmp.lt.s32.totalorder %s22, 0
      %s298 = scalar_select %p297, %s22, 0
      %s299 = sadd.s32 %s298, %s296
      %s300 = smul.addr %s299, 8
      %s301 = scalar_lea.vmem %s1, %s300
      %p302 = scmp.lt.s32.totalorder %s20, 1
      %s303 = scalar_select %p302, %s20, 1
      %p304 = scmp.lt.s32.totalorder %s22, 0
      %s305 = scalar_select %p304, %s22, 0
      %s306 = sadd.s32 %s305, %s303
      %s307 = smul.addr %s306, 8
      %s308 = scalar_lea.vmem %s2, %s307
      %p309 = scmp.lt.s32.totalorder %s20, 1
      %s310 = scalar_select %p309, %s20, 1
      %p311 = scmp.lt.s32.totalorder %s21, 0
      %s312 = scalar_select %p311, %s21, 0
      %p313 = scmp.lt.s32.totalorder %s22, 0
      %s314 = scalar_select %p313, %s22, 0
      %s315 = sadd.s32 %s314, %s312
      %s316 = sadd.s32 %s315, %s310
      %s317 = smul.addr %s316, 8
      %s318 = scalar_lea.vmem %s3, %s317
      %p319 = scmp.lt.s32.totalorder %s20, 1
      %s320 = scalar_select %p319, %s20, 1
      %p321 = scmp.lt.s32.totalorder %s21, 0
      %s322 = scalar_select %p321, %s21, 0
      %s323 = sadd.s32 %s322, %s320
      %s324 = smul.addr %s323, 8
      %s325 = scalar_lea.vmem %s4, %s324
      %p326 = scmp.eq.s32.totalorder %s22, 0
      // Predicated region
      $region37: #{gemma_forward.10} parent=35 // pred_check
        %p327 = pneg %p326
      $region38: #{gemma_forward.10} parent=35 // pred_check_branch
        %329 = sbr.rel (%p327) target = $region40
      $region39: #{gemma_forward.10} parent=35 // pred_region
        %vm330 = vcmask 7168
        %331 = vst.msk [vmem:[#allocation2] sm:$0xff] %vm330, -1e+30
        %332 = vst.msk [vmem:[#allocation2 + $0x8] sm:$0xff] %vm330, -1e+30
        %333 = vst.msk [vmem:[#allocation2 + $0x10] sm:$0xff] %vm330, -1e+30
        %334 = vst.msk [vmem:[#allocation2 + $0x18] sm:$0xff] %vm330, -1e+30
        %335 = vst.msk [vmem:[#allocation3] sm:$0xff] %vm330, 0.0
        %336 = vst.msk [vmem:[#allocation3 + $0x8] sm:$0xff] %vm330, 0.0
        %337 = vst.msk [vmem:[#allocation3 + $0x10] sm:$0xff] %vm330, 0.0
        %338 = vst.msk [vmem:[#allocation3 + $0x18] sm:$0xff] %vm330, 0.0
        %vm339 = vcmask 130048
        %340 = vst.msk [vmem:[#allocation4] sm:$0xff] %vm339, 0.0
        %341 = vst.msk [vmem:[#allocation4 + $0x8] sm:$0xff] %vm339, 0.0
        %342 = vst.msk [vmem:[#allocation4 + $0x10] sm:$0xff] %vm339, 0.0
        %343 = vst.msk [vmem:[#allocation4 + $0x18] sm:$0xff] %vm339, 0.0
      $region40: #{gemma_forward.10} parent=35 // pred_fallthru
        _
      %v344 = vld [vmem:[%s318] sm:$0xff]
      %v345 = vld [vmem:[%s294] sm:$0xff]
      %v346 = vld [vmem:[%s301] sm:$0xff]
      %v347 = vld [vmem:[%s308] sm:$0xff]
      %vm348 = vcmask 130048
      %v350 = vsel %vm348, %v345, 0
      %v353 = vsel %vm348, %v346, 0
      %355 = vmatprep.subr.mxu0 0.0
      %356 = vmatpush1.xpose.msra.mxu0 %v353
      %357 = vmatprep.subr.mxu0 0.0
      %358 = vmatpush1.xpose.msra.mxu0 0.0
      %359 = vmatprep.subr.mxu0 0.0
      %360 = vmatpush1.xpose.msra.mxu0 0.0
      %361 = vmatprep.subr.mxu0 0.0
      %362 = vmatpush1.xpose.msra.mxu0 0.0
      %363 = vmatprep.subr.mxu0 0.0
      %364 = vmatpush1.xpose.msra.mxu0 0.0
      %365 = vmatprep.subr.mxu0 0.0
      %366 = vmatpush1.xpose.msra.mxu0 0.0
      %367 = vmatprep.subr.mxu0 0.0
      %368 = vmatpush1.xpose.msra.mxu0 0.0
      %369 = vmatprep.subr.mxu0 0.0
      %370 = vmatpush1.xpose.msra.mxu0 0.0
      %371 = vmatprep.subr.mxu0 0.0
      %372 = vmatpush1.xpose.msra.mxu0 0.0
      %373 = vmatprep.subr.mxu0 0.0
      %374 = vmatpush1.xpose.msra.mxu0 0.0
      %375 = vmatprep.subr.mxu0 0.0
      %376 = vmatpush1.xpose.msra.mxu0 0.0
      %377 = vmatprep.subr.mxu0 0.0
      %378 = vmatpush1.xpose.msra.mxu0 0.0
      %379 = vmatprep.subr.mxu0 0.0
      %380 = vmatpush1.xpose.msra.mxu0 0.0
      %381 = vmatprep.subr.mxu0 0.0
      %382 = vmatpush1.xpose.msra.mxu0 0.0
      %383 = vmatprep.subr.mxu0 0.0
      %384 = vmatpush1.xpose.msra.mxu0 0.0
      %385 = vmatprep.subr.mxu0 0.0
      %386 = vmatpush1.xpose.msra.mxu0 0.0
      %387 = vmatprep.subr.mxu0 0.0
      %388 = vmatpush1.xpose.msra.mxu0 0.0
      %389 = vmatprep.subr.mxu0 0.0
      %390 = vmatpush1.xpose.msra.mxu0 0.0
      %391 = vmatprep.subr.mxu0 0.0
      %392 = vmatpush1.xpose.msra.mxu0 0.0
      %393 = vmatprep.subr.mxu0 0.0
      %394 = vmatpush1.xpose.msra.mxu0 0.0
      %395 = vmatprep.subr.mxu0 0.0
      %396 = vmatpush1.xpose.msra.mxu0 0.0
      %397 = vmatprep.subr.mxu0 0.0
      %398 = vmatpush1.xpose.msra.mxu0 0.0
      %399 = vmatprep.subr.mxu0 0.0
      %400 = vmatpush1.xpose.msra.mxu0 0.0
      %401 = vmatprep.subr.mxu0 0.0
      %402 = vmatpush1.xpose.msra.mxu0 0.0
      %403 = vmatprep.subr.mxu0 0.0
      %404 = vmatpush1.xpose.msra.mxu0 0.0
      %405 = vmatprep.subr.mxu0 0.0
      %406 = vmatpush1.xpose.msra.mxu0 0.0
      %407 = vmatprep.subr.mxu0 0.0
      %408 = vmatpush1.xpose.msra.mxu0 0.0
      %409 = vmatprep.subr.mxu0 0.0
      %410 = vmatpush1.xpose.msra.mxu0 0.0
      %411 = vmatprep.subr.mxu0 0.0
      %412 = vmatpush1.xpose.msra.mxu0 0.0
      %413 = vmatprep.subr.mxu0 0.0
      %414 = vmatpush1.xpose.msra.mxu0 0.0
      %415 = vmatprep.subr.mxu0 0.0
      %416 = vmatpush1.xpose.msra.mxu0 0.0
      %417 = vmatprep.subr.mxu0 0.0
      %418 = vmatpush1.xpose.msra.mxu0 0.0
      %419 = vmatprep.mubr.f32.mxu0 0.0
      %420 = vmatmul.mubr.f32.gmra.mrb[0].mxu0 %v350
      %v421 = vpop.f32.mrb[0].mxu0
      %v422 = vadd.f32 %v344, %v421
      %v423 = vpop.f32.mrb[0].mxu0
      %424 = vdwg.mxu0
      %v425 = vld [vmem:[#allocation2] sm:$0xff]
      %vm426 = vcmask 64512
      %v427 = vsel %vm426, %v422, -inf
      %428 = vmax.xlane.f32.xlu0 %v427
      %v429 = vpop.xlane.xlu0 %428
      %v430 = vmax.f32 %v425, %v429
      %v431 = vsub.f32 %v425, %v430
      %v432 = vmul.f32 %v431, 1.442695
      %v433 = vpow.pop %v432
      %435 = vset.pattern.permute.xlu0 0
      %436 = vperm.xlu0 %435, %v430
      %v437 = vpop.permute.xlu0 %436
      %v439 = vsub.f32 %v422, %v437
      %v440 = vmul.f32 %v439, 1.442695
      %v441 = vpow.pop %v440
      %v442 = vld [vmem:[#allocation3] sm:$0xff]
      %v443 = vmul.f32 %v433, %v442
      %v444 = vsel %vm426, %v441, 0.0
      %445 = vadd.xlane.f32.xlu0 %v444
      %v446 = vpop.xlane.xlu0 %445
      %v447 = vadd.f32 %v443, %v446
      %vm448 = vcmask 7168
      %449 = vst.msk [vmem:[#allocation3] sm:$0xff] %vm448, %v447
      %v450 = vld [vmem:[#allocation4] sm:$0xff]
      %452 = vset.pattern.permute.xlu0 0
      %453 = vperm.xlu0 %452, %v433
      %v454 = vpop.permute.xlu0 %453
      %v456 = vmul.f32 %v454, %v450
      %v458 = vsel %vm426, %v441, 0
      %460 = vmatprep.subr.mxu0 0.0
      %461 = vmatpush1.msra.mxu0 %v347
      %462 = vmatprep.subr.mxu0 0.0
      %463 = vmatpush1.msra.mxu0 0.0
      %464 = vmatprep.subr.mxu0 0.0
      %465 = vmatpush1.msra.mxu0 0.0
      %466 = vmatprep.subr.mxu0 0.0
      %467 = vmatpush1.msra.mxu0 0.0
      %468 = vmatprep.subr.mxu0 0.0
      %469 = vmatpush1.msra.mxu0 0.0
      %470 = vmatprep.subr.mxu0 0.0
      %471 = vmatpush1.msra.mxu0 0.0
      %472 = vmatprep.subr.mxu0 0.0
      %473 = vmatpush1.msra.mxu0 0.0
      %474 = vmatprep.subr.mxu0 0.0
      %475 = vmatpush1.msra.mxu0 0.0
      %476 = vmatprep.subr.mxu0 0.0
      %477 = vmatpush1.msra.mxu0 0.0
      %478 = vmatprep.subr.mxu0 0.0
      %479 = vmatpush1.msra.mxu0 0.0
      %480 = vmatprep.subr.mxu0 0.0
      %481 = vmatpush1.msra.mxu0 0.0
      %482 = vmatprep.subr.mxu0 0.0
      %483 = vmatpush1.msra.mxu0 0.0
      %484 = vmatprep.subr.mxu0 0.0
      %485 = vmatpush1.msra.mxu0 0.0
      %486 = vmatprep.subr.mxu0 0.0
      %487 = vmatpush1.msra.mxu0 0.0
      %488 = vmatprep.subr.mxu0 0.0
      %489 = vmatpush1.msra.mxu0 0.0
      %490 = vmatprep.subr.mxu0 0.0
      %491 = vmatpush1.msra.mxu0 0.0
      %492 = vmatprep.subr.mxu0 0.0
      %493 = vmatpush1.msra.mxu0 0.0
      %494 = vmatprep.subr.mxu0 0.0
      %495 = vmatpush1.msra.mxu0 0.0
      %496 = vmatprep.subr.mxu0 0.0
      %497 = vmatpush1.msra.mxu0 0.0
      %498 = vmatprep.subr.mxu0 0.0
      %499 = vmatpush1.msra.mxu0 0.0
      %500 = vmatprep.subr.mxu0 0.0
      %501 = vmatpush1.msra.mxu0 0.0
      %502 = vmatprep.subr.mxu0 0.0
      %503 = vmatpush1.msra.mxu0 0.0
      %504 = vmatprep.subr.mxu0 0.0
      %505 = vmatpush1.msra.mxu0 0.0
      %506 = vmatprep.subr.mxu0 0.0
      %507 = vmatpush1.msra.mxu0 0.0
      %508 = vmatprep.subr.mxu0 0.0
      %509 = vmatpush1.msra.mxu0 0.0
      %510 = vmatprep.subr.mxu0 0.0
      %511 = vmatpush1.msra.mxu0 0.0
      %512 = vmatprep.subr.mxu0 0.0
      %513 = vmatpush1.msra.mxu0 0.0
      %514 = vmatprep.subr.mxu0 0.0
      %515 = vmatpush1.msra.mxu0 0.0
      %516 = vmatprep.subr.mxu0 0.0
      %517 = vmatpush1.msra.mxu0 0.0
      %518 = vmatprep.subr.mxu0 0.0
      %519 = vmatpush1.msra.mxu0 0.0
      %520 = vmatprep.subr.mxu0 0.0
      %521 = vmatpush1.msra.mxu0 0.0
      %522 = vmatprep.subr.mxu0 0.0
      %523 = vmatpush1.msra.mxu0 0.0
      %524 = vmatprep.mubr.f32.mxu0 0.0
      %525 = vmatmul.mubr.f32.gmra.mrb[0].mxu0 %v458
      %v526 = vpop.f32.mrb[0].mxu0
      %v527 = vadd.f32 0.0, %v526
      %v528 = vpop.f32.mrb[0].mxu0
      %529 = vdwg.mxu0
      %v530 = vadd.f32 %v456, %v527
      %531 = vst.msk [vmem:[#allocation4] sm:$0xff] %vm348, %v530
      %532 = vst.msk [vmem:[#allocation2] sm:$0xff] %vm448, %v430
      %v533 = vld [vmem:[%s294] sm:$0xff]
      %v534 = vld [vmem:[%s301] sm:$0xff]
      %v535 = vld [vmem:[%s308] sm:$0xff]
      %537 = vrot.lane.b32.xlu0 %v533, 112
      %v538 = vpop.permute.xlu0 %537
      %v539 = vsel %vm348, %v538, 0
      %v542 = vsel %vm348, %v534, 0
      %544 = vmatprep.subr.mxu0 0.0
      %545 = vmatpush1.xpose.msra.mxu0 %v542
      %546 = vmatprep.subr.mxu0 0.0
      %547 = vmatpush1.xpose.msra.mxu0 0.0
      %548 = vmatprep.subr.mxu0 0.0
      %549 = vmatpush1.xpose.msra.mxu0 0.0
      %550 = vmatprep.subr.mxu0 0.0
      %551 = vmatpush1.xpose.msra.mxu0 0.0
      %552 = vmatprep.subr.mxu0 0.0
      %553 = vmatpush1.xpose.msra.mxu0 0.0
      %554 = vmatprep.subr.mxu0 0.0
      %555 = vmatpush1.xpose.msra.mxu0 0.0
      %556 = vmatprep.subr.mxu0 0.0
      %557 = vmatpush1.xpose.msra.mxu0 0.0
      %558 = vmatprep.subr.mxu0 0.0
      %559 = vmatpush1.xpose.msra.mxu0 0.0
      %560 = vmatprep.subr.mxu0 0.0
      %561 = vmatpush1.xpose.msra.mxu0 0.0
      %562 = vmatprep.subr.mxu0 0.0
      %563 = vmatpush1.xpose.msra.mxu0 0.0
      %564 = vmatprep.subr.mxu0 0.0
      %565 = vmatpush1.xpose.msra.mxu0 0.0
      %566 = vmatprep.subr.mxu0 0.0
      %567 = vmatpush1.xpose.msra.mxu0 0.0
      %568 = vmatprep.subr.mxu0 0.0
      %569 = vmatpush1.xpose.msra.mxu0 0.0
      %570 = vmatprep.subr.mxu0 0.0
      %571 = vmatpush1.xpose.msra.mxu0 0.0
      %572 = vmatprep.subr.mxu0 0.0
      %573 = vmatpush1.xpose.msra.mxu0 0.0
      %574 = vmatprep.subr.mxu0 0.0
      %575 = vmatpush1.xpose.msra.mxu0 0.0
      %576 = vmatprep.subr.mxu0 0.0
      %577 = vmatpush1.xpose.msra.mxu0 0.0
      %578 = vmatprep.subr.mxu0 0.0
      %579 = vmatpush1.xpose.msra.mxu0 0.0
      %580 = vmatprep.subr.mxu0 0.0
      %581 = vmatpush1.xpose.msra.mxu0 0.0
      %582 = vmatprep.subr.mxu0 0.0
      %583 = vmatpush1.xpose.msra.mxu0 0.0
      %584 = vmatprep.subr.mxu0 0.0
      %585 = vmatpush1.xpose.msra.mxu0 0.0
      %586 = vmatprep.subr.mxu0 0.0
      %587 = vmatpush1.xpose.msra.mxu0 0.0
      %588 = vmatprep.subr.mxu0 0.0
      %589 = vmatpush1.xpose.msra.mxu0 0.0
      %590 = vmatprep.subr.mxu0 0.0
      %591 = vmatpush1.xpose.msra.mxu0 0.0
      %592 = vmatprep.subr.mxu0 0.0
      %593 = vmatpush1.xpose.msra.mxu0 0.0
      %594 = vmatprep.subr.mxu0 0.0
      %595 = vmatpush1.xpose.msra.mxu0 0.0
      %596 = vmatprep.subr.mxu0 0.0
      %597 = vmatpush1.xpose.msra.mxu0 0.0
      %598 = vmatprep.subr.mxu0 0.0
      %599 = vmatpush1.xpose.msra.mxu0 0.0
      %600 = vmatprep.subr.mxu0 0.0
      %601 = vmatpush1.xpose.msra.mxu0 0.0
      %602 = vmatprep.subr.mxu0 0.0
      %603 = vmatpush1.xpose.msra.mxu0 0.0
      %604 = vmatprep.subr.mxu0 0.0
      %605 = vmatpush1.xpose.msra.mxu0 0.0
      %606 = vmatprep.subr.mxu0 0.0
      %607 = vmatpush1.xpose.msra.mxu0 0.0
      %608 = vmatprep.mubr.f32.mxu0 0.0
      %609 = vmatmul.mubr.f32.gmra.mrb[0].mxu0 %v539
      %v610 = vpop.f32.mrb[0].mxu0
      %v611 = vadd.f32 %v344, %v610
      %v612 = vpop.f32.mrb[0].mxu0
      %613 = vdwg.mxu0
      %s614 = scalar_lea.vmem [#allocation2], 8
      %v615 = vld [vmem:[%s614] sm:$0xff]
      %v616 = vsel %vm426, %v611, -inf
      %617 = vmax.xlane.f32.xlu0 %v616
      %v618 = vpop.xlane.xlu0 %617
      %v619 = vmax.f32 %v615, %v618
      %v620 = vsub.f32 %v615, %v619
      %v621 = vmul.f32 %v620, 1.442695
      %v622 = vpow.pop %v621
      %624 = vset.pattern.permute.xlu0 0
      %625 = vperm.xlu0 %624, %v619
      %v626 = vpop.permute.xlu0 %625
      %v628 = vsub.f32 %v611, %v626
      %v629 = vmul.f32 %v628, 1.442695
      %v630 = vpow.pop %v629
      %s631 = scalar_lea.vmem [#allocation3], 8
      %v632 = vld [vmem:[%s631] sm:$0xff]
      %v633 = vmul.f32 %v622, %v632
      %v634 = vsel %vm426, %v630, 0.0
      %635 = vadd.xlane.f32.xlu0 %v634
      %v636 = vpop.xlane.xlu0 %635
      %v637 = vadd.f32 %v633, %v636
      %638 = vst.msk [vmem:[%s631] sm:$0xff] %vm448, %v637
      %s639 = scalar_lea.vmem [#allocation4], 8
      %v640 = vld [vmem:[%s639] sm:$0xff]
      %642 = vset.pattern.permute.xlu0 0
      %643 = vperm.xlu0 %642, %v622
      %v644 = vpop.permute.xlu0 %643
      %v646 = vmul.f32 %v644, %v640
      %v648 = vsel %vm426, %v630, 0
      %650 = vmatprep.subr.mxu0 0.0
      %651 = vmatpush1.msra.mxu0 %v535
      %652 = vmatprep.subr.mxu0 0.0
      %653 = vmatpush1.msra.mxu0 0.0
      %654 = vmatprep.subr.mxu0 0.0
      %655 = vmatpush1.msra.mxu0 0.0
      %656 = vmatprep.subr.mxu0 0.0
      %657 = vmatpush1.msra.mxu0 0.0
      %658 = vmatprep.subr.mxu0 0.0
      %659 = vmatpush1.msra.mxu0 0.0
      %660 = vmatprep.subr.mxu0 0.0
      %661 = vmatpush1.msra.mxu0 0.0
      %662 = vmatprep.subr.mxu0 0.0
      %663 = vmatpush1.msra.mxu0 0.0
      %664 = vmatprep.subr.mxu0 0.0
      %665 = vmatpush1.msra.mxu0 0.0
      %666 = vmatprep.subr.mxu0 0.0
      %667 = vmatpush1.msra.mxu0 0.0
      %668 = vmatprep.subr.mxu0 0.0
      %669 = vmatpush1.msra.mxu0 0.0
      %670 = vmatprep.subr.mxu0 0.0
      %671 = vmatpush1.msra.mxu0 0.0
      %672 = vmatprep.subr.mxu0 0.0
      %673 = vmatpush1.msra.mxu0 0.0
      %674 = vmatprep.subr.mxu0 0.0
      %675 = vmatpush1.msra.mxu0 0.0
      %676 = vmatprep.subr.mxu0 0.0
      %677 = vmatpush1.msra.mxu0 0.0
      %678 = vmatprep.subr.mxu0 0.0
      %679 = vmatpush1.msra.mxu0 0.0
      %680 = vmatprep.subr.mxu0 0.0
      %681 = vmatpush1.msra.mxu0 0.0
      %682 = vmatprep.subr.mxu0 0.0
      %683 = vmatpush1.msra.mxu0 0.0
      %684 = vmatprep.subr.mxu0 0.0
      %685 = vmatpush1.msra.mxu0 0.0
      %686 = vmatprep.subr.mxu0 0.0
      %687 = vmatpush1.msra.mxu0 0.0
      %688 = vmatprep.subr.mxu0 0.0
      %689 = vmatpush1.msra.mxu0 0.0
      %690 = vmatprep.subr.mxu0 0.0
      %691 = vmatpush1.msra.mxu0 0.0
      %692 = vmatprep.subr.mxu0 0.0
      %693 = vmatpush1.msra.mxu0 0.0
      %694 = vmatprep.subr.mxu0 0.0
      %695 = vmatpush1.msra.mxu0 0.0
      %696 = vmatprep.subr.mxu0 0.0
      %697 = vmatpush1.msra.mxu0 0.0
      %698 = vmatprep.subr.mxu0 0.0
      %699 = vmatpush1.msra.mxu0 0.0
      %700 = vmatprep.subr.mxu0 0.0
      %701 = vmatpush1.msra.mxu0 0.0
      %702 = vmatprep.subr.mxu0 0.0
      %703 = vmatpush1.msra.mxu0 0.0
      %704 = vmatprep.subr.mxu0 0.0
      %705 = vmatpush1.msra.mxu0 0.0
      %706 = vmatprep.subr.mxu0 0.0
      %707 = vmatpush1.msra.mxu0 0.0
      %708 = vmatprep.subr.mxu0 0.0
      %709 = vmatpush1.msra.mxu0 0.0
      %710 = vmatprep.subr.mxu0 0.0
      %711 = vmatpush1.msra.mxu0 0.0
      %712 = vmatprep.subr.mxu0 0.0
      %713 = vmatpush1.msra.mxu0 0.0
      %714 = vmatprep.mubr.f32.mxu0 0.0
      %715 = vmatmul.mubr.f32.gmra.mrb[0].mxu0 %v648
      %v716 = vpop.f32.mrb[0].mxu0
      %v717 = vadd.f32 0.0, %v716
      %v718 = vpop.f32.mrb[0].mxu0
      %719 = vdwg.mxu0
      %v720 = vadd.f32 %v646, %v717
      %721 = vst.msk [vmem:[%s639] sm:$0xff] %vm348, %v720
      %722 = vst.msk [vmem:[%s614] sm:$0xff] %vm448, %v619
      %v723 = vld [vmem:[%s294] sm:$0xff]
      %v724 = vld [vmem:[%s301] sm:$0xff]
      %v725 = vld [vmem:[%s308] sm:$0xff]
      %727 = vrot.lane.b32.xlu0 %v723, 96
      %v728 = vpop.permute.xlu0 %727
      %730 = vrot.lane.b32.xlu0 %v724, 112
      %v731 = vpop.permute.xlu0 %730
      %v732 = vsel %vm348, %v728, 0
      %v734 = vsel %vm348, %v731, 0
      %736 = vmatprep.subr.mxu0 0.0
      %737 = vmatpush1.xpose.msra.mxu0 %v734
      %738 = vmatprep.subr.mxu0 0.0
      %739 = vmatpush1.xpose.msra.mxu0 0.0
      %740 = vmatprep.subr.mxu0 0.0
      %741 = vmatpush1.xpose.msra.mxu0 0.0
      %742 = vmatprep.subr.mxu0 0.0
      %743 = vmatpush1.xpose.msra.mxu0 0.0
      %744 = vmatprep.subr.mxu0 0.0
      %745 = vmatpush1.xpose.msra.mxu0 0.0
      %746 = vmatprep.subr.mxu0 0.0
      %747 = vmatpush1.xpose.msra.mxu0 0.0
      %748 = vmatprep.subr.mxu0 0.0
      %749 = vmatpush1.xpose.msra.mxu0 0.0
      %750 = vmatprep.subr.mxu0 0.0
      %751 = vmatpush1.xpose.msra.mxu0 0.0
      %752 = vmatprep.subr.mxu0 0.0
      %753 = vmatpush1.xpose.msra.mxu0 0.0
      %754 = vmatprep.subr.mxu0 0.0
      %755 = vmatpush1.xpose.msra.mxu0 0.0
      %756 = vmatprep.subr.mxu0 0.0
      %757 = vmatpush1.xpose.msra.mxu0 0.0
      %758 = vmatprep.subr.mxu0 0.0
      %759 = vmatpush1.xpose.msra.mxu0 0.0
      %760 = vmatprep.subr.mxu0 0.0
      %761 = vmatpush1.xpose.msra.mxu0 0.0
      %762 = vmatprep.subr.mxu0 0.0
      %763 = vmatpush1.xpose.msra.mxu0 0.0
      %764 = vmatprep.subr.mxu0 0.0
      %765 = vmatpush1.xpose.msra.mxu0 0.0
      %766 = vmatprep.subr.mxu0 0.0
      %767 = vmatpush1.xpose.msra.mxu0 0.0
      %768 = vmatprep.subr.mxu0 0.0
      %769 = vmatpush1.xpose.msra.mxu0 0.0
      %770 = vmatprep.subr.mxu0 0.0
      %771 = vmatpush1.xpose.msra.mxu0 0.0
      %772 = vmatprep.subr.mxu0 0.0
      %773 = vmatpush1.xpose.msra.mxu0 0.0
      %774 = vmatprep.subr.mxu0 0.0
      %775 = vmatpush1.xpose.msra.mxu0 0.0
      %776 = vmatprep.subr.mxu0 0.0
      %777 = vmatpush1.xpose.msra.mxu0 0.0
      %778 = vmatprep.subr.mxu0 0.0
      %779 = vmatpush1.xpose.msra.mxu0 0.0
      %780 = vmatprep.subr.mxu0 0.0
      %781 = vmatpush1.xpose.msra.mxu0 0.0
      %782 = vmatprep.subr.mxu0 0.0
      %783 = vmatpush1.xpose.msra.mxu0 0.0
      %784 = vmatprep.subr.mxu0 0.0
      %785 = vmatpush1.xpose.msra.mxu0 0.0
      %786 = vmatprep.subr.mxu0 0.0
      %787 = vmatpush1.xpose.msra.mxu0 0.0
      %788 = vmatprep.subr.mxu0 0.0
      %789 = vmatpush1.xpose.msra.mxu0 0.0
      %790 = vmatprep.subr.mxu0 0.0
      %791 = vmatpush1.xpose.msra.mxu0 0.0
      %792 = vmatprep.subr.mxu0 0.0
      %793 = vmatpush1.xpose.msra.mxu0 0.0
      %794 = vmatprep.subr.mxu0 0.0
      %795 = vmatpush1.xpose.msra.mxu0 0.0
      %796 = vmatprep.subr.mxu0 0.0
      %797 = vmatpush1.xpose.msra.mxu0 0.0
      %798 = vmatprep.subr.mxu0 0.0
      %799 = vmatpush1.xpose.msra.mxu0 0.0
      %800 = vmatprep.mubr.f32.mxu0 0.0
      %801 = vmatmul.mubr.f32.gmra.mrb[0].mxu0 %v732
      %v802 = vpop.f32.mrb[0].mxu0
      %v803 = vadd.f32 %v344, %v802
      %v804 = vpop.f32.mrb[0].mxu0
      %805 = vdwg.mxu0
      %s806 = scalar_lea.vmem [#allocation2], 16
      %v807 = vld [vmem:[%s806] sm:$0xff]
      %v808 = vsel %vm426, %v803, -inf
      %809 = vmax.xlane.f32.xlu0 %v808
      %v810 = vpop.xlane.xlu0 %809
      %v811 = vmax.f32 %v807, %v810
      %v812 = vsub.f32 %v807, %v811
      %v813 = vmul.f32 %v812, 1.442695
      %v814 = vpow.pop %v813
      %816 = vset.pattern.permute.xlu0 0
      %817 = vperm.xlu0 %816, %v811
      %v818 = vpop.permute.xlu0 %817
      %v820 = vsub.f32 %v803, %v818
      %v821 = vmul.f32 %v820, 1.442695
      %v822 = vpow.pop %v821
      %s823 = scalar_lea.vmem [#allocation3], 16
      %v824 = vld [vmem:[%s823] sm:$0xff]
      %v825 = vmul.f32 %v814, %v824
      %v826 = vsel %vm426, %v822, 0.0
      %827 = vadd.xlane.f32.xlu0 %v826
      %v828 = vpop.xlane.xlu0 %827
      %v829 = vadd.f32 %v825, %v828
      %830 = vst.msk [vmem:[%s823] sm:$0xff] %vm448, %v829
      %s831 = scalar_lea.vmem [#allocation4], 16
      %v832 = vld [vmem:[%s831] sm:$0xff]
      %834 = vset.pattern.permute.xlu0 0
      %835 = vperm.xlu0 %834, %v814
      %v836 = vpop.permute.xlu0 %835
      %v838 = vmul.f32 %v836, %v832
      %840 = vrot.lane.b32.xlu0 %v725, 112
      %v841 = vpop.permute.xlu0 %840
      %v844 = vsel %vm426, %v822, 0
      %846 = vmatprep.subr.mxu0 0.0
      %847 = vmatpush1.msra.mxu0 %v841
      %848 = vmatprep.subr.mxu0 0.0
      %849 = vmatpush1.msra.mxu0 0.0
      %850 = vmatprep.subr.mxu0 0.0
      %851 = vmatpush1.msra.mxu0 0.0
      %852 = vmatprep.subr.mxu0 0.0
      %853 = vmatpush1.msra.mxu0 0.0
      %854 = vmatprep.subr.mxu0 0.0
      %855 = vmatpush1.msra.mxu0 0.0
      %856 = vmatprep.subr.mxu0 0.0
      %857 = vmatpush1.msra.mxu0 0.0
      %858 = vmatprep.subr.mxu0 0.0
      %859 = vmatpush1.msra.mxu0 0.0
      %860 = vmatprep.subr.mxu0 0.0
      %861 = vmatpush1.msra.mxu0 0.0
      %862 = vmatprep.subr.mxu0 0.0
      %863 = vmatpush1.msra.mxu0 0.0
      %864 = vmatprep.subr.mxu0 0.0
      %865 = vmatpush1.msra.mxu0 0.0
      %866 = vmatprep.subr.mxu0 0.0
      %867 = vmatpush1.msra.mxu0 0.0
      %868 = vmatprep.subr.mxu0 0.0
      %869 = vmatpush1.msra.mxu0 0.0
      %870 = vmatprep.subr.mxu0 0.0
      %871 = vmatpush1.msra.mxu0 0.0
      %872 = vmatprep.subr.mxu0 0.0
      %873 = vmatpush1.msra.mxu0 0.0
      %874 = vmatprep.subr.mxu0 0.0
      %875 = vmatpush1.msra.mxu0 0.0
      %876 = vmatprep.subr.mxu0 0.0
      %877 = vmatpush1.msra.mxu0 0.0
      %878 = vmatprep.subr.mxu0 0.0
      %879 = vmatpush1.msra.mxu0 0.0
      %880 = vmatprep.subr.mxu0 0.0
      %881 = vmatpush1.msra.mxu0 0.0
      %882 = vmatprep.subr.mxu0 0.0
      %883 = vmatpush1.msra.mxu0 0.0
      %884 = vmatprep.subr.mxu0 0.0
      %885 = vmatpush1.msra.mxu0 0.0
      %886 = vmatprep.subr.mxu0 0.0
      %887 = vmatpush1.msra.mxu0 0.0
      %888 = vmatprep.subr.mxu0 0.0
      %889 = vmatpush1.msra.mxu0 0.0
      %890 = vmatprep.subr.mxu0 0.0
      %891 = vmatpush1.msra.mxu0 0.0
      %892 = vmatprep.subr.mxu0 0.0
      %893 = vmatpush1.msra.mxu0 0.0
      %894 = vmatprep.subr.mxu0 0.0
      %895 = vmatpush1.msra.mxu0 0.0
      %896 = vmatprep.subr.mxu0 0.0
      %897 = vmatpush1.msra.mxu0 0.0
      %898 = vmatprep.subr.mxu0 0.0
      %899 = vmatpush1.msra.mxu0 0.0
      %900 = vmatprep.subr.mxu0 0.0
      %901 = vmatpush1.msra.mxu0 0.0
      %902 = vmatprep.subr.mxu0 0.0
      %903 = vmatpush1.msra.mxu0 0.0
      %904 = vmatprep.subr.mxu0 0.0
      %905 = vmatpush1.msra.mxu0 0.0
      %906 = vmatprep.subr.mxu0 0.0
      %907 = vmatpush1.msra.mxu0 0.0
      %908 = vmatprep.subr.mxu0 0.0
      %909 = vmatpush1.msra.mxu0 0.0
      %910 = vmatprep.mubr.f32.mxu0 0.0
      %911 = vmatmul.mubr.f32.gmra.mrb[0].mxu0 %v844
      %v912 = vpop.f32.mrb[0].mxu0
      %v913 = vadd.f32 0.0, %v912
      %v914 = vpop.f32.mrb[0].mxu0
      %915 = vdwg.mxu0
      %v916 = vadd.f32 %v838, %v913
      %917 = vst.msk [vmem:[%s831] sm:$0xff] %vm348, %v916
      %918 = vst.msk [vmem:[%s806] sm:$0xff] %vm448, %v811
      %v919 = vld [vmem:[%s294] sm:$0xff]
      %v920 = vld [vmem:[%s301] sm:$0xff]
      %v921 = vld [vmem:[%s308] sm:$0xff]
      %923 = vrot.lane.b32.xlu0 %v919, 80
      %v924 = vpop.permute.xlu0 %923
      %926 = vrot.lane.b32.xlu0 %v920, 112
      %v927 = vpop.permute.xlu0 %926
      %v928 = vsel %vm348, %v924, 0
      %v930 = vsel %vm348, %v927, 0
      %932 = vmatprep.subr.mxu0 0.0
      %933 = vmatpush1.xpose.msra.mxu0 %v930
      %934 = vmatprep.subr.mxu0 0.0
      %935 = vmatpush1.xpose.msra.mxu0 0.0
      %936 = vmatprep.subr.mxu0 0.0
      %937 = vmatpush1.xpose.msra.mxu0 0.0
      %938 = vmatprep.subr.mxu0 0.0
      %939 = vmatpush1.xpose.msra.mxu0 0.0
      %940 = vmatprep.subr.mxu0 0.0
      %941 = vmatpush1.xpose.msra.mxu0 0.0
      %942 = vmatprep.subr.mxu0 0.0
      %943 = vmatpush1.xpose.msra.mxu0 0.0
      %944 = vmatprep.subr.mxu0 0.0
      %945 = vmatpush1.xpose.msra.mxu0 0.0
      %946 = vmatprep.subr.mxu0 0.0
      %947 = vmatpush1.xpose.msra.mxu0 0.0
      %948 = vmatprep.subr.mxu0 0.0
      %949 = vmatpush1.xpose.msra.mxu0 0.0
      %950 = vmatprep.subr.mxu0 0.0
      %951 = vmatpush1.xpose.msra.mxu0 0.0
      %952 = vmatprep.subr.mxu0 0.0
      %953 = vmatpush1.xpose.msra.mxu0 0.0
      %954 = vmatprep.subr.mxu0 0.0
      %955 = vmatpush1.xpose.msra.mxu0 0.0
      %956 = vmatprep.subr.mxu0 0.0
      %957 = vmatpush1.xpose.msra.mxu0 0.0
      %958 = vmatprep.subr.mxu0 0.0
      %959 = vmatpush1.xpose.msra.mxu0 0.0
      %960 = vmatprep.subr.mxu0 0.0
      %961 = vmatpush1.xpose.msra.mxu0 0.0
      %962 = vmatprep.subr.mxu0 0.0
      %963 = vmatpush1.xpose.msra.mxu0 0.0
      %964 = vmatprep.subr.mxu0 0.0
      %965 = vmatpush1.xpose.msra.mxu0 0.0
      %966 = vmatprep.subr.mxu0 0.0
      %967 = vmatpush1.xpose.msra.mxu0 0.0
      %968 = vmatprep.subr.mxu0 0.0
      %969 = vmatpush1.xpose.msra.mxu0 0.0
      %970 = vmatprep.subr.mxu0 0.0
      %971 = vmatpush1.xpose.msra.mxu0 0.0
      %972 = vmatprep.subr.mxu0 0.0
      %973 = vmatpush1.xpose.msra.mxu0 0.0
      %974 = vmatprep.subr.mxu0 0.0
      %975 = vmatpush1.xpose.msra.mxu0 0.0
      %976 = vmatprep.subr.mxu0 0.0
      %977 = vmatpush1.xpose.msra.mxu0 0.0
      %978 = vmatprep.subr.mxu0 0.0
      %979 = vmatpush1.xpose.msra.mxu0 0.0
      %980 = vmatprep.subr.mxu0 0.0
      %981 = vmatpush1.xpose.msra.mxu0 0.0
      %982 = vmatprep.subr.mxu0 0.0
      %983 = vmatpush1.xpose.msra.mxu0 0.0
      %984 = vmatprep.subr.mxu0 0.0
      %985 = vmatpush1.xpose.msra.mxu0 0.0
      %986 = vmatprep.subr.mxu0 0.0
      %987 = vmatpush1.xpose.msra.mxu0 0.0
      %988 = vmatprep.subr.mxu0 0.0
      %989 = vmatpush1.xpose.msra.mxu0 0.0
      %990 = vmatprep.subr.mxu0 0.0
      %991 = vmatpush1.xpose.msra.mxu0 0.0
      %992 = vmatprep.subr.mxu0 0.0
      %993 = vmatpush1.xpose.msra.mxu0 0.0
      %994 = vmatprep.subr.mxu0 0.0
      %995 = vmatpush1.xpose.msra.mxu0 0.0
      %996 = vmatprep.mubr.f32.mxu0 0.0
      %997 = vmatmul.mubr.f32.gmra.mrb[0].mxu0 %v928
      %v998 = vpop.f32.mrb[0].mxu0
      %v999 = vadd.f32 %v344, %v998
      %v1000 = vpop.f32.mrb[0].mxu0
      %1001 = vdwg.mxu0
      %s1002 = scalar_lea.vmem [#allocation2], 24
      %v1003 = vld [vmem:[%s1002] sm:$0xff]
      %v1004 = vsel %vm426, %v999, -inf
      %1005 = vmax.xlane.f32.xlu0 %v1004
      %v1006 = vpop.xlane.xlu0 %1005
      %v1007 = vmax.f32 %v1003, %v1006
      %v1008 = vsub.f32 %v1003, %v1007
      %v1009 = vmul.f32 %v1008, 1.442695
      %v1010 = vpow.pop %v1009
      %1012 = vset.pattern.permute.xlu0 0
      %1013 = vperm.xlu0 %1012, %v1007
      %v1014 = vpop.permute.xlu0 %1013
      %v1016 = vsub.f32 %v999, %v1014
      %v1017 = vmul.f32 %v1016, 1.442695
      %v1018 = vpow.pop %v1017
      %s1019 = scalar_lea.vmem [#allocation3], 24
      %v1020 = vld [vmem:[%s1019] sm:$0xff]
      %v1021 = vmul.f32 %v1010, %v1020
      %v1022 = vsel %vm426, %v1018, 0.0
      %1023 = vadd.xlane.f32.xlu0 %v1022
      %v1024 = vpop.xlane.xlu0 %1023
      %v1025 = vadd.f32 %v1021, %v1024
      %1026 = vst.msk [vmem:[%s1019] sm:$0xff] %vm448, %v1025
      %s1027 = scalar_lea.vmem [#allocation4], 24
      %v1028 = vld [vmem:[%s1027] sm:$0xff]
      %1030 = vset.pattern.permute.xlu0 0
      %1031 = vperm.xlu0 %1030, %v1010
      %v1032 = vpop.permute.xlu0 %1031
      %v1034 = vmul.f32 %v1032, %v1028
      %1036 = vrot.lane.b32.xlu0 %v921, 112
      %v1037 = vpop.permute.xlu0 %1036
      %v1040 = vsel %vm426, %v1018, 0
      %1042 = vmatprep.subr.mxu0 0.0
      %1043 = vmatpush1.msra.mxu0 %v1037
      %1044 = vmatprep.subr.mxu0 0.0
      %1045 = vmatpush1.msra.mxu0 0.0
      %1046 = vmatprep.subr.mxu0 0.0
      %1047 = vmatpush1.msra.mxu0 0.0
      %1048 = vmatprep.subr.mxu0 0.0
      %1049 = vmatpush1.msra.mxu0 0.0
      %1050 = vmatprep.subr.mxu0 0.0
      %1051 = vmatpush1.msra.mxu0 0.0
      %1052 = vmatprep.subr.mxu0 0.0
      %1053 = vmatpush1.msra.mxu0 0.0
      %1054 = vmatprep.subr.mxu0 0.0
      %1055 = vmatpush1.msra.mxu0 0.0
      %1056 = vmatprep.subr.mxu0 0.0
      %1057 = vmatpush1.msra.mxu0 0.0
      %1058 = vmatprep.subr.mxu0 0.0
      %1059 = vmatpush1.msra.mxu0 0.0
      %1060 = vmatprep.subr.mxu0 0.0
      %1061 = vmatpush1.msra.mxu0 0.0
      %1062 = vmatprep.subr.mxu0 0.0
      %1063 = vmatpush1.msra.mxu0 0.0
      %1064 = vmatprep.subr.mxu0 0.0
      %1065 = vmatpush1.msra.mxu0 0.0
      %1066 = vmatprep.subr.mxu0 0.0
      %1067 = vmatpush1.msra.mxu0 0.0
      %1068 = vmatprep.subr.mxu0 0.0
      %1069 = vmatpush1.msra.mxu0 0.0
      %1070 = vmatprep.subr.mxu0 0.0
      %1071 = vmatpush1.msra.mxu0 0.0
      %1072 = vmatprep.subr.mxu0 0.0
      %1073 = vmatpush1.msra.mxu0 0.0
      %1074 = vmatprep.subr.mxu0 0.0
      %1075 = vmatpush1.msra.mxu0 0.0
      %1076 = vmatprep.subr.mxu0 0.0
      %1077 = vmatpush1.msra.mxu0 0.0
      %1078 = vmatprep.subr.mxu0 0.0
      %1079 = vmatpush1.msra.mxu0 0.0
      %1080 = vmatprep.subr.mxu0 0.0
      %1081 = vmatpush1.msra.mxu0 0.0
      %1082 = vmatprep.subr.mxu0 0.0
      %1083 = vmatpush1.msra.mxu0 0.0
      %1084 = vmatprep.subr.mxu0 0.0
      %1085 = vmatpush1.msra.mxu0 0.0
      %1086 = vmatprep.subr.mxu0 0.0
      %1087 = vmatpush1.msra.mxu0 0.0
      %1088 = vmatprep.subr.mxu0 0.0
      %1089 = vmatpush1.msra.mxu0 0.0
      %1090 = vmatprep.subr.mxu0 0.0
      %1091 = vmatpush1.msra.mxu0 0.0
      %1092 = vmatprep.subr.mxu0 0.0
      %1093 = vmatpush1.msra.mxu0 0.0
      %1094 = vmatprep.subr.mxu0 0.0
      %1095 = vmatpush1.msra.mxu0 0.0
      %1096 = vmatprep.subr.mxu0 0.0
      %1097 = vmatpush1.msra.mxu0 0.0
      %1098 = vmatprep.subr.mxu0 0.0
      %1099 = vmatpush1.msra.mxu0 0.0
      %1100 = vmatprep.subr.mxu0 0.0
      %1101 = vmatpush1.msra.mxu0 0.0
      %1102 = vmatprep.subr.mxu0 0.0
      %1103 = vmatpush1.msra.mxu0 0.0
      %1104 = vmatprep.subr.mxu0 0.0
      %1105 = vmatpush1.msra.mxu0 0.0
      %1106 = vmatprep.mubr.f32.mxu0 0.0
      %1107 = vmatmul.mubr.f32.gmra.mrb[0].mxu0 %v1040
      %v1108 = vpop.f32.mrb[0].mxu0
      %v1109 = vadd.f32 0.0, %v1108
      %v1110 = vpop.f32.mrb[0].mxu0
      %1111 = vdwg.mxu0
      %v1112 = vadd.f32 %v1034, %v1109
      %1113 = vst.msk [vmem:[%s1027] sm:$0xff] %vm348, %v1112
      %1114 = vst.msk [vmem:[%s1002] sm:$0xff] %vm448, %v1007
      // Predicated region
      $region41: #{gemma_forward.10} parent=35 // pred_check
        %p1115 = pneg %p326
      $region42: #{gemma_forward.10} parent=35 // pred_check_branch
        %1117 = sbr.rel (%p1115) target = $region44
      $region43: #{gemma_forward.10} parent=35 // pred_region
        %v1118 = vld [vmem:[#allocation3] sm:$0xff]
        %v1119 = vrcp.pop %v1118
        %v1120 = vld [vmem:[#allocation4] sm:$0xff]
        %1122 = vset.pattern.permute.xlu0 0
        %1123 = vperm.xlu0 %1122, %v1119
        %v1124 = vpop.permute.xlu0 %1123
        %v1126 = vmul.f32 %v1120, %v1124
        %v1127 = vld [vmem:[%s631] sm:$0xff]
        %v1128 = vrcp.pop %v1127
        %v1129 = vld [vmem:[%s639] sm:$0xff]
        %1131 = vset.pattern.permute.xlu0 0
        %1132 = vperm.xlu0 %1131, %v1128
        %v1133 = vpop.permute.xlu0 %1132
        %v1135 = vmul.f32 %v1129, %v1133
        %v1136 = vld [vmem:[%s823] sm:$0xff]
        %v1137 = vrcp.pop %v1136
        %v1138 = vld [vmem:[%s831] sm:$0xff]
        %1140 = vset.pattern.permute.xlu0 0
        %1141 = vperm.xlu0 %1140, %v1137
        %v1142 = vpop.permute.xlu0 %1141
        %v1144 = vmul.f32 %v1138, %v1142
        %v1145 = vld [vmem:[%s1019] sm:$0xff]
        %v1146 = vrcp.pop %v1145
        %v1147 = vld [vmem:[%s1027] sm:$0xff]
        %1149 = vset.pattern.permute.xlu0 0
        %1150 = vperm.xlu0 %1149, %v1146
        %v1151 = vpop.permute.xlu0 %1150
        %v1153 = vmul.f32 %v1147, %v1151
        %1155 = vrot.lane.b32.xlu0 %v1135, 16
        %v1156 = vpop.permute.xlu0 %1155
        %1159 = vrot.lane.b32.xlu0 %v1144, 32
        %v1160 = vpop.permute.xlu0 %1159
        %1163 = vrot.lane.b32.xlu0 %v1153, 48
        %v1164 = vpop.permute.xlu0 %1163
        %v1166 = vsel %vm348, %v1126, %v1156
        %vm1167 = vcmask 261120
        %v1168 = vsel %vm1167, %v1166, %v1160
        %vm1169 = vcmask 392192
        %v1170 = vsel %vm1169, %v1168, %v1164
        %vm1171 = vcmask 523264
        %1172 = vst.msk [vmem:[%s325] sm:$0xff] %vm1171, %v1170
      $region44: #{gemma_forward.10} parent=35 // pred_fallthru
        _
      %p1173 = scmp.lt.s32.totalorder %s20, 1
      %s1174 = scalar_select %p1173, %s20, 1
      %p1175 = scmp.lt.s32.totalorder %s21, 0
      %s1176 = scalar_select %p1175, %s21, 0
      %s1177 = sadd.s32 %s1176, %s1174
      %s1178 = smul.addr %s1177, 8
      %s1179 = scalar_lea.vmem %s4, %s1178
      // Predicated region
      $region45: #{gemma_forward.10} parent=35 // pred_check
        %p1180 = pneg %p168
      $region46: #{gemma_forward.10} parent=35 // pred_check_branch
        %1182 = sbr.rel (%p1180) target = $region48
      $region47: #{gemma_forward.10} parent=35 // pred_region
        _
      $region48: #{gemma_forward.10} parent=35 // pred_fallthru
        _
    $region36: #{gemma_forward.10} parent=5 // pred_fallthru
      _
    %p1183 = scmp.le.s32.totalorder 2, %s10
    // Predicated region
    $region49: #{gemma_forward.10} parent=5 // pred_check
      %p1184 = pneg %p1183
    $region50: #{gemma_forward.10} parent=5 // pred_check_branch
      %1186 = sbr.rel (%p1184) target = $region52
    $region51: #{gemma_forward.10} parent=5 // pred_region
      %s1187 = ssub.s32 %s10, 2
      // Predicated region
      $region53: #{gemma_forward.10} parent=51 // pred_check
        %p1188 = pneg %p174
      $region54: #{gemma_forward.10} parent=51 // pred_check_branch
        %1190 = sbr.rel (%p1188) target = $region56
      $region55: #{gemma_forward.10} parent=51 // pred_region
        %p1191 = scmp.lt.s32.totalorder %s23, 1
        %s1192 = scalar_select %p1191, %s23, 1
        %p1193 = scmp.lt.s32.totalorder %s24, 0
        %s1194 = scalar_select %p1193, %s24, 0
        %s1195 = sadd.s32 %s1194, %s1192
        %s1196 = smul.addr %s1195, 8
        %s1197 = scalar_lea.vmem %s4, %s1196
      $region56: #{gemma_forward.10} parent=51 // pred_fallthru
        _
    $region52: #{gemma_forward.10} parent=5 // pred_fallthru
      _
  $region6: #{gemma_forward.10} parent=0 // loop_footer
    %s14 = sadd.s32 1, %s10
  $region7: #{gemma_forward.10} parent=0 // loop_footer_branch
    %9 = sbr.rel target = $region3
  $region8: #{gemma_forward.10} parent=0 // loop_exit
    _

// kernel: gemma_forward.17
$region0: #{gemma_forward.17}
  #allocation0 [shape = 'u32[]', space=smem, size = 0x4, offset = 0x4, fixed_abs, tag = 'smem constant byte address 0x4 - core index']
  #allocation1 [shape = 'u32[144,128]{1,0:T(1,128)}', space=vmem, size = 0x12000, scoped, tag = 'internal scratch']
  %s0 = inlined_call_operand.vmem [shape: f32[16,32], index: 0, kind: input, shape index: {}]
  %s1 = inlined_call_operand.vmem [shape: f32[1,32], index: 1, kind: input, shape index: {}]
  %s2 = inlined_call_operand.hbm [shape: f32[16,32], index: 2, kind: output, shape index: {}]
  %s3 = sld [smem:[#allocation0]]
  $region18: #{gemma_forward.17} parent=0
    _
  %s5 = ssub.s32 1, %s3
  %s6 = scalar_select 0, %s5, %s3
  $region1: #{gemma_forward.17} parent=0
    #allocation2 [shape = 'u8[8192]{0}', space=vmem, size = 0x2000, scoped, tag = 'output window, operand 0, single buffered']
    #allocation3 [shape = 's32[1]{0}', space=sflag, size = 0x4, scoped, tag = 'scoped memory for gemma_forward.17']
    %7 = vsyncpa [#allocation3], 0
    // Predicated region
    $region2: #{gemma_forward.17} parent=1 // pred_check
      _
    $region3: #{gemma_forward.17} parent=1 // pred_check_branch
      %9 = sbr.rel (0) target = $region5
    $region4: #{gemma_forward.17} parent=1 // pred_region
      _
    $region5: #{gemma_forward.17} parent=1 // pred_fallthru
      _
    // Predicated region
    $region6: #{gemma_forward.17} parent=1 // pred_check
      _
    $region7: #{gemma_forward.17} parent=1 // pred_check_branch
      %11 = sbr.rel (0) target = $region9
    $region8: #{gemma_forward.17} parent=1 // pred_region
      _
    $region9: #{gemma_forward.17} parent=1 // pred_fallthru
      _
    %v12 = vld [vmem:[%s0] sm:$0xff]
    %v13 = vld [vmem:[%s0 + $0x8] sm:$0xff]
    %v14 = vmul.f32 %v12, %v12
    %v15 = vmul.f32 %v13, %v13
    %vm16 = vcmask 261120
    %v17 = vsel %vm16, %v14, 0.0
    %18 = vadd.xlane.f32.xlu0 %v17
    %v19 = vpop.xlane.xlu0 %18
    %v20 = vsel %vm16, %v15, 0.0
    %21 = vadd.xlane.f32.xlu0 %v20
    %v22 = vpop.xlane.xlu0 %21
    %v23 = vrcp.pop 32.0
    %v24 = vmul.f32 %v19, %v23
    %v25 = vmul.f32 %v22, %v23
    %v26 = vadd.f32 %v24, 1e-06
    %v27 = vadd.f32 %v25, 1e-06
    %v28 = vrsqrt.pop %v26
    %v29 = vrsqrt.pop %v27
    %v30 = vmul.f32 %v12, %v28
    %v31 = vmul.f32 %v13, %v29
    %v32 = vld [vmem:[%s1] sm:$0x1]
    %v33 = vadd.f32 %v32, 1.0
    %v35 = vlaneseq
    %v36 = vshrl.u32 %v35, 7
    %v37 = vsub.s32 0, %v36
    %v38 = vrot.slane %v33, %v37
    %v40 = vmul.f32 %v30, %v38
    %v41 = vmul.f32 %v31, %v38
    %42 = vst.msk [vmem:[#allocation2] sm:$0xff] %vm16, %v40
    %43 = vst.msk [vmem:[#allocation2 + $0x8] sm:$0xff] %vm16, %v41
    // Predicated region
    $region10: #{gemma_forward.17} parent=1 // pred_check
      _
    $region11: #{gemma_forward.17} parent=1 // pred_check_branch
      %45 = sbr.rel (0) target = $region13
    $region12: #{gemma_forward.17} parent=1 // pred_region
      %s47 = ssub.s32 256, 256
      %48 = vsyncadd [#allocation3], %s47
      %s49 = sshll.u32 [#allocation2], 4
      %s50 = int_to_ptr.vmem [resolvable:$true] %s49
      %55 = dma.vmem_to_hbm [thread:$0]  %s50, 256, %s2, [#allocation3], 128, 128, 8
    $region13: #{gemma_forward.17} parent=1 // pred_fallthru
      _
    // Predicated region
    $region14: #{gemma_forward.17} parent=1 // pred_check
      _
    $region15: #{gemma_forward.17} parent=1 // pred_check_branch
      %57 = sbr.rel (0) target = $region17
    $region16: #{gemma_forward.17} parent=1 // pred_region
      %58 = dma.done [#allocation3], 256
    $region17: #{gemma_forward.17} parent=1 // pred_fallthru
      _
    %59 = vsyncpa [#allocation3], 1

</llo_original>
